<compile_context>
chip_gen: v6e
topology: v6e:2x2x1
jax: 0.10.0
libtpu: 0.0.40
codegen_flags: <defaults>
</compile_context>

<pallas_src>
import functools

import jax
import jax.numpy as jnp
from jax import lax
from jax.experimental import pallas as pl
from jax.experimental.pallas import tpu as pltpu


_CHUNK = 256  # output-row chunk (multiple of 8) for register-resident accumulation


def _relu_store_chunks(dst_ref, rows, bias, fn, H_unused=None):
    """dst_ref[r, :] = relu(fn(chunk) + bias) for r in [0, rows), in _CHUNK-row chunks."""
    for cs in range(0, rows, _CHUNK):
        ch = min(_CHUNK, rows - cs)
        acc = fn(cs, ch)                                           # (ch, Cp) float32
        dst_ref[pl.ds(cs, ch), :] = jnp.maximum(acc + bias, 0.0).astype(dst_ref.dtype)


def _encoder_kernel(p_ref, w1_ref, b1_ref, w2_ref, b2_ref, w3_ref, b3_ref,
                    w4_ref, b4_ref, o_ref, buf_a, buf_b, *, H1, Wp):
    H2, H3, H4 = H1 - 2, H1 - 4, H1 - 6
    S1 = H1 * Wp

    # ---- layer 1: u8 -> bf16 cast -> matmul (norm folded into weights) -> +bias -> ReLU ----
    def l1_chunk(cs, ch):
        x = p_ref[pl.ds(cs, ch), :].astype(jnp.bfloat16)           # (ch, P*K1)
        return jnp.dot(x, w1_ref[...], preferred_element_type=jnp.float32)

    _relu_store_chunks(buf_a, S1, b1_ref[...], l1_chunk)

    # ---- layers 2-4: 3x3 stride-1 conv as 9 shifted matmuls on the pitch-Wp row grid ----
    # Output row r = h*Wp + w reads input rows r + kh*Wp + kw (contiguous VMEM slices).
    # Rows/columns outside a layer's true extent are "don't care" and never feed a valid
    # output, so no scratch zeroing is required.
    def conv3x3_chunk(src_ref, w_ref):
        def fn(cs, ch):
            acc = None
            for t in range(9):
                kh, kw = divmod(t, 3)
                lhs = src_ref[pl.ds(cs + kh * Wp + kw, ch), :].astype(jnp.bfloat16)
                d = jnp.dot(lhs, w_ref[t], preferred_element_type=jnp.float32)
                acc = d if acc is None else acc + d
            return acc
        return fn

    _relu_store_chunks(buf_b, H2 * Wp, b2_ref[...], conv3x3_chunk(buf_a, w2_ref))
    _relu_store_chunks(buf_a, H3 * Wp, b3_ref[...], conv3x3_chunk(buf_b, w3_ref))
    # Layer 4 streams one lane-dense (H4*Wp, P*C) slab straight into the output block.
    _relu_store_chunks(o_ref, H4 * Wp, b4_ref[...], conv3x3_chunk(buf_a, w4_ref))


# ----------------------------------------------------------------------------
# Host-side glue
# ----------------------------------------------------------------------------
def _im2col_stride2(x_nhwc, ksize=3, stride=2):
    """Layer-1 im2col on the raw observation (dtype-preserving, done once)."""
    N, H, W, _ = x_nhwc.shape
    Ho = (H - ksize) // stride + 1
    Wo = (W - ksize) // stride + 1
    cols = []
    for kh in range(ksize):
        for kw in range(ksize):
            cols.append(x_nhwc[:, kh:kh + Ho * stride:stride,
                               kw:kw + Wo * stride:stride, :])
    patches = jnp.stack(cols, axis=-2)                             # (N, Ho, Wo, 9, Cin)
    return patches.reshape(N, Ho * Wo, ksize * ksize * x_nhwc.shape[-1]), Ho, Wo


def encoder_forward(obs_nchw, params):
    (w1, b1), (w2, b2), (w3, b3), (w4, b4) = params
    N = obs_nchw.shape[0]
    C = int(w1.shape[0])
    P = max(1, 128 // C)                  # images packed along the lane axis per grid step
    Cp = P * C

    # NCHW -> NHWC (uint8 stays uint8) + layer-1 patch extraction (tiny relayout).
    x = jnp.transpose(obs_nchw, (0, 2, 3, 1))
    patches, H1, W1 = _im2col_stride2(x)
    Wp = W1                                                       # constant row pitch
    H4, W4 = H1 - 6, W1 - 6
    S1 = H1 * Wp
    K1 = patches.shape[-1]

    # Pack P images along the last (lane) axis: (Np, S1, P*K1).
    Np = -(-N // P)
    if Np * P != N:
        patches = jnp.pad(patches, ((0, Np * P - N), (0, 0), (0, 0)))
    packed = patches.reshape(Np, P, S1, K1).transpose(0, 2, 1, 3).reshape(Np, S1, P * K1)

    # Weight prep: OIHW -> matmul layout, /255 - 0.5 folded into layer 1, block-diagonal
    # replication across the P packed images, bf16 operands for the MXU.
    eye = jnp.eye(P, dtype=jnp.float32)

    w1m = jnp.transpose(w1, (2, 3, 1, 0)).reshape(K1, C)          # (9*Cin, C)
    b1f = b1 - 0.5 * jnp.sum(w1m, axis=0)                         # fold the -0.5 shift
    w1f = w1m * (1.0 / 255.0)                                     # fold the /255 scale
    w1bd = jnp.einsum('pq,ij->piqj', eye, w1f).reshape(P * K1, Cp).astype(jnp.bfloat16)

    def taps_bd(w):                                               # OIHW -> (9, P*Cin, P*Cout)
        t = jnp.transpose(w, (2, 3, 1, 0)).reshape(9, w.shape[1], w.shape[0])
        return jnp.einsum('pq,tij->tpiqj', eye, t).reshape(
            9, P * w.shape[1], P * w.shape[0]).astype(jnp.bfloat16)

    w2bd, w3bd, w4bd = taps_bd(w2), taps_bd(w3), taps_bd(w4)
    b1p, b2p, b3p, b4p = (jnp.tile(b, P).reshape(1, Cp).astype(jnp.float32)
                          for b in (b1f, b2, b3, b4))

    kernel = functools.partial(_encoder_kernel, H1=H1, Wp=Wp)
    rows_out = H4 * Wp
    const2 = lambda n: (0, 0)
    const3 = lambda n: (0, 0, 0)

    feats = pl.pallas_call(
        kernel,
        out_shape=jax.ShapeDtypeStruct((Np, rows_out, Cp), jnp.float32),
        grid_spec=pltpu.PrefetchScalarGridSpec(
            num_scalar_prefetch=0,
            grid=(Np,),
            in_specs=[
                pl.BlockSpec((None, S1, P * K1), lambda n: (n, 0, 0)),
                pl.BlockSpec((P * K1, Cp), const2), pl.BlockSpec((1, Cp), const2),
                pl.BlockSpec((9, Cp, Cp), const3), pl.BlockSpec((1, Cp), const2),
                pl.BlockSpec((9, Cp, Cp), const3), pl.BlockSpec((1, Cp), const2),
                pl.BlockSpec((9, Cp, Cp), const3), pl.BlockSpec((1, Cp), const2),
            ],
            out_specs=pl.BlockSpec((None, rows_out, Cp), lambda n: (n, 0, 0)),
            scratch_shapes=[pltpu.VMEM((S1 + 2, Cp), jnp.float32),
                            pltpu.VMEM((S1 + 2, Cp), jnp.float32)],
        ),
        compiler_params=pltpu.CompilerParams(
            dimension_semantics=("parallel",)),
    )(packed, w1bd, b1p, w2bd, b2p, w3bd, b3p, w4bd, b4p)

    # Strip the pitch columns, unpack the P images, and flatten channel-major
    # (== PyTorch h.view(N, -1) on NCHW) in one tiny epilogue reshape/transpose.
    f = feats.reshape(Np, H4, Wp, P, C)[:, :, :W4]                 # (Np, H4, W4, P, C)
    f = jnp.transpose(f, (0, 3, 4, 1, 2))                          # (Np, P, C, H4, W4)
    return f.reshape(Np * P, C * H4 * W4)[:N]


# ----------------------------------------------------------------------------
# Pure-JAX reference (for correctness check)
# ----------------------------------------------------------------------------
def encoder_reference(obs_nchw, params):
    x = obs_nchw.astype(jnp.float32) / 255.0 - 0.5
    strides = (2, 1, 1, 1)
    for (w, b), s in zip(params, strides):
        x = lax.conv_general_dilated(
            x, w, window_strides=(s, s), padding="VALID",
            dimension_numbers=("NCHW", "OIHW", "NCHW"))
        x = jax.nn.relu(x + b.reshape(1, -1, 1, 1))
    return x.reshape(x.shape[0], -1)


def init_params(key, in_ch, hidden_dim):
    # TODO(synk): orthogonal weight_init (utils.weight_init) not reproduced; scaled normal init.
    chans = [in_ch, hidden_dim, hidden_dim, hidden_dim, hidden_dim]
    params = []
    for i in range(4):
        key, kw, kb = jax.random.split(key, 3)
        w = jax.random.normal(kw, (chans[i + 1], chans[i], 3, 3), jnp.float32) * 0.1
        b = jax.random.normal(kb, (chans[i + 1],), jnp.float32) * 0.01
        params.append((w, b))
    return params


if __name__ == "__main__":
    key = jax.random.PRNGKey(0)
    k_obs, k_par = jax.random.split(key)

    # Small shapes: batch=8 (two packed grid steps of 4 lane-packed images), 4 input
    # channels, 21x21 spatial -> conv stack gives (8, 32, 4, 4) -> 512-dim features.
    batch, in_ch, spatial, hidden_dim = 8, 4, 21, 32
    obs = jax.random.randint(k_obs, (batch, in_ch, spatial, spatial), 0, 256,
                             dtype=jnp.int32).astype(jnp.uint8)
    params = init_params(k_par, in_ch, hidden_dim)

    out = jax.jit(encoder_forward)(obs, params)
    out = jax.block_until_ready(out)

    ref = encoder_reference(obs, params)
    assert out.shape == (batch, hidden_dim * 4 * 4), out.shape
    # bf16 MXU operands -> slightly looser tolerance than a pure-f32 path.
    assert jnp.allclose(out, ref, rtol=2e-2, atol=2e-2), (
        "mismatch vs reference, max abs err = "
        + str(float(jnp.max(jnp.abs(out - ref)))))

    print("KERNEL_OK")
</pallas_src>

<mosaic_0001>
module attributes {stable_mosaic.version = 11 : i64} {
  func.func @_encoder_kernel(%arg0: i32, %arg1: memref<1x100x144xi8, #tpu.memory_space<vmem>>, %arg2: memref<144x128xbf16, #tpu.memory_space<vmem>>, %arg3: memref<1x128xf32, #tpu.memory_space<vmem>>, %arg4: memref<9x128x128xbf16, #tpu.memory_space<vmem>>, %arg5: memref<1x128xf32, #tpu.memory_space<vmem>>, %arg6: memref<9x128x128xbf16, #tpu.memory_space<vmem>>, %arg7: memref<1x128xf32, #tpu.memory_space<vmem>>, %arg8: memref<9x128x128xbf16, #tpu.memory_space<vmem>>, %arg9: memref<1x128xf32, #tpu.memory_space<vmem>>, %arg10: memref<1x40x128xf32, #tpu.memory_space<vmem>>, %arg11: memref<102x128xf32, #tpu.memory_space<vmem>>, %arg12: memref<102x128xf32, #tpu.memory_space<vmem>>) attributes {dimension_semantics = [#tpu.dimension_semantics<parallel>], iteration_bounds = array<i64: 2>, scalar_prefetch = 0 : i64, scratch_operands = 2 : i64, tpu.core_type = #tpu.core_type<tc>, window_params = [{transform_indices = @transform_0, window_bounds = array<i64: 1, 100, 144>}, {pipeline_mode = #tpu.pipeline_mode<synchronous>, transform_indices = @transform_1, window_bounds = array<i64: 144, 128>}, {pipeline_mode = #tpu.pipeline_mode<synchronous>, transform_indices = @transform_2, window_bounds = array<i64: 1, 128>}, {pipeline_mode = #tpu.pipeline_mode<synchronous>, transform_indices = @transform_3, window_bounds = array<i64: 9, 128, 128>}, {pipeline_mode = #tpu.pipeline_mode<synchronous>, transform_indices = @transform_4, window_bounds = array<i64: 1, 128>}, {pipeline_mode = #tpu.pipeline_mode<synchronous>, transform_indices = @transform_5, window_bounds = array<i64: 9, 128, 128>}, {pipeline_mode = #tpu.pipeline_mode<synchronous>, transform_indices = @transform_6, window_bounds = array<i64: 1, 128>}, {pipeline_mode = #tpu.pipeline_mode<synchronous>, transform_indices = @transform_7, window_bounds = array<i64: 9, 128, 128>}, {pipeline_mode = #tpu.pipeline_mode<synchronous>, transform_indices = @transform_8, window_bounds = array<i64: 1, 128>}, {transform_indices = @transform_9, window_bounds = array<i64: 1, 40, 128>}]} {
    %c0 = arith.constant 0 : index
    %c0_0 = arith.constant 0 : index
    %0 = vector.load %arg3[%c0, %c0_0] : memref<1x128xf32, #tpu.memory_space<vmem>>, vector<1x128xf32>
    %c0_1 = arith.constant 0 : index
    %c0_2 = arith.constant 0 : index
    %c0_3 = arith.constant 0 : index
    %1 = vector.load %arg1[%c0_1, %c0_2, %c0_3] : memref<1x100x144xi8, #tpu.memory_space<vmem>>, vector<1x100x144xi8>
    %2 = vector.shape_cast %1 : vector<1x100x144xi8> to vector<100x144xi8>
    %3 = arith.uitofp %2 : vector<100x144xi8> to vector<100x144xbf16>
    %c0_4 = arith.constant 0 : index
    %c0_5 = arith.constant 0 : index
    %4 = vector.load %arg2[%c0_4, %c0_5] : memref<144x128xbf16, #tpu.memory_space<vmem>>, vector<144x128xbf16>
    %cst = arith.constant dense<0.000000e+00> : vector<100x128xf32>
    %5 = tpu.matmul %3, %4, %cst {dimension_numbers = #tpu.dot_dimension_numbers<[1], [0], [0], [1], [0, 0, 1, 1], [], []>} : vector<100x144xbf16>, vector<144x128xbf16>, vector<100x128xf32> -> vector<100x128xf32>
    %6 = vector.broadcast %0 : vector<1x128xf32> to vector<100x128xf32>
    %7 = arith.addf %5, %6 : vector<100x128xf32>
    %cst_6 = arith.constant 0.000000e+00 : f32
    %8 = vector.broadcast %cst_6 : f32 to vector<100x128xf32>
    %9 = arith.maximumf %7, %8 : vector<100x128xf32>
    %c0_7 = arith.constant 0 : index
    %c0_8 = arith.constant 0 : index
    %10 = vector.load %arg11[%c0_7, %c0_8] : memref<102x128xf32, #tpu.memory_space<vmem>>, vector<100x128xf32>
    tpu.vector_store %arg11[%c0_7, %c0_8], %9 {strides = array<i32>} : memref<102x128xf32, #tpu.memory_space<vmem>>, vector<100x128xf32>,
    %c0_9 = arith.constant 0 : index
    %c0_10 = arith.constant 0 : index
    %11 = vector.load %arg5[%c0_9, %c0_10] : memref<1x128xf32, #tpu.memory_space<vmem>>, vector<1x128xf32>
    %c0_11 = arith.constant 0 : index
    %c0_12 = arith.constant 0 : index
    %12 = vector.load %arg11[%c0_11, %c0_12] : memref<102x128xf32, #tpu.memory_space<vmem>>, vector<80x128xf32>
    %13 = arith.truncf %12 : vector<80x128xf32> to vector<80x128xbf16>
    %c0_13 = arith.constant 0 : index
    %c0_14 = arith.constant 0 : index
    %c0_15 = arith.constant 0 : index
    %14 = vector.load %arg4[%c0_13, %c0_14, %c0_15] : memref<9x128x128xbf16, #tpu.memory_space<vmem>>, vector<1x128x128xbf16>
    %15 = vector.shape_cast %14 : vector<1x128x128xbf16> to vector<128x128xbf16>
    %cst_16 = arith.constant dense<0.000000e+00> : vector<80x128xf32>
    %16 = tpu.matmul %13, %15, %cst_16 {dimension_numbers = #tpu.dot_dimension_numbers<[1], [0], [0], [1], [0, 0, 1, 1], [], []>} : vector<80x128xbf16>, vector<128x128xbf16>, vector<80x128xf32> -> vector<80x128xf32>
    %c1 = arith.constant 1 : index
    %c0_17 = arith.constant 0 : index
    %17 = vector.load %arg11[%c1, %c0_17] : memref<102x128xf32, #tpu.memory_space<vmem>>, vector<80x128xf32>
    %18 = arith.truncf %17 : vector<80x128xf32> to vector<80x128xbf16>
    %c1_18 = arith.constant 1 : index
    %c0_19 = arith.constant 0 : index
    %c0_20 = arith.constant 0 : index
    %19 = vector.load %arg4[%c1_18, %c0_19, %c0_20] : memref<9x128x128xbf16, #tpu.memory_space<vmem>>, vector<1x128x128xbf16>
    %20 = vector.shape_cast %19 : vector<1x128x128xbf16> to vector<128x128xbf16>
    %cst_21 = arith.constant dense<0.000000e+00> : vector<80x128xf32>
    %21 = tpu.matmul %18, %20, %cst_21 {dimension_numbers = #tpu.dot_dimension_numbers<[1], [0], [0], [1], [0, 0, 1, 1], [], []>} : vector<80x128xbf16>, vector<128x128xbf16>, vector<80x128xf32> -> vector<80x128xf32>
    %22 = arith.addf %16, %21 : vector<80x128xf32>
    %c2 = arith.constant 2 : index
    %c0_22 = arith.constant 0 : index
    %23 = vector.load %arg11[%c2, %c0_22] : memref<102x128xf32, #tpu.memory_space<vmem>>, vector<80x128xf32>
    %24 = arith.truncf %23 : vector<80x128xf32> to vector<80x128xbf16>
    %c2_23 = arith.constant 2 : index
    %c0_24 = arith.constant 0 : index
    %c0_25 = arith.constant 0 : index
    %25 = vector.load %arg4[%c2_23, %c0_24, %c0_25] : memref<9x128x128xbf16, #tpu.memory_space<vmem>>, vector<1x128x128xbf16>
    %26 = vector.shape_cast %25 : vector<1x128x128xbf16> to vector<128x128xbf16>
    %cst_26 = arith.constant dense<0.000000e+00> : vector<80x128xf32>
    %27 = tpu.matmul %24, %26, %cst_26 {dimension_numbers = #tpu.dot_dimension_numbers<[1], [0], [0], [1], [0, 0, 1, 1], [], []>} : vector<80x128xbf16>, vector<128x128xbf16>, vector<80x128xf32> -> vector<80x128xf32>
    %28 = arith.addf %22, %27 : vector<80x128xf32>
    %c10 = arith.constant 10 : index
    %c0_27 = arith.constant 0 : index
    %29 = vector.load %arg11[%c10, %c0_27] : memref<102x128xf32, #tpu.memory_space<vmem>>, vector<80x128xf32>
    %30 = arith.truncf %29 : vector<80x128xf32> to vector<80x128xbf16>
    %c3 = arith.constant 3 : index
    %c0_28 = arith.constant 0 : index
    %c0_29 = arith.constant 0 : index
    %31 = vector.load %arg4[%c3, %c0_28, %c0_29] : memref<9x128x128xbf16, #tpu.memory_space<vmem>>, vector<1x128x128xbf16>
    %32 = vector.shape_cast %31 : vector<1x128x128xbf16> to vector<128x128xbf16>
    %cst_30 = arith.constant dense<0.000000e+00> : vector<80x128xf32>
    %33 = tpu.matmul %30, %32, %cst_30 {dimension_numbers = #tpu.dot_dimension_numbers<[1], [0], [0], [1], [0, 0, 1, 1], [], []>} : vector<80x128xbf16>, vector<128x128xbf16>, vector<80x128xf32> -> vector<80x128xf32>
    %34 = arith.addf %28, %33 : vector<80x128xf32>
    %c11 = arith.constant 11 : index
    %c0_31 = arith.constant 0 : index
    %35 = vector.load %arg11[%c11, %c0_31] : memref<102x128xf32, #tpu.memory_space<vmem>>, vector<80x128xf32>
    %36 = arith.truncf %35 : vector<80x128xf32> to vector<80x128xbf16>
    %c4 = arith.constant 4 : index
    %c0_32 = arith.constant 0 : index
    %c0_33 = arith.constant 0 : index
    %37 = vector.load %arg4[%c4, %c0_32, %c0_33] : memref<9x128x128xbf16, #tpu.memory_space<vmem>>, vector<1x128x128xbf16>
    %38 = vector.shape_cast %37 : vector<1x128x128xbf16> to vector<128x128xbf16>
    %cst_34 = arith.constant dense<0.000000e+00> : vector<80x128xf32>
    %39 = tpu.matmul %36, %38, %cst_34 {dimension_numbers = #tpu.dot_dimension_numbers<[1], [0], [0], [1], [0, 0, 1, 1], [], []>} : vector<80x128xbf16>, vector<128x128xbf16>, vector<80x128xf32> -> vector<80x128xf32>
    %40 = arith.addf %34, %39 : vector<80x128xf32>
    %c12 = arith.constant 12 : index
    %c0_35 = arith.constant 0 : index
    %41 = vector.load %arg11[%c12, %c0_35] : memref<102x128xf32, #tpu.memory_space<vmem>>, vector<80x128xf32>
    %42 = arith.truncf %41 : vector<80x128xf32> to vector<80x128xbf16>
    %c5 = arith.constant 5 : index
    %c0_36 = arith.constant 0 : index
    %c0_37 = arith.constant 0 : index
    %43 = vector.load %arg4[%c5, %c0_36, %c0_37] : memref<9x128x128xbf16, #tpu.memory_space<vmem>>, vector<1x128x128xbf16>
    %44 = vector.shape_cast %43 : vector<1x128x128xbf16> to vector<128x128xbf16>
    %cst_38 = arith.constant dense<0.000000e+00> : vector<80x128xf32>
    %45 = tpu.matmul %42, %44, %cst_38 {dimension_numbers = #tpu.dot_dimension_numbers<[1], [0], [0], [1], [0, 0, 1, 1], [], []>} : vector<80x128xbf16>, vector<128x128xbf16>, vector<80x128xf32> -> vector<80x128xf32>
    %46 = arith.addf %40, %45 : vector<80x128xf32>
    %c20 = arith.constant 20 : index
    %c0_39 = arith.constant 0 : index
    %47 = vector.load %arg11[%c20, %c0_39] : memref<102x128xf32, #tpu.memory_space<vmem>>, vector<80x128xf32>
    %48 = arith.truncf %47 : vector<80x128xf32> to vector<80x128xbf16>
    %c6 = arith.constant 6 : index
    %c0_40 = arith.constant 0 : index
    %c0_41 = arith.constant 0 : index
    %49 = vector.load %arg4[%c6, %c0_40, %c0_41] : memref<9x128x128xbf16, #tpu.memory_space<vmem>>, vector<1x128x128xbf16>
    %50 = vector.shape_cast %49 : vector<1x128x128xbf16> to vector<128x128xbf16>
    %cst_42 = arith.constant dense<0.000000e+00> : vector<80x128xf32>
    %51 = tpu.matmul %48, %50, %cst_42 {dimension_numbers = #tpu.dot_dimension_numbers<[1], [0], [0], [1], [0, 0, 1, 1], [], []>} : vector<80x128xbf16>, vector<128x128xbf16>, vector<80x128xf32> -> vector<80x128xf32>
    %52 = arith.addf %46, %51 : vector<80x128xf32>
    %c21 = arith.constant 21 : index
    %c0_43 = arith.constant 0 : index
    %53 = vector.load %arg11[%c21, %c0_43] : memref<102x128xf32, #tpu.memory_space<vmem>>, vector<80x128xf32>
    %54 = arith.truncf %53 : vector<80x128xf32> to vector<80x128xbf16>
    %c7 = arith.constant 7 : index
    %c0_44 = arith.constant 0 : index
    %c0_45 = arith.constant 0 : index
    %55 = vector.load %arg4[%c7, %c0_44, %c0_45] : memref<9x128x128xbf16, #tpu.memory_space<vmem>>, vector<1x128x128xbf16>
    %56 = vector.shape_cast %55 : vector<1x128x128xbf16> to vector<128x128xbf16>
    %cst_46 = arith.constant dense<0.000000e+00> : vector<80x128xf32>
    %57 = tpu.matmul %54, %56, %cst_46 {dimension_numbers = #tpu.dot_dimension_numbers<[1], [0], [0], [1], [0, 0, 1, 1], [], []>} : vector<80x128xbf16>, vector<128x128xbf16>, vector<80x128xf32> -> vector<80x128xf32>
    %58 = arith.addf %52, %57 : vector<80x128xf32>
    %c22 = arith.constant 22 : index
    %c0_47 = arith.constant 0 : index
    %59 = vector.load %arg11[%c22, %c0_47] : memref<102x128xf32, #tpu.memory_space<vmem>>, vector<80x128xf32>
    %60 = arith.truncf %59 : vector<80x128xf32> to vector<80x128xbf16>
    %c8 = arith.constant 8 : index
    %c0_48 = arith.constant 0 : index
    %c0_49 = arith.constant 0 : index
    %61 = vector.load %arg4[%c8, %c0_48, %c0_49] : memref<9x128x128xbf16, #tpu.memory_space<vmem>>, vector<1x128x128xbf16>
    %62 = vector.shape_cast %61 : vector<1x128x128xbf16> to vector<128x128xbf16>
    %cst_50 = arith.constant dense<0.000000e+00> : vector<80x128xf32>
    %63 = tpu.matmul %60, %62, %cst_50 {dimension_numbers = #tpu.dot_dimension_numbers<[1], [0], [0], [1], [0, 0, 1, 1], [], []>} : vector<80x128xbf16>, vector<128x128xbf16>, vector<80x128xf32> -> vector<80x128xf32>
    %64 = arith.addf %58, %63 : vector<80x128xf32>
    %65 = vector.broadcast %11 : vector<1x128xf32> to vector<80x128xf32>
    %66 = arith.addf %64, %65 : vector<80x128xf32>
    %cst_51 = arith.constant 0.000000e+00 : f32
    %67 = vector.broadcast %cst_51 : f32 to vector<80x128xf32>
    %68 = arith.maximumf %66, %67 : vector<80x128xf32>
    %c0_52 = arith.constant 0 : index
    %c0_53 = arith.constant 0 : index
    %69 = vector.load %arg12[%c0_52, %c0_53] : memref<102x128xf32, #tpu.memory_space<vmem>>, vector<80x128xf32>
    tpu.vector_store %arg12[%c0_52, %c0_53], %68 {strides = array<i32>} : memref<102x128xf32, #tpu.memory_space<vmem>>, vector<80x128xf32>,
    %c0_54 = arith.constant 0 : index
    %c0_55 = arith.constant 0 : index
    %70 = vector.load %arg7[%c0_54, %c0_55] : memref<1x128xf32, #tpu.memory_space<vmem>>, vector<1x128xf32>
    %c0_56 = arith.constant 0 : index
    %c0_57 = arith.constant 0 : index
    %71 = vector.load %arg12[%c0_56, %c0_57] : memref<102x128xf32, #tpu.memory_space<vmem>>, vector<60x128xf32>
    %72 = arith.truncf %71 : vector<60x128xf32> to vector<60x128xbf16>
    %c0_58 = arith.constant 0 : index
    %c0_59 = arith.constant 0 : index
    %c0_60 = arith.constant 0 : index
    %73 = vector.load %arg6[%c0_58, %c0_59, %c0_60] : memref<9x128x128xbf16, #tpu.memory_space<vmem>>, vector<1x128x128xbf16>
    %74 = vector.shape_cast %73 : vector<1x128x128xbf16> to vector<128x128xbf16>
    %cst_61 = arith.constant dense<0.000000e+00> : vector<60x128xf32>
    %75 = tpu.matmul %72, %74, %cst_61 {dimension_numbers = #tpu.dot_dimension_numbers<[1], [0], [0], [1], [0, 0, 1, 1], [], []>} : vector<60x128xbf16>, vector<128x128xbf16>, vector<60x128xf32> -> vector<60x128xf32>
    %c1_62 = arith.constant 1 : index
    %c0_63 = arith.constant 0 : index
    %76 = vector.load %arg12[%c1_62, %c0_63] : memref<102x128xf32, #tpu.memory_space<vmem>>, vector<60x128xf32>
    %77 = arith.truncf %76 : vector<60x128xf32> to vector<60x128xbf16>
    %c1_64 = arith.constant 1 : index
    %c0_65 = arith.constant 0 : index
    %c0_66 = arith.constant 0 : index
    %78 = vector.load %arg6[%c1_64, %c0_65, %c0_66] : memref<9x128x128xbf16, #tpu.memory_space<vmem>>, vector<1x128x128xbf16>
    %79 = vector.shape_cast %78 : vector<1x128x128xbf16> to vector<128x128xbf16>
    %cst_67 = arith.constant dense<0.000000e+00> : vector<60x128xf32>
    %80 = tpu.matmul %77, %79, %cst_67 {dimension_numbers = #tpu.dot_dimension_numbers<[1], [0], [0], [1], [0, 0, 1, 1], [], []>} : vector<60x128xbf16>, vector<128x128xbf16>, vector<60x128xf32> -> vector<60x128xf32>
    %81 = arith.addf %75, %80 : vector<60x128xf32>
    %c2_68 = arith.constant 2 : index
    %c0_69 = arith.constant 0 : index
    %82 = vector.load %arg12[%c2_68, %c0_69] : memref<102x128xf32, #tpu.memory_space<vmem>>, vector<60x128xf32>
    %83 = arith.truncf %82 : vector<60x128xf32> to vector<60x128xbf16>
    %c2_70 = arith.constant 2 : index
    %c0_71 = arith.constant 0 : index
    %c0_72 = arith.constant 0 : index
    %84 = vector.load %arg6[%c2_70, %c0_71, %c0_72] : memref<9x128x128xbf16, #tpu.memory_space<vmem>>, vector<1x128x128xbf16>
    %85 = vector.shape_cast %84 : vector<1x128x128xbf16> to vector<128x128xbf16>
    %cst_73 = arith.constant dense<0.000000e+00> : vector<60x128xf32>
    %86 = tpu.matmul %83, %85, %cst_73 {dimension_numbers = #tpu.dot_dimension_numbers<[1], [0], [0], [1], [0, 0, 1, 1], [], []>} : vector<60x128xbf16>, vector<128x128xbf16>, vector<60x128xf32> -> vector<60x128xf32>
    %87 = arith.addf %81, %86 : vector<60x128xf32>
    %c10_74 = arith.constant 10 : index
    %c0_75 = arith.constant 0 : index
    %88 = vector.load %arg12[%c10_74, %c0_75] : memref<102x128xf32, #tpu.memory_space<vmem>>, vector<60x128xf32>
    %89 = arith.truncf %88 : vector<60x128xf32> to vector<60x128xbf16>
    %c3_76 = arith.constant 3 : index
    %c0_77 = arith.constant 0 : index
    %c0_78 = arith.constant 0 : index
    %90 = vector.load %arg6[%c3_76, %c0_77, %c0_78] : memref<9x128x128xbf16, #tpu.memory_space<vmem>>, vector<1x128x128xbf16>
    %91 = vector.shape_cast %90 : vector<1x128x128xbf16> to vector<128x128xbf16>
    %cst_79 = arith.constant dense<0.000000e+00> : vector<60x128xf32>
    %92 = tpu.matmul %89, %91, %cst_79 {dimension_numbers = #tpu.dot_dimension_numbers<[1], [0], [0], [1], [0, 0, 1, 1], [], []>} : vector<60x128xbf16>, vector<128x128xbf16>, vector<60x128xf32> -> vector<60x128xf32>
    %93 = arith.addf %87, %92 : vector<60x128xf32>
    %c11_80 = arith.constant 11 : index
    %c0_81 = arith.constant 0 : index
    %94 = vector.load %arg12[%c11_80, %c0_81] : memref<102x128xf32, #tpu.memory_space<vmem>>, vector<60x128xf32>
    %95 = arith.truncf %94 : vector<60x128xf32> to vector<60x128xbf16>
    %c4_82 = arith.constant 4 : index
    %c0_83 = arith.constant 0 : index
    %c0_84 = arith.constant 0 : index
    %96 = vector.load %arg6[%c4_82, %c0_83, %c0_84] : memref<9x128x128xbf16, #tpu.memory_space<vmem>>, vector<1x128x128xbf16>
    %97 = vector.shape_cast %96 : vector<1x128x128xbf16> to vector<128x128xbf16>
    %cst_85 = arith.constant dense<0.000000e+00> : vector<60x128xf32>
    %98 = tpu.matmul %95, %97, %cst_85 {dimension_numbers = #tpu.dot_dimension_numbers<[1], [0], [0], [1], [0, 0, 1, 1], [], []>} : vector<60x128xbf16>, vector<128x128xbf16>, vector<60x128xf32> -> vector<60x128xf32>
    %99 = arith.addf %93, %98 : vector<60x128xf32>
    %c12_86 = arith.constant 12 : index
    %c0_87 = arith.constant 0 : index
    %100 = vector.load %arg12[%c12_86, %c0_87] : memref<102x128xf32, #tpu.memory_space<vmem>>, vector<60x128xf32>
    %101 = arith.truncf %100 : vector<60x128xf32> to vector<60x128xbf16>
    %c5_88 = arith.constant 5 : index
    %c0_89 = arith.constant 0 : index
    %c0_90 = arith.constant 0 : index
    %102 = vector.load %arg6[%c5_88, %c0_89, %c0_90] : memref<9x128x128xbf16, #tpu.memory_space<vmem>>, vector<1x128x128xbf16>
    %103 = vector.shape_cast %102 : vector<1x128x128xbf16> to vector<128x128xbf16>
    %cst_91 = arith.constant dense<0.000000e+00> : vector<60x128xf32>
    %104 = tpu.matmul %101, %103, %cst_91 {dimension_numbers = #tpu.dot_dimension_numbers<[1], [0], [0], [1], [0, 0, 1, 1], [], []>} : vector<60x128xbf16>, vector<128x128xbf16>, vector<60x128xf32> -> vector<60x128xf32>
    %105 = arith.addf %99, %104 : vector<60x128xf32>
    %c20_92 = arith.constant 20 : index
    %c0_93 = arith.constant 0 : index
    %106 = vector.load %arg12[%c20_92, %c0_93] : memref<102x128xf32, #tpu.memory_space<vmem>>, vector<60x128xf32>
    %107 = arith.truncf %106 : vector<60x128xf32> to vector<60x128xbf16>
    %c6_94 = arith.constant 6 : index
    %c0_95 = arith.constant 0 : index
    %c0_96 = arith.constant 0 : index
    %108 = vector.load %arg6[%c6_94, %c0_95, %c0_96] : memref<9x128x128xbf16, #tpu.memory_space<vmem>>, vector<1x128x128xbf16>
    %109 = vector.shape_cast %108 : vector<1x128x128xbf16> to vector<128x128xbf16>
    %cst_97 = arith.constant dense<0.000000e+00> : vector<60x128xf32>
    %110 = tpu.matmul %107, %109, %cst_97 {dimension_numbers = #tpu.dot_dimension_numbers<[1], [0], [0], [1], [0, 0, 1, 1], [], []>} : vector<60x128xbf16>, vector<128x128xbf16>, vector<60x128xf32> -> vector<60x128xf32>
    %111 = arith.addf %105, %110 : vector<60x128xf32>
    %c21_98 = arith.constant 21 : index
    %c0_99 = arith.constant 0 : index
    %112 = vector.load %arg12[%c21_98, %c0_99] : memref<102x128xf32, #tpu.memory_space<vmem>>, vector<60x128xf32>
    %113 = arith.truncf %112 : vector<60x128xf32> to vector<60x128xbf16>
    %c7_100 = arith.constant 7 : index
    %c0_101 = arith.constant 0 : index
    %c0_102 = arith.constant 0 : index
    %114 = vector.load %arg6[%c7_100, %c0_101, %c0_102] : memref<9x128x128xbf16, #tpu.memory_space<vmem>>, vector<1x128x128xbf16>
    %115 = vector.shape_cast %114 : vector<1x128x128xbf16> to vector<128x128xbf16>
    %cst_103 = arith.constant dense<0.000000e+00> : vector<60x128xf32>
    %116 = tpu.matmul %113, %115, %cst_103 {dimension_numbers = #tpu.dot_dimension_numbers<[1], [0], [0], [1], [0, 0, 1, 1], [], []>} : vector<60x128xbf16>, vector<128x128xbf16>, vector<60x128xf32> -> vector<60x128xf32>
    %117 = arith.addf %111, %116 : vector<60x128xf32>
    %c22_104 = arith.constant 22 : index
    %c0_105 = arith.constant 0 : index
    %118 = vector.load %arg12[%c22_104, %c0_105] : memref<102x128xf32, #tpu.memory_space<vmem>>, vector<60x128xf32>
    %119 = arith.truncf %118 : vector<60x128xf32> to vector<60x128xbf16>
    %c8_106 = arith.constant 8 : index
    %c0_107 = arith.constant 0 : index
    %c0_108 = arith.constant 0 : index
    %120 = vector.load %arg6[%c8_106, %c0_107, %c0_108] : memref<9x128x128xbf16, #tpu.memory_space<vmem>>, vector<1x128x128xbf16>
    %121 = vector.shape_cast %120 : vector<1x128x128xbf16> to vector<128x128xbf16>
    %cst_109 = arith.constant dense<0.000000e+00> : vector<60x128xf32>
    %122 = tpu.matmul %119, %121, %cst_109 {dimension_numbers = #tpu.dot_dimension_numbers<[1], [0], [0], [1], [0, 0, 1, 1], [], []>} : vector<60x128xbf16>, vector<128x128xbf16>, vector<60x128xf32> -> vector<60x128xf32>
    %123 = arith.addf %117, %122 : vector<60x128xf32>
    %124 = vector.broadcast %70 : vector<1x128xf32> to vector<60x128xf32>
    %125 = arith.addf %123, %124 : vector<60x128xf32>
    %cst_110 = arith.constant 0.000000e+00 : f32
    %126 = vector.broadcast %cst_110 : f32 to vector<60x128xf32>
    %127 = arith.maximumf %125, %126 : vector<60x128xf32>
    %c0_111 = arith.constant 0 : index
    %c0_112 = arith.constant 0 : index
    %128 = vector.load %arg11[%c0_111, %c0_112] : memref<102x128xf32, #tpu.memory_space<vmem>>, vector<60x128xf32>
    tpu.vector_store %arg11[%c0_111, %c0_112], %127 {strides = array<i32>} : memref<102x128xf32, #tpu.memory_space<vmem>>, vector<60x128xf32>,
    %c0_113 = arith.constant 0 : index
    %c0_114 = arith.constant 0 : index
    %129 = vector.load %arg9[%c0_113, %c0_114] : memref<1x128xf32, #tpu.memory_space<vmem>>, vector<1x128xf32>
    %c0_115 = arith.constant 0 : index
    %c0_116 = arith.constant 0 : index
    %130 = vector.load %arg11[%c0_115, %c0_116] : memref<102x128xf32, #tpu.memory_space<vmem>>, vector<40x128xf32>
    %131 = arith.truncf %130 : vector<40x128xf32> to vector<40x128xbf16>
    %c0_117 = arith.constant 0 : index
    %c0_118 = arith.constant 0 : index
    %c0_119 = arith.constant 0 : index
    %132 = vector.load %arg8[%c0_117, %c0_118, %c0_119] : memref<9x128x128xbf16, #tpu.memory_space<vmem>>, vector<1x128x128xbf16>
    %133 = vector.shape_cast %132 : vector<1x128x128xbf16> to vector<128x128xbf16>
    %cst_120 = arith.constant dense<0.000000e+00> : vector<40x128xf32>
    %134 = tpu.matmul %131, %133, %cst_120 {dimension_numbers = #tpu.dot_dimension_numbers<[1], [0], [0], [1], [0, 0, 1, 1], [], []>} : vector<40x128xbf16>, vector<128x128xbf16>, vector<40x128xf32> -> vector<40x128xf32>
    %c1_121 = arith.constant 1 : index
    %c0_122 = arith.constant 0 : index
    %135 = vector.load %arg11[%c1_121, %c0_122] : memref<102x128xf32, #tpu.memory_space<vmem>>, vector<40x128xf32>
    %136 = arith.truncf %135 : vector<40x128xf32> to vector<40x128xbf16>
    %c1_123 = arith.constant 1 : index
    %c0_124 = arith.constant 0 : index
    %c0_125 = arith.constant 0 : index
    %137 = vector.load %arg8[%c1_123, %c0_124, %c0_125] : memref<9x128x128xbf16, #tpu.memory_space<vmem>>, vector<1x128x128xbf16>
    %138 = vector.shape_cast %137 : vector<1x128x128xbf16> to vector<128x128xbf16>
    %cst_126 = arith.constant dense<0.000000e+00> : vector<40x128xf32>
    %139 = tpu.matmul %136, %138, %cst_126 {dimension_numbers = #tpu.dot_dimension_numbers<[1], [0], [0], [1], [0, 0, 1, 1], [], []>} : vector<40x128xbf16>, vector<128x128xbf16>, vector<40x128xf32> -> vector<40x128xf32>
    %140 = arith.addf %134, %139 : vector<40x128xf32>
    %c2_127 = arith.constant 2 : index
    %c0_128 = arith.constant 0 : index
    %141 = vector.load %arg11[%c2_127, %c0_128] : memref<102x128xf32, #tpu.memory_space<vmem>>, vector<40x128xf32>
    %142 = arith.truncf %141 : vector<40x128xf32> to vector<40x128xbf16>
    %c2_129 = arith.constant 2 : index
    %c0_130 = arith.constant 0 : index
    %c0_131 = arith.constant 0 : index
    %143 = vector.load %arg8[%c2_129, %c0_130, %c0_131] : memref<9x128x128xbf16, #tpu.memory_space<vmem>>, vector<1x128x128xbf16>
    %144 = vector.shape_cast %143 : vector<1x128x128xbf16> to vector<128x128xbf16>
    %cst_132 = arith.constant dense<0.000000e+00> : vector<40x128xf32>
    %145 = tpu.matmul %142, %144, %cst_132 {dimension_numbers = #tpu.dot_dimension_numbers<[1], [0], [0], [1], [0, 0, 1, 1], [], []>} : vector<40x128xbf16>, vector<128x128xbf16>, vector<40x128xf32> -> vector<40x128xf32>
    %146 = arith.addf %140, %145 : vector<40x128xf32>
    %c10_133 = arith.constant 10 : index
    %c0_134 = arith.constant 0 : index
    %147 = vector.load %arg11[%c10_133, %c0_134] : memref<102x128xf32, #tpu.memory_space<vmem>>, vector<40x128xf32>
    %148 = arith.truncf %147 : vector<40x128xf32> to vector<40x128xbf16>
    %c3_135 = arith.constant 3 : index
    %c0_136 = arith.constant 0 : index
    %c0_137 = arith.constant 0 : index
    %149 = vector.load %arg8[%c3_135, %c0_136, %c0_137] : memref<9x128x128xbf16, #tpu.memory_space<vmem>>, vector<1x128x128xbf16>
    %150 = vector.shape_cast %149 : vector<1x128x128xbf16> to vector<128x128xbf16>
    %cst_138 = arith.constant dense<0.000000e+00> : vector<40x128xf32>
    %151 = tpu.matmul %148, %150, %cst_138 {dimension_numbers = #tpu.dot_dimension_numbers<[1], [0], [0], [1], [0, 0, 1, 1], [], []>} : vector<40x128xbf16>, vector<128x128xbf16>, vector<40x128xf32> -> vector<40x128xf32>
    %152 = arith.addf %146, %151 : vector<40x128xf32>
    %c11_139 = arith.constant 11 : index
    %c0_140 = arith.constant 0 : index
    %153 = vector.load %arg11[%c11_139, %c0_140] : memref<102x128xf32, #tpu.memory_space<vmem>>, vector<40x128xf32>
    %154 = arith.truncf %153 : vector<40x128xf32> to vector<40x128xbf16>
    %c4_141 = arith.constant 4 : index
    %c0_142 = arith.constant 0 : index
    %c0_143 = arith.constant 0 : index
    %155 = vector.load %arg8[%c4_141, %c0_142, %c0_143] : memref<9x128x128xbf16, #tpu.memory_space<vmem>>, vector<1x128x128xbf16>
    %156 = vector.shape_cast %155 : vector<1x128x128xbf16> to vector<128x128xbf16>
    %cst_144 = arith.constant dense<0.000000e+00> : vector<40x128xf32>
    %157 = tpu.matmul %154, %156, %cst_144 {dimension_numbers = #tpu.dot_dimension_numbers<[1], [0], [0], [1], [0, 0, 1, 1], [], []>} : vector<40x128xbf16>, vector<128x128xbf16>, vector<40x128xf32> -> vector<40x128xf32>
    %158 = arith.addf %152, %157 : vector<40x128xf32>
    %c12_145 = arith.constant 12 : index
    %c0_146 = arith.constant 0 : index
    %159 = vector.load %arg11[%c12_145, %c0_146] : memref<102x128xf32, #tpu.memory_space<vmem>>, vector<40x128xf32>
    %160 = arith.truncf %159 : vector<40x128xf32> to vector<40x128xbf16>
    %c5_147 = arith.constant 5 : index
    %c0_148 = arith.constant 0 : index
    %c0_149 = arith.constant 0 : index
    %161 = vector.load %arg8[%c5_147, %c0_148, %c0_149] : memref<9x128x128xbf16, #tpu.memory_space<vmem>>, vector<1x128x128xbf16>
    %162 = vector.shape_cast %161 : vector<1x128x128xbf16> to vector<128x128xbf16>
    %cst_150 = arith.constant dense<0.000000e+00> : vector<40x128xf32>
    %163 = tpu.matmul %160, %162, %cst_150 {dimension_numbers = #tpu.dot_dimension_numbers<[1], [0], [0], [1], [0, 0, 1, 1], [], []>} : vector<40x128xbf16>, vector<128x128xbf16>, vector<40x128xf32> -> vector<40x128xf32>
    %164 = arith.addf %158, %163 : vector<40x128xf32>
    %c20_151 = arith.constant 20 : index
    %c0_152 = arith.constant 0 : index
    %165 = vector.load %arg11[%c20_151, %c0_152] : memref<102x128xf32, #tpu.memory_space<vmem>>, vector<40x128xf32>
    %166 = arith.truncf %165 : vector<40x128xf32> to vector<40x128xbf16>
    %c6_153 = arith.constant 6 : index
    %c0_154 = arith.constant 0 : index
    %c0_155 = arith.constant 0 : index
    %167 = vector.load %arg8[%c6_153, %c0_154, %c0_155] : memref<9x128x128xbf16, #tpu.memory_space<vmem>>, vector<1x128x128xbf16>
    %168 = vector.shape_cast %167 : vector<1x128x128xbf16> to vector<128x128xbf16>
    %cst_156 = arith.constant dense<0.000000e+00> : vector<40x128xf32>
    %169 = tpu.matmul %166, %168, %cst_156 {dimension_numbers = #tpu.dot_dimension_numbers<[1], [0], [0], [1], [0, 0, 1, 1], [], []>} : vector<40x128xbf16>, vector<128x128xbf16>, vector<40x128xf32> -> vector<40x128xf32>
    %170 = arith.addf %164, %169 : vector<40x128xf32>
    %c21_157 = arith.constant 21 : index
    %c0_158 = arith.constant 0 : index
    %171 = vector.load %arg11[%c21_157, %c0_158] : memref<102x128xf32, #tpu.memory_space<vmem>>, vector<40x128xf32>
    %172 = arith.truncf %171 : vector<40x128xf32> to vector<40x128xbf16>
    %c7_159 = arith.constant 7 : index
    %c0_160 = arith.constant 0 : index
    %c0_161 = arith.constant 0 : index
    %173 = vector.load %arg8[%c7_159, %c0_160, %c0_161] : memref<9x128x128xbf16, #tpu.memory_space<vmem>>, vector<1x128x128xbf16>
    %174 = vector.shape_cast %173 : vector<1x128x128xbf16> to vector<128x128xbf16>
    %cst_162 = arith.constant dense<0.000000e+00> : vector<40x128xf32>
    %175 = tpu.matmul %172, %174, %cst_162 {dimension_numbers = #tpu.dot_dimension_numbers<[1], [0], [0], [1], [0, 0, 1, 1], [], []>} : vector<40x128xbf16>, vector<128x128xbf16>, vector<40x128xf32> -> vector<40x128xf32>
    %176 = arith.addf %170, %175 : vector<40x128xf32>
    %c22_163 = arith.constant 22 : index
    %c0_164 = arith.constant 0 : index
    %177 = vector.load %arg11[%c22_163, %c0_164] : memref<102x128xf32, #tpu.memory_space<vmem>>, vector<40x128xf32>
    %178 = arith.truncf %177 : vector<40x128xf32> to vector<40x128xbf16>
    %c8_165 = arith.constant 8 : index
    %c0_166 = arith.constant 0 : index
    %c0_167 = arith.constant 0 : index
    %179 = vector.load %arg8[%c8_165, %c0_166, %c0_167] : memref<9x128x128xbf16, #tpu.memory_space<vmem>>, vector<1x128x128xbf16>
    %180 = vector.shape_cast %179 : vector<1x128x128xbf16> to vector<128x128xbf16>
    %cst_168 = arith.constant dense<0.000000e+00> : vector<40x128xf32>
    %181 = tpu.matmul %178, %180, %cst_168 {dimension_numbers = #tpu.dot_dimension_numbers<[1], [0], [0], [1], [0, 0, 1, 1], [], []>} : vector<40x128xbf16>, vector<128x128xbf16>, vector<40x128xf32> -> vector<40x128xf32>
    %182 = arith.addf %176, %181 : vector<40x128xf32>
    %183 = vector.broadcast %129 : vector<1x128xf32> to vector<40x128xf32>
    %184 = arith.addf %182, %183 : vector<40x128xf32>
    %cst_169 = arith.constant 0.000000e+00 : f32
    %185 = vector.broadcast %cst_169 : f32 to vector<40x128xf32>
    %186 = arith.maximumf %184, %185 : vector<40x128xf32>
    %c0_170 = arith.constant 0 : index
    %c0_171 = arith.constant 0 : index
    %c0_172 = arith.constant 0 : index
    %187 = vector.load %arg10[%c0_170, %c0_171, %c0_172] : memref<1x40x128xf32, #tpu.memory_space<vmem>>, vector<1x40x128xf32>
    %188 = vector.shape_cast %187 : vector<1x40x128xf32> to vector<40x128xf32>
    %189 = vector.shape_cast %186 : vector<40x128xf32> to vector<1x40x128xf32>
    tpu.vector_store %arg10[%c0_170, %c0_171, %c0_172], %189 {strides = array<i32>} : memref<1x40x128xf32, #tpu.memory_space<vmem>>, vector<1x40x128xf32>,
    return
  }
  func.func @transform_0(%arg0: i32) -> (i32, i32, i32) {
    %c0_i32 = arith.constant 0 : i32
    %c0_i32_0 = arith.constant 0 : i32
    %c0_i32_1 = arith.constant 0 : i32
    return %arg0, %c0_i32, %c0_i32_0 : i32, i32, i32
  }
  func.func @transform_1(%arg0: i32) -> (i32, i32) {
    %c0_i32 = arith.constant 0 : i32
    %c0_i32_0 = arith.constant 0 : i32
    %c0_i32_1 = arith.constant 0 : i32
    return %c0_i32, %c0_i32_0 : i32, i32
  }
  func.func @transform_2(%arg0: i32) -> (i32, i32) {
    %c0_i32 = arith.constant 0 : i32
    %c0_i32_0 = arith.constant 0 : i32
    %c0_i32_1 = arith.constant 0 : i32
    return %c0_i32, %c0_i32_0 : i32, i32
  }
  func.func @transform_3(%arg0: i32) -> (i32, i32, i32) {
    %c0_i32 = arith.constant 0 : i32
    %c0_i32_0 = arith.constant 0 : i32
    %c0_i32_1 = arith.constant 0 : i32
    %c0_i32_2 = arith.constant 0 : i32
    return %c0_i32, %c0_i32_0, %c0_i32_1 : i32, i32, i32
  }
  func.func @transform_4(%arg0: i32) -> (i32, i32) {
    %c0_i32 = arith.constant 0 : i32
    %c0_i32_0 = arith.constant 0 : i32
    %c0_i32_1 = arith.constant 0 : i32
    return %c0_i32, %c0_i32_0 : i32, i32
  }
  func.func @transform_5(%arg0: i32) -> (i32, i32, i32) {
    %c0_i32 = arith.constant 0 : i32
    %c0_i32_0 = arith.constant 0 : i32
    %c0_i32_1 = arith.constant 0 : i32
    %c0_i32_2 = arith.constant 0 : i32
    return %c0_i32, %c0_i32_0, %c0_i32_1 : i32, i32, i32
  }
  func.func @transform_6(%arg0: i32) -> (i32, i32) {
    %c0_i32 = arith.constant 0 : i32
    %c0_i32_0 = arith.constant 0 : i32
    %c0_i32_1 = arith.constant 0 : i32
    return %c0_i32, %c0_i32_0 : i32, i32
  }
  func.func @transform_7(%arg0: i32) -> (i32, i32, i32) {
    %c0_i32 = arith.constant 0 : i32
    %c0_i32_0 = arith.constant 0 : i32
    %c0_i32_1 = arith.constant 0 : i32
    %c0_i32_2 = arith.constant 0 : i32
    return %c0_i32, %c0_i32_0, %c0_i32_1 : i32, i32, i32
  }
  func.func @transform_8(%arg0: i32) -> (i32, i32) {
    %c0_i32 = arith.constant 0 : i32
    %c0_i32_0 = arith.constant 0 : i32
    %c0_i32_1 = arith.constant 0 : i32
    return %c0_i32, %c0_i32_0 : i32, i32
  }
  func.func @transform_9(%arg0: i32) -> (i32, i32, i32) {
    %c0_i32 = arith.constant 0 : i32
    %c0_i32_0 = arith.constant 0 : i32
    %c0_i32_1 = arith.constant 0 : i32
    return %arg0, %c0_i32, %c0_i32_0 : i32, i32, i32
  }
}

</mosaic_0001>

<llo_original>
// kernel: tile.23
$region0: #{tile.23}
  #allocation0 [shape = 's32[1]{0}', space=sflag, size = 0x4, scoped, tag = 'scoped memory for tile.23']
  %s0 = inlined_call_operand.vmem [shape: f32[32], index: 0, kind: input, shape index: {}]
  %s1 = inlined_call_operand.vmem [shape: f32[4,32], index: 1, kind: output, shape index: {}]
  // Predicated region
  $region2: #{tile.23} parent=0 // pred_check
    _
  $region3: #{tile.23} parent=0 // pred_check_branch
    %3 = sbr.rel (0) target = $region5
  $region4: #{tile.23} parent=0 // pred_region
    _
  $region5: #{tile.23} parent=0 // pred_fallthru
    _
  %v4 = vld [vmem:[%s0] ss:$0 sm:$0xff]
  %5 = vst [vmem:[%s1] sm:$0xf] %v4

// kernel: tile.24
$region0: #{tile.24}
  %s0 = inlined_call_operand.vmem [shape: f32[4,32], index: 0, kind: input, shape index: {}]
  %s1 = inlined_call_operand.vmem [shape: f32[1,128], index: 1, kind: output, shape index: {}]
  $region1: #{tile.24} parent=0
    #allocation0 [shape = 'u8[4096]{0}', space=vmem, size = 0x1000, scoped, tag = 'scoped mem for output reshape']
    #allocation1 [shape = 'u8[4096]{0}', space=vmem, size = 0x1000, scoped, tag = 'scoped mem for input reshape']
    %s3 = sshll.u32 1, 4
    %s4 = ssub.s32 %s3, 1
    %v5 = vld [vmem:[%s0] sm:%s4]
    %6 = vst [vmem:[#allocation1] sm:%s4] %v5
    %v7 = vld [vmem:[#allocation1] sm:$0x1]
    %vm8 = vcmask 261120
    %9 = vst.msk [vmem:[#allocation0] sm:$0x1] %vm8, %v7
    %s10 = scalar_lea.vmem [#allocation1], 3
    %v11 = vld [vmem:[%s10] sm:$0x1]
    %12 = vrot.lane.b32.xlu0 %v11, 96
    %v13 = vpop.permute.xlu0 %12
    %vm14 = vcmask 1048320
    %15 = vst.msk [vmem:[#allocation0] sm:$0x1] %vm14, %v13
    %s16 = scalar_lea.vmem [#allocation1], 2
    %v17 = vld [vmem:[%s16] sm:$0x1]
    %18 = vrot.lane.b32.xlu0 %v17, 64
    %v19 = vpop.permute.xlu0 %18
    %vm20 = vcmask 785920
    %21 = vst.msk [vmem:[#allocation0] sm:$0x1] %vm20, %v19
    %s22 = scalar_lea.vmem [#allocation1], 1
    %v23 = vld [vmem:[%s22] sm:$0x1]
    %24 = vrot.lane.b32.xlu0 %v23, 32
    %v25 = vpop.permute.xlu0 %24
    %vm26 = vcmask 523520
    %27 = vst.msk [vmem:[#allocation0] sm:$0x1] %vm26, %v25
    %s29 = sshll.u32 1, 1
    %s30 = ssub.s32 %s29, 1
    %v32 = vld [vmem:[#allocation0] sm:%s30]
    %s33 = sshll.u32 1, 1
    %s34 = ssub.s32 %s33, 1
    %35 = vst [vmem:[%s1] sm:%s34] %v32

// kernel: encoder_forward.1
$region0: #{encoder_forward.1}
  #allocation0 [shape = 'u32[]', space=smem, size = 0x4, offset = 0x4, fixed_abs, tag = 'smem constant byte address 0x4 - core index']
  #allocation1 [shape = 'u32[144,128]{1,0:T(1,128)}', space=vmem, size = 0x12000, scoped, tag = 'internal scratch']
  #allocation2 [shape = 'f32[102,128]{1,0:T(8,128)}', space=vmem, size = 0xd000, scoped, tag = 'scratch operand']
  #allocation3 [shape = 'f32[102,128]{1,0:T(8,128)}', space=vmem, size = 0xd000, scoped, tag = 'scratch operand']
  %s0 = inlined_call_operand.vmem [shape: u8[2,100,144], index: 0, kind: input, shape index: {}]
  %s1 = inlined_call_operand.vmem [shape: bf16[144,128], index: 1, kind: input, shape index: {}]
  %s2 = inlined_call_operand.vmem [shape: f32[1,128], index: 2, kind: input, shape index: {}]
  %s3 = inlined_call_operand.vmem [shape: bf16[9,128,128], index: 3, kind: input, shape index: {}]
  %s4 = inlined_call_operand.vmem [shape: f32[1,128], index: 4, kind: input, shape index: {}]
  %s5 = inlined_call_operand.vmem [shape: bf16[9,128,128], index: 5, kind: input, shape index: {}]
  %s6 = inlined_call_operand.vmem [shape: f32[1,128], index: 6, kind: input, shape index: {}]
  %s7 = inlined_call_operand.vmem [shape: bf16[9,128,128], index: 7, kind: input, shape index: {}]
  %s8 = inlined_call_operand.vmem [shape: f32[1,128], index: 8, kind: input, shape index: {}]
  %s9 = inlined_call_operand.vmem [shape: f32[2,40,128], index: 9, kind: output, shape index: {}]
  %s10 = sld [smem:[#allocation0]]
  $region69: #{encoder_forward.1} parent=0
    _
  %s12 = ssub.s32 1, %s10
  %s13 = scalar_select 0, %s12, %s10
  loop: start=0, step=1, limit=4
  $region2: #{encoder_forward.1} parent=0 // loop_pre_header
    _
  $region3: #{encoder_forward.1} parent=0 // loop_header
    %s15 = sphi 0, %s19
    %p16 = scmp.ge.s32.totalorder %s15, 4
    %s25 = sphi 0, %s27
    %s28 = sphi 0, %s25
    %s29 = sphi 0, %s28
    %s45 = sphi 0, %s29
    %s49 = sphi 0, %s49
    %s51 = sphi 0, %s49
    %s52 = sphi 0, %s51
    %s66 = sphi 0, %s52
    %s70 = sphi 0, %s70
    %s72 = sphi 0, %s70
    %s73 = sphi 0, %s72
    %s87 = sphi 0, %s73
    %s91 = sphi 0, %s91
    %s93 = sphi 0, %s91
    %s94 = sphi 0, %s93
    %s108 = sphi 0, %s94
    %s112 = sphi 0, %s112
    %s114 = sphi 0, %s112
    %s115 = sphi 0, %s114
    %s129 = sphi 0, %s115
    %s133 = sphi 0, %s133
    %s135 = sphi 0, %s133
    %s136 = sphi 0, %s135
    %s150 = sphi 0, %s136
    %s154 = sphi 0, %s154
    %s156 = sphi 0, %s154
    %s157 = sphi 0, %s156
    %s171 = sphi 0, %s157
    %s175 = sphi 0, %s175
    %s177 = sphi 0, %s175
    %s178 = sphi 0, %s177
    %s192 = sphi 0, %s178
    %s196 = sphi 0, %s196
    %s198 = sphi 0, %s196
    %s199 = sphi 0, %s198
    %s213 = sphi 0, %s199
    %s219 = sphi 0, %s221
    %s222 = sphi 0, %s219
    %s223 = sphi 0, %s222
    %s239 = sphi 0, %s223
  $region4: #{encoder_forward.1} parent=0 // loop_header_branch
    %18 = sbr.rel (%p16) target = $region8
  $region5: #{encoder_forward.1} parent=0 // loop_body
    %s20 = ssub.s32 %s15, 1
    %s21 = ssub.s32 %s15, 2
    %s22 = sadd.s32 %s15, 1
    %s23 = ssub.s32 %s15, %s22
    %p24 = scmp.eq.s32.totalorder %s23, 0
    %s26 = sadd.s32 %s25, 1
    %s27 = scalar_select %p24, %s25, %s26
    %p30 = pneg %p24
    %p31 = scmp.eq.s32.totalorder %s15, 1
    %p32 = por %p30, %p31
    %p33 = scmp.ne.s32.totalorder %s25, %s28
    %p34 = scmp.eq.s32.totalorder %s15, 0
    %p35 = por %p33, %p34
    %p36 = scmp.ne.s32.totalorder %s25, %s28
    %p37 = scmp.eq.s32.totalorder %s20, 1
    %p38 = por %p36, %p37
    %p39 = scmp.ne.s32.totalorder %s28, %s29
    %p40 = scmp.eq.s32.totalorder %s20, 0
    %p41 = por %p39, %p40
    %p42 = scmp.ne.s32.totalorder %s28, %s29
    %p43 = scmp.eq.s32.totalorder %s21, 1
    %p44 = por %p42, %p43
    %p46 = scmp.ne.s32.totalorder %s29, %s45
    %p47 = scmp.eq.s32.totalorder %s21, 0
    %p48 = por %p46, %p47
    %s50 = sadd.s32 %s49, 1
    %p53 = scmp.eq.s32.totalorder %s15, 1
    %p54 = scmp.ne.s32.totalorder %s49, %s51
    %p55 = scmp.eq.s32.totalorder %s15, 0
    %p56 = por %p54, %p55
    %p57 = scmp.ne.s32.totalorder %s49, %s51
    %p58 = scmp.eq.s32.totalorder %s20, 1
    %p59 = por %p57, %p58
    %p60 = scmp.ne.s32.totalorder %s51, %s52
    %p61 = scmp.eq.s32.totalorder %s20, 0
    %p62 = por %p60, %p61
    %p63 = scmp.ne.s32.totalorder %s51, %s52
    %p64 = scmp.eq.s32.totalorder %s21, 1
    %p65 = por %p63, %p64
    %p67 = scmp.ne.s32.totalorder %s52, %s66
    %p68 = scmp.eq.s32.totalorder %s21, 0
    %p69 = por %p67, %p68
    %s71 = sadd.s32 %s70, 1
    %p74 = scmp.eq.s32.totalorder %s15, 1
    %p75 = scmp.ne.s32.totalorder %s70, %s72
    %p76 = scmp.eq.s32.totalorder %s15, 0
    %p77 = por %p75, %p76
    %p78 = scmp.ne.s32.totalorder %s70, %s72
    %p79 = scmp.eq.s32.totalorder %s20, 1
    %p80 = por %p78, %p79
    %p81 = scmp.ne.s32.totalorder %s72, %s73
    %p82 = scmp.eq.s32.totalorder %s20, 0
    %p83 = por %p81, %p82
    %p84 = scmp.ne.s32.totalorder %s72, %s73
    %p85 = scmp.eq.s32.totalorder %s21, 1
    %p86 = por %p84, %p85
    %p88 = scmp.ne.s32.totalorder %s73, %s87
    %p89 = scmp.eq.s32.totalorder %s21, 0
    %p90 = por %p88, %p89
    %s92 = sadd.s32 %s91, 1
    %p95 = scmp.eq.s32.totalorder %s15, 1
    %p96 = scmp.ne.s32.totalorder %s91, %s93
    %p97 = scmp.eq.s32.totalorder %s15, 0
    %p98 = por %p96, %p97
    %p99 = scmp.ne.s32.totalorder %s91, %s93
    %p100 = scmp.eq.s32.totalorder %s20, 1
    %p101 = por %p99, %p100
    %p102 = scmp.ne.s32.totalorder %s93, %s94
    %p103 = scmp.eq.s32.totalorder %s20, 0
    %p104 = por %p102, %p103
    %p105 = scmp.ne.s32.totalorder %s93, %s94
    %p106 = scmp.eq.s32.totalorder %s21, 1
    %p107 = por %p105, %p106
    %p109 = scmp.ne.s32.totalorder %s94, %s108
    %p110 = scmp.eq.s32.totalorder %s21, 0
    %p111 = por %p109, %p110
    %s113 = sadd.s32 %s112, 1
    %p116 = scmp.eq.s32.totalorder %s15, 1
    %p117 = scmp.ne.s32.totalorder %s112, %s114
    %p118 = scmp.eq.s32.totalorder %s15, 0
    %p119 = por %p117, %p118
    %p120 = scmp.ne.s32.totalorder %s112, %s114
    %p121 = scmp.eq.s32.totalorder %s20, 1
    %p122 = por %p120, %p121
    %p123 = scmp.ne.s32.totalorder %s114, %s115
    %p124 = scmp.eq.s32.totalorder %s20, 0
    %p125 = por %p123, %p124
    %p126 = scmp.ne.s32.totalorder %s114, %s115
    %p127 = scmp.eq.s32.totalorder %s21, 1
    %p128 = por %p126, %p127
    %p130 = scmp.ne.s32.totalorder %s115, %s129
    %p131 = scmp.eq.s32.totalorder %s21, 0
    %p132 = por %p130, %p131
    %s134 = sadd.s32 %s133, 1
    %p137 = scmp.eq.s32.totalorder %s15, 1
    %p138 = scmp.ne.s32.totalorder %s133, %s135
    %p139 = scmp.eq.s32.totalorder %s15, 0
    %p140 = por %p138, %p139
    %p141 = scmp.ne.s32.totalorder %s133, %s135
    %p142 = scmp.eq.s32.totalorder %s20, 1
    %p143 = por %p141, %p142
    %p144 = scmp.ne.s32.totalorder %s135, %s136
    %p145 = scmp.eq.s32.totalorder %s20, 0
    %p146 = por %p144, %p145
    %p147 = scmp.ne.s32.totalorder %s135, %s136
    %p148 = scmp.eq.s32.totalorder %s21, 1
    %p149 = por %p147, %p148
    %p151 = scmp.ne.s32.totalorder %s136, %s150
    %p152 = scmp.eq.s32.totalorder %s21, 0
    %p153 = por %p151, %p152
    %s155 = sadd.s32 %s154, 1
    %p158 = scmp.eq.s32.totalorder %s15, 1
    %p159 = scmp.ne.s32.totalorder %s154, %s156
    %p160 = scmp.eq.s32.totalorder %s15, 0
    %p161 = por %p159, %p160
    %p162 = scmp.ne.s32.totalorder %s154, %s156
    %p163 = scmp.eq.s32.totalorder %s20, 1
    %p164 = por %p162, %p163
    %p165 = scmp.ne.s32.totalorder %s156, %s157
    %p166 = scmp.eq.s32.totalorder %s20, 0
    %p167 = por %p165, %p166
    %p168 = scmp.ne.s32.totalorder %s156, %s157
    %p169 = scmp.eq.s32.totalorder %s21, 1
    %p170 = por %p168, %p169
    %p172 = scmp.ne.s32.totalorder %s157, %s171
    %p173 = scmp.eq.s32.totalorder %s21, 0
    %p174 = por %p172, %p173
    %s176 = sadd.s32 %s175, 1
    %p179 = scmp.eq.s32.totalorder %s15, 1
    %p180 = scmp.ne.s32.totalorder %s175, %s177
    %p181 = scmp.eq.s32.totalorder %s15, 0
    %p182 = por %p180, %p181
    %p183 = scmp.ne.s32.totalorder %s175, %s177
    %p184 = scmp.eq.s32.totalorder %s20, 1
    %p185 = por %p183, %p184
    %p186 = scmp.ne.s32.totalorder %s177, %s178
    %p187 = scmp.eq.s32.totalorder %s20, 0
    %p188 = por %p186, %p187
    %p189 = scmp.ne.s32.totalorder %s177, %s178
    %p190 = scmp.eq.s32.totalorder %s21, 1
    %p191 = por %p189, %p190
    %p193 = scmp.ne.s32.totalorder %s178, %s192
    %p194 = scmp.eq.s32.totalorder %s21, 0
    %p195 = por %p193, %p194
    %s197 = sadd.s32 %s196, 1
    %p200 = scmp.eq.s32.totalorder %s15, 1
    %p201 = scmp.ne.s32.totalorder %s196, %s198
    %p202 = scmp.eq.s32.totalorder %s15, 0
    %p203 = por %p201, %p202
    %p204 = scmp.ne.s32.totalorder %s196, %s198
    %p205 = scmp.eq.s32.totalorder %s20, 1
    %p206 = por %p204, %p205
    %p207 = scmp.ne.s32.totalorder %s198, %s199
    %p208 = scmp.eq.s32.totalorder %s20, 0
    %p209 = por %p207, %p208
    %p210 = scmp.ne.s32.totalorder %s198, %s199
    %p211 = scmp.eq.s32.totalorder %s21, 1
    %p212 = por %p210, %p211
    %p214 = scmp.ne.s32.totalorder %s199, %s213
    %p215 = scmp.eq.s32.totalorder %s21, 0
    %p216 = por %p214, %p215
    %s217 = ssub.s32 %s15, %s22
    %p218 = scmp.eq.s32.totalorder %s217, 0
    %s220 = sadd.s32 %s219, 1
    %s221 = scalar_select %p218, %s219, %s220
    %p224 = pneg %p218
    %p225 = scmp.eq.s32.totalorder %s15, 1
    %p226 = por %p224, %p225
    %p227 = scmp.ne.s32.totalorder %s219, %s222
    %p228 = scmp.eq.s32.totalorder %s15, 0
    %p229 = por %p227, %p228
    %p230 = scmp.ne.s32.totalorder %s219, %s222
    %p231 = scmp.eq.s32.totalorder %s20, 1
    %p232 = por %p230, %p231
    %p233 = scmp.ne.s32.totalorder %s222, %s223
    %p234 = scmp.eq.s32.totalorder %s20, 0
    %p235 = por %p233, %p234
    %p236 = scmp.ne.s32.totalorder %s222, %s223
    %p237 = scmp.eq.s32.totalorder %s21, 1
    %p238 = por %p236, %p237
    %p240 = scmp.ne.s32.totalorder %s223, %s239
    %p241 = scmp.eq.s32.totalorder %s21, 0
    %p242 = por %p240, %p241
    %p243 = scmp.le.s32.totalorder 1, %s15
    %p244 = scmp.lt.s32.totalorder %s15, 3
    %p245 = pnand %p243, %p244
    %p246 = pneg %p245
    // Predicated region
    $region9: #{encoder_forward.1} parent=5 // pred_check
      _
    $region10: #{encoder_forward.1} parent=5 // pred_check_branch
      %248 = sbr.rel (%p245) target = $region12
    $region11: #{encoder_forward.1} parent=5 // pred_region
      %s249 = ssub.s32 %s15, 1
      // Predicated region
      $region13: #{encoder_forward.1} parent=11 // pred_check
        %p250 = pneg %p62
      $region14: #{encoder_forward.1} parent=11 // pred_check_branch
        %252 = sbr.rel (%p250) target = $region16
      $region15: #{encoder_forward.1} parent=11 // pred_region
        _
      $region16: #{encoder_forward.1} parent=11 // pred_fallthru
        _
      // Predicated region
      $region17: #{encoder_forward.1} parent=11 // pred_check
        %p253 = pneg %p83
      $region18: #{encoder_forward.1} parent=11 // pred_check_branch
        %255 = sbr.rel (%p253) target = $region20
      $region19: #{encoder_forward.1} parent=11 // pred_region
        _
      $region20: #{encoder_forward.1} parent=11 // pred_fallthru
        _
      // Predicated region
      $region21: #{encoder_forward.1} parent=11 // pred_check
        %p256 = pneg %p104
      $region22: #{encoder_forward.1} parent=11 // pred_check_branch
        %258 = sbr.rel (%p256) target = $region24
      $region23: #{encoder_forward.1} parent=11 // pred_region
        _
      $region24: #{encoder_forward.1} parent=11 // pred_fallthru
        _
      // Predicated region
      $region25: #{encoder_forward.1} parent=11 // pred_check
        %p259 = pneg %p125
      $region26: #{encoder_forward.1} parent=11 // pred_check_branch
        %261 = sbr.rel (%p259) target = $region28
      $region27: #{encoder_forward.1} parent=11 // pred_region
        _
      $region28: #{encoder_forward.1} parent=11 // pred_fallthru
        _
      // Predicated region
      $region29: #{encoder_forward.1} parent=11 // pred_check
        %p262 = pneg %p146
      $region30: #{encoder_forward.1} parent=11 // pred_check_branch
        %264 = sbr.rel (%p262) target = $region32
      $region31: #{encoder_forward.1} parent=11 // pred_region
        _
      $region32: #{encoder_forward.1} parent=11 // pred_fallthru
        _
      // Predicated region
      $region33: #{encoder_forward.1} parent=11 // pred_check
        %p265 = pneg %p167
      $region34: #{encoder_forward.1} parent=11 // pred_check_branch
        %267 = sbr.rel (%p265) target = $region36
      $region35: #{encoder_forward.1} parent=11 // pred_region
        _
      $region36: #{encoder_forward.1} parent=11 // pred_fallthru
        _
      // Predicated region
      $region37: #{encoder_forward.1} parent=11 // pred_check
        %p268 = pneg %p188
      $region38: #{encoder_forward.1} parent=11 // pred_check_branch
        %270 = sbr.rel (%p268) target = $region40
      $region39: #{encoder_forward.1} parent=11 // pred_region
        _
      $region40: #{encoder_forward.1} parent=11 // pred_fallthru
        _
      // Predicated region
      $region41: #{encoder_forward.1} parent=11 // pred_check
        %p271 = pneg %p209
      $region42: #{encoder_forward.1} parent=11 // pred_check_branch
        %273 = sbr.rel (%p271) target = $region44
      $region43: #{encoder_forward.1} parent=11 // pred_region
        _
      $region44: #{encoder_forward.1} parent=11 // pred_fallthru
        _
    $region12: #{encoder_forward.1} parent=5 // pred_fallthru
      _
    %p274 = scmp.lt.s32.totalorder %s15, 2
    // Predicated region
    $region45: #{encoder_forward.1} parent=5 // pred_check
      %p275 = pneg %p274
    $region46: #{encoder_forward.1} parent=5 // pred_check_branch
      %277 = sbr.rel (%p275) target = $region48
    $region47: #{encoder_forward.1} parent=5 // pred_region
      // Predicated region
      $region49: #{encoder_forward.1} parent=47 // pred_check
        %p278 = pneg %p35
      $region50: #{encoder_forward.1} parent=47 // pred_check_branch
        %280 = sbr.rel (%p278) target = $region52
      $region51: #{encoder_forward.1} parent=47 // pred_region
        %p281 = scmp.lt.s32.totalorder %s15, 1
        %s282 = scalar_select %p281, %s15, 1
        %s283 = smul.addr %s282, 26
        %s284 = smul.addr %s283, 2
        %s285 = scalar_lea.vmem %s0, %s284
      $region52: #{encoder_forward.1} parent=47 // pred_fallthru
        _
    $region48: #{encoder_forward.1} parent=5 // pred_fallthru
      _
    %p286 = scmp.le.s32.totalorder 1, %s15
    %p287 = scmp.lt.s32.totalorder %s15, 3
    %p288 = pnand %p286, %p287
    %p289 = pneg %p288
    // Predicated region
    $region53: #{encoder_forward.1} parent=5 // pred_check
      _
    $region54: #{encoder_forward.1} parent=5 // pred_check_branch
      %291 = sbr.rel (%p288) target = $region56
    $region55: #{encoder_forward.1} parent=5 // pred_region
      %s292 = ssub.s32 %s15, 1
      %p293 = scmp.lt.s32.totalorder %s20, 1
      %s294 = scalar_select %p293, %s20, 1
      %s295 = smul.addr %s294, 26
      %s296 = smul.addr %s295, 2
      %s297 = scalar_lea.vmem %s0, %s296
      %p298 = pneg %p41
      %p299 = pneg %p38
      %p300 = pneg %p62
      %p301 = pneg %p59
      %p302 = pneg %p83
      %p303 = pneg %p80
      %p304 = pneg %p104
      %p305 = pneg %p101
      %p306 = pneg %p125
      %p307 = pneg %p122
      %p308 = pneg %p146
      %p309 = pneg %p143
      %p310 = pneg %p167
      %p311 = pneg %p164
      %p312 = pneg %p188
      %p313 = pneg %p185
      %p314 = pneg %p209
      %p315 = pneg %p206
      %p316 = pneg %p235
      %p317 = pneg %p232
      %p318 = scmp.lt.s32.totalorder %s20, 1
      %s319 = scalar_select %p318, %s20, 1
      %s320 = smul.addr %s319, 5
      %s321 = smul.addr %s320, 8
      %s322 = scalar_lea.vmem %s9, %s321
      %p323 = scmp.lt.s32.totalorder %s20, 1
      %s324 = scalar_select %p323, %s20, 1
      %s325 = smul.addr %s324, 26
      %s326 = smul.addr %s325, 2
      %s327 = scalar_lea.vmem %s0, %s326
      %p328 = scmp.lt.s32.totalorder %s20, 1
      %s329 = scalar_select %p328, %s20, 1
      %s330 = smul.addr %s329, 5
      %s331 = smul.addr %s330, 8
      %s332 = scalar_lea.vmem %s9, %s331
      %v334 = vld [vmem:[%s2] sm:$0x1]
      %v335 = vld [vmem:[%s327] sm:$0xf]
      %v336 = vld [vmem:[%s327 + $0x4] sm:$0xf]
      %v337 = vld [vmem:[%s327 + $0x8] sm:$0xf]
      %v338 = vld [vmem:[%s327 + $0xc] sm:$0xf]
      %v339 = vld [vmem:[%s327 + $0x10] sm:$0xf]
      %v340 = vld [vmem:[%s327 + $0x14] sm:$0xf]
      %v341 = vld [vmem:[%s327 + $0x18] sm:$0xf]
      %v342 = vld [vmem:[%s327 + $0x1c] sm:$0xf]
      %v343 = vld [vmem:[%s327 + $0x20] sm:$0xf]
      %v344 = vld [vmem:[%s327 + $0x24] sm:$0xf]
      %v345 = vld [vmem:[%s327 + $0x28] sm:$0xf]
      %v346 = vld [vmem:[%s327 + $0x2c] sm:$0xf]
      %v347 = vld [vmem:[%s327 + $0x30] sm:$0x5]
      %v348 = vunpack.c.l.u8.bf16 %v335
      %v349 = vunpack.c.l.u8.bf16 %v336
      %v350 = vunpack.c.l.u8.bf16 %v337
      %v351 = vunpack.c.l.u8.bf16 %v338
      %v352 = vunpack.c.l.u8.bf16 %v339
      %v353 = vunpack.c.l.u8.bf16 %v340
      %v354 = vunpack.c.l.u8.bf16 %v341
      %v355 = vunpack.c.l.u8.bf16 %v342
      %v356 = vunpack.c.l.u8.bf16 %v343
      %v357 = vunpack.c.l.u8.bf16 %v344
      %v358 = vunpack.c.l.u8.bf16 %v345
      %v359 = vunpack.c.l.u8.bf16 %v346
      %v360 = vunpack.c.l.u8.bf16 %v347
      %v361 = vld [vmem:[%s1] sm:$0xf]
      %v362 = vld [vmem:[%s1 + $0x4] sm:$0xf]
      %v363 = vld [vmem:[%s1 + $0x8] sm:$0xf]
      %v364 = vld [vmem:[%s1 + $0xc] sm:$0xf]
      %v365 = vld [vmem:[%s1 + $0x10] sm:$0xf]
      %v366 = vld [vmem:[%s1 + $0x14] sm:$0xf]
      %v367 = vld [vmem:[%s1 + $0x18] sm:$0xf]
      %v368 = vld [vmem:[%s1 + $0x1c] sm:$0xf]
      %v369 = vld [vmem:[%s1 + $0x20] sm:$0xf]
      %v370 = vld [vmem:[%s1 + $0x24] sm:$0xf]
      %v371 = vld [vmem:[%s1 + $0x28] sm:$0xf]
      %v372 = vld [vmem:[%s1 + $0x2c] sm:$0xf]
      %v373 = vld [vmem:[%s1 + $0x30] sm:$0xf]
      %v374 = vld [vmem:[%s1 + $0x34] sm:$0xf]
      %v375 = vld [vmem:[%s1 + $0x38] sm:$0xf]
      %v376 = vld [vmem:[%s1 + $0x3c] sm:$0xf]
      %v377 = vld [vmem:[%s1 + $0x40] sm:$0xf]
      %v378 = vld [vmem:[%s1 + $0x44] sm:$0xf]
      %v380 = vlaneseq
      %v381 = vshrl.u32 %v380, 7
      %v382 = vsub.s32 0, %v381
      %v383 = vrot.slane %v334, %v382
      %v398 = vunpack.c.l.b16 %v348
      %v399 = vunpack.c.h.b16 %v348
      %v400 = vunpack.c.l.b16 %v349
      %v401 = vunpack.c.h.b16 %v349
      %v402 = vunpack.c.l.b16 %v350
      %v403 = vunpack.c.h.b16 %v350
      %v404 = vunpack.c.l.b16 %v351
      %v405 = vunpack.c.h.b16 %v351
      %v406 = vunpack.c.l.b16 %v352
      %v407 = vunpack.c.h.b16 %v352
      %v408 = vunpack.c.l.b16 %v353
      %v409 = vunpack.c.h.b16 %v353
      %v410 = vunpack.c.l.b16 %v354
      %v411 = vunpack.c.h.b16 %v354
      %v412 = vunpack.c.l.b16 %v355
      %v413 = vunpack.c.h.b16 %v355
      %v414 = vunpack.c.l.b16 %v356
      %v415 = vunpack.c.h.b16 %v356
      %v416 = vunpack.c.l.b16 %v357
      %v417 = vunpack.c.h.b16 %v357
      %v418 = vunpack.c.l.b16 %v358
      %v419 = vunpack.c.h.b16 %v358
      %v420 = vunpack.c.l.b16 %v359
      %v421 = vunpack.c.h.b16 %v359
      %v422 = vunpack.c.l.b16 %v360
      %v423 = vunpack.c.h.b16 %v360
      %v424 = vpack.c.b16 %v400, %v398
      %v425 = vpack.c.b16 %v401, %v399
      %v426 = vpack.c.b16 %v404, %v402
      %v427 = vpack.c.b16 %v405, %v403
      %v428 = vpack.c.b16 %v408, %v406
      %v429 = vpack.c.b16 %v409, %v407
      %v430 = vpack.c.b16 %v412, %v410
      %v431 = vpack.c.b16 %v413, %v411
      %v432 = vpack.c.b16 %v416, %v414
      %v433 = vpack.c.b16 %v417, %v415
      %v434 = vpack.c.b16 %v420, %v418
      %v435 = vpack.c.b16 %v421, %v419
      %v436 = vpack.c.b16 %v422, %v422
      %v437 = vpack.c.b16 %v423, %v423
      %v463 = vunpack.c.l.b16 %v361
      %v464 = vunpack.c.l.b16 %v362
      %v465 = vunpack.c.l.b16 %v363
      %v466 = vunpack.c.l.b16 %v364
      %v467 = vunpack.c.l.b16 %v365
      %v468 = vunpack.c.l.b16 %v366
      %v469 = vunpack.c.l.b16 %v367
      %v470 = vunpack.c.l.b16 %v368
      %v471 = vunpack.c.l.b16 %v369
      %v472 = vunpack.c.l.b16 %v370
      %v473 = vunpack.c.l.b16 %v371
      %v474 = vunpack.c.l.b16 %v372
      %v475 = vunpack.c.l.b16 %v373
      %v476 = vunpack.c.l.b16 %v374
      %v477 = vunpack.c.l.b16 %v375
      %v478 = vunpack.c.l.b16 %v376
      %v479 = vunpack.c.l.b16 %v377
      %v480 = vunpack.c.l.b16 %v378
      %v481 = vpack.c.b16 %v464, %v463
      %v482 = vpack.c.b16 %v466, %v465
      %v483 = vpack.c.b16 %v468, %v467
      %v484 = vpack.c.b16 %v470, %v469
      %v485 = vpack.c.b16 %v472, %v471
      %v486 = vpack.c.b16 %v474, %v473
      %v487 = vpack.c.b16 %v476, %v475
      %v488 = vpack.c.b16 %v478, %v477
      %v489 = vpack.c.b16 %v480, %v479
      %vm499 = vcmask 130048
      %v501 = vsel %vm499, %v425, 0
      %v504 = vsel %vm499, %v427, 0
      %v507 = vsel %vm499, %v429, 0
      %v510 = vsel %vm499, %v431, 0
      %v513 = vsel %vm499, %v433, 0
      %v516 = vsel %vm499, %v435, 0
      %v519 = vsel %vm499, %v437, 0
      %521 = vmatprep.subr.bf16.mxu0 0
      %522 = vmatpush1.bf16.msra.mxu0 %v488
      %523 = vmatprep.subr.bf16.mxu0 0
      %524 = vmatpush1.bf16.msra.mxu0 %v487
      %525 = vmatprep.subr.bf16.mxu0 0
      %526 = vmatpush1.bf16.msra.mxu0 %v486
      %527 = vmatprep.subr.bf16.mxu0 0
      %528 = vmatpush1.bf16.msra.mxu0 %v485
      %529 = vmatprep.subr.bf16.mxu0 0
      %530 = vmatpush1.bf16.msra.mxu0 %v484
      %531 = vmatprep.subr.bf16.mxu0 0
      %532 = vmatpush1.bf16.msra.mxu0 %v483
      %533 = vmatprep.subr.bf16.mxu0 0
      %534 = vmatpush1.bf16.msra.mxu0 %v482
      %535 = vmatprep.subr.bf16.mxu0 0
      %536 = vmatpush1.bf16.msra.mxu0 %v481
      %537 = vmatprep.subr.bf16.mxu0 0
      %538 = vmatpush2.bf16.msra.mxu0 0
      %539 = vmatprep.subr.bf16.mxu0 0
      %540 = vmatpush2.bf16.msra.mxu0 0
      %541 = vmatprep.subr.bf16.mxu0 0
      %542 = vmatpush2.bf16.msra.mxu0 0
      %543 = vmatprep.subr.bf16.mxu0 0
      %544 = vmatpush2.bf16.msra.mxu0 0
      %545 = vmatprep.subr.bf16.mxu0 0
      %546 = vmatpush2.bf16.msra.mxu0 0
      %547 = vmatprep.subr.bf16.mxu0 0
      %548 = vmatpush2.bf16.msra.mxu0 0
      %549 = vmatprep.subr.bf16.mxu0 0
      %550 = vmatpush2.bf16.msra.mxu0 0
      %551 = vmatprep.subr.bf16.mxu0 0
      %552 = vmatpush2.bf16.msra.mxu0 %v489
      %553 = vmatprep.mubr.bf16.mxu0 %v501
      %554 = vmatmul.mubr.bf16.gmra.mxu0 %v424
      %v555 = vpop.f32.mrf.mxu0
      %v556 = vadd.f32 %v383, %v555
      %v557 = vpop.f32.mrf.mxu0
      %v558 = vpop.f32.mrf.mxu0
      %v559 = vadd.f32 %v383, %v558
      %v560 = vpop.f32.mrf.mxu0
      %561 = vmatprep.mubr.bf16.mxu0 %v504
      %562 = vmatmul.mubr.bf16.gmra.mxu0 %v426
      %v563 = vpop.f32.mrf.mxu0
      %v564 = vadd.f32 %v383, %v563
      %v565 = vpop.f32.mrf.mxu0
      %v566 = vpop.f32.mrf.mxu0
      %v567 = vadd.f32 %v383, %v566
      %v568 = vpop.f32.mrf.mxu0
      %569 = vmatprep.mubr.bf16.mxu0 %v507
      %570 = vmatmul.mubr.bf16.gmra.mxu0 %v428
      %v571 = vpop.f32.mrf.mxu0
      %v572 = vadd.f32 %v383, %v571
      %v573 = vpop.f32.mrf.mxu0
      %v574 = vpop.f32.mrf.mxu0
      %v575 = vadd.f32 %v383, %v574
      %v576 = vpop.f32.mrf.mxu0
      %577 = vmatprep.mubr.bf16.mxu0 %v510
      %578 = vmatmul.mubr.bf16.gmra.mxu0 %v430
      %v579 = vpop.f32.mrf.mxu0
      %v580 = vadd.f32 %v383, %v579
      %v581 = vpop.f32.mrf.mxu0
      %v582 = vpop.f32.mrf.mxu0
      %v583 = vadd.f32 %v383, %v582
      %v584 = vpop.f32.mrf.mxu0
      %585 = vmatprep.mubr.bf16.mxu0 %v513
      %586 = vmatmul.mubr.bf16.gmra.mxu0 %v432
      %v587 = vpop.f32.mrf.mxu0
      %v588 = vadd.f32 %v383, %v587
      %v589 = vpop.f32.mrf.mxu0
      %v590 = vpop.f32.mrf.mxu0
      %v591 = vadd.f32 %v383, %v590
      %v592 = vpop.f32.mrf.mxu0
      %593 = vmatprep.mubr.bf16.mxu0 %v516
      %594 = vmatmul.mubr.bf16.gmra.mxu0 %v434
      %v595 = vpop.f32.mrf.mxu0
      %v596 = vadd.f32 %v383, %v595
      %v597 = vpop.f32.mrf.mxu0
      %v598 = vpop.f32.mrf.mxu0
      %v599 = vadd.f32 %v383, %v598
      %v600 = vpop.f32.mrf.mxu0
      %601 = vmatprep.mubr.bf16.mxu0 %v519
      %602 = vmatmul.mubr.bf16.gmra.mxu0 %v436
      %v603 = vpop.f32.mrf.mxu0
      %v604 = vadd.f32 %v383, %v603
      %v605 = vpop.f32.mrf.mxu0
      %v606 = vpop.f32.mrf.mxu0
      %v607 = vpop.f32.mrf.mxu0
      %608 = vdwg.mxu0
      %v609 = vmax.f32 %v556, 0.0
      %v610 = vmax.f32 %v559, 0.0
      %v611 = vmax.f32 %v564, 0.0
      %v612 = vmax.f32 %v567, 0.0
      %v613 = vmax.f32 %v572, 0.0
      %v614 = vmax.f32 %v575, 0.0
      %v615 = vmax.f32 %v580, 0.0
      %v616 = vmax.f32 %v583, 0.0
      %v617 = vmax.f32 %v588, 0.0
      %v618 = vmax.f32 %v591, 0.0
      %v619 = vmax.f32 %v596, 0.0
      %v620 = vmax.f32 %v599, 0.0
      %v621 = vmax.f32 %v604, 0.0
      %622 = vst [vmem:[#allocation2] sm:$0xff] %v609
      %623 = vst [vmem:[#allocation2 + $0x8] sm:$0xff] %v610
      %624 = vst [vmem:[#allocation2 + $0x10] sm:$0xff] %v611
      %625 = vst [vmem:[#allocation2 + $0x18] sm:$0xff] %v612
      %626 = vst [vmem:[#allocation2 + $0x20] sm:$0xff] %v613
      %627 = vst [vmem:[#allocation2 + $0x28] sm:$0xff] %v614
      %628 = vst [vmem:[#allocation2 + $0x30] sm:$0xff] %v615
      %629 = vst [vmem:[#allocation2 + $0x38] sm:$0xff] %v616
      %630 = vst [vmem:[#allocation2 + $0x40] sm:$0xff] %v617
      %631 = vst [vmem:[#allocation2 + $0x48] sm:$0xff] %v618
      %632 = vst [vmem:[#allocation2 + $0x50] sm:$0xff] %v619
      %633 = vst [vmem:[#allocation2 + $0x58] sm:$0xff] %v620
      %634 = vst [vmem:[#allocation2 + $0x60] sm:$0xf] %v621
      %v635 = vld [vmem:[%s4] sm:$0x1]
      %v636 = vld [vmem:[#allocation2] sm:$0xff]
      %v637 = vld [vmem:[#allocation2 + $0x8] sm:$0xff]
      %v638 = vld [vmem:[#allocation2 + $0x10] sm:$0xff]
      %v639 = vld [vmem:[#allocation2 + $0x18] sm:$0xff]
      %v640 = vld [vmem:[#allocation2 + $0x20] sm:$0xff]
      %v641 = vld [vmem:[#allocation2 + $0x28] sm:$0xff]
      %v642 = vld [vmem:[#allocation2 + $0x30] sm:$0xff]
      %v643 = vld [vmem:[#allocation2 + $0x38] sm:$0xff]
      %v644 = vld [vmem:[#allocation2 + $0x40] sm:$0xff]
      %v645 = vld [vmem:[#allocation2 + $0x48] sm:$0xff]
      %v646 = vpack.c.bf16 %v637, %v636
      %v647 = vpack.c.bf16 %v639, %v638
      %v648 = vpack.c.bf16 %v641, %v640
      %v649 = vpack.c.bf16 %v643, %v642
      %v650 = vpack.c.bf16 %v645, %v644
      %v651 = vld [vmem:[%s3] sm:$0xf]
      %v652 = vld [vmem:[%s3 + $0x4] sm:$0xf]
      %v653 = vld [vmem:[%s3 + $0x8] sm:$0xf]
      %v654 = vld [vmem:[%s3 + $0xc] sm:$0xf]
      %v655 = vld [vmem:[%s3 + $0x10] sm:$0xf]
      %v656 = vld [vmem:[%s3 + $0x14] sm:$0xf]
      %v657 = vld [vmem:[%s3 + $0x18] sm:$0xf]
      %v658 = vld [vmem:[%s3 + $0x1c] sm:$0xf]
      %v659 = vld [vmem:[%s3 + $0x20] sm:$0xf]
      %v660 = vld [vmem:[%s3 + $0x24] sm:$0xf]
      %v661 = vld [vmem:[%s3 + $0x28] sm:$0xf]
      %v662 = vld [vmem:[%s3 + $0x2c] sm:$0xf]
      %v663 = vld [vmem:[%s3 + $0x30] sm:$0xf]
      %v664 = vld [vmem:[%s3 + $0x34] sm:$0xf]
      %v665 = vld [vmem:[%s3 + $0x38] sm:$0xf]
      %v666 = vld [vmem:[%s3 + $0x3c] sm:$0xf]
      %v667 = vld [vmem:[#allocation2 + $0x1] sm:$0xff]
      %v668 = vld [vmem:[#allocation2 + $0x9] sm:$0xff]
      %v669 = vld [vmem:[#allocation2 + $0x11] sm:$0xff]
      %v670 = vld [vmem:[#allocation2 + $0x19] sm:$0xff]
      %v671 = vld [vmem:[#allocation2 + $0x21] sm:$0xff]
      %v672 = vld [vmem:[#allocation2 + $0x29] sm:$0xff]
      %v673 = vld [vmem:[#allocation2 + $0x31] sm:$0xff]
      %v674 = vld [vmem:[#allocation2 + $0x39] sm:$0xff]
      %v675 = vld [vmem:[#allocation2 + $0x41] sm:$0xff]
      %v676 = vld [vmem:[#allocation2 + $0x49] sm:$0xff]
      %v677 = vpack.c.bf16 %v668, %v667
      %v678 = vpack.c.bf16 %v670, %v669
      %v679 = vpack.c.bf16 %v672, %v671
      %v680 = vpack.c.bf16 %v674, %v673
      %v681 = vpack.c.bf16 %v676, %v675
      %s682 = scalar_lea.vmem %s3, 64
      %v683 = vld [vmem:[%s682] sm:$0xf]
      %v684 = vld [vmem:[%s682 + $0x4] sm:$0xf]
      %v685 = vld [vmem:[%s682 + $0x8] sm:$0xf]
      %v686 = vld [vmem:[%s682 + $0xc] sm:$0xf]
      %v687 = vld [vmem:[%s682 + $0x10] sm:$0xf]
      %v688 = vld [vmem:[%s682 + $0x14] sm:$0xf]
      %v689 = vld [vmem:[%s682 + $0x18] sm:$0xf]
      %v690 = vld [vmem:[%s682 + $0x1c] sm:$0xf]
      %v691 = vld [vmem:[%s682 + $0x20] sm:$0xf]
      %v692 = vld [vmem:[%s682 + $0x24] sm:$0xf]
      %v693 = vld [vmem:[%s682 + $0x28] sm:$0xf]
      %v694 = vld [vmem:[%s682 + $0x2c] sm:$0xf]
      %v695 = vld [vmem:[%s682 + $0x30] sm:$0xf]
      %v696 = vld [vmem:[%s682 + $0x34] sm:$0xf]
      %v697 = vld [vmem:[%s682 + $0x38] sm:$0xf]
      %v698 = vld [vmem:[%s682 + $0x3c] sm:$0xf]
      %v715 = vunpack.c.l.b16 %v683
      %v716 = vunpack.c.l.b16 %v684
      %v717 = vunpack.c.l.b16 %v685
      %v718 = vunpack.c.l.b16 %v686
      %v719 = vunpack.c.l.b16 %v687
      %v720 = vunpack.c.l.b16 %v688
      %v721 = vunpack.c.l.b16 %v689
      %v722 = vunpack.c.l.b16 %v690
      %v723 = vunpack.c.l.b16 %v691
      %v724 = vunpack.c.l.b16 %v692
      %v725 = vunpack.c.l.b16 %v693
      %v726 = vunpack.c.l.b16 %v694
      %v727 = vunpack.c.l.b16 %v695
      %v728 = vunpack.c.l.b16 %v696
      %v729 = vunpack.c.l.b16 %v697
      %v730 = vunpack.c.l.b16 %v698
      %v731 = vpack.c.b16 %v716, %v715
      %v732 = vpack.c.b16 %v718, %v717
      %v733 = vpack.c.b16 %v720, %v719
      %v734 = vpack.c.b16 %v722, %v721
      %v735 = vpack.c.b16 %v724, %v723
      %v736 = vpack.c.b16 %v726, %v725
      %v737 = vpack.c.b16 %v728, %v727
      %v738 = vpack.c.b16 %v730, %v729
      %747 = vmatprep.subr.bf16.mxu0 0
      %748 = vmatpush1.bf16.msra.mxu0 %v738
      %749 = vmatprep.subr.bf16.mxu0 0
      %750 = vmatpush1.bf16.msra.mxu0 %v737
      %751 = vmatprep.subr.bf16.mxu0 0
      %752 = vmatpush1.bf16.msra.mxu0 %v736
      %753 = vmatprep.subr.bf16.mxu0 0
      %754 = vmatpush1.bf16.msra.mxu0 %v735
      %755 = vmatprep.subr.bf16.mxu0 0
      %756 = vmatpush1.bf16.msra.mxu0 %v734
      %757 = vmatprep.subr.bf16.mxu0 0
      %758 = vmatpush1.bf16.msra.mxu0 %v733
      %759 = vmatprep.subr.bf16.mxu0 0
      %760 = vmatpush1.bf16.msra.mxu0 %v732
      %761 = vmatprep.subr.bf16.mxu0 0
      %762 = vmatpush1.bf16.msra.mxu0 %v731
      %763 = vmatprep.subr.bf16.mxu0 0
      %764 = vmatpush2.bf16.msra.mxu0 0
      %765 = vmatprep.subr.bf16.mxu0 0
      %766 = vmatpush2.bf16.msra.mxu0 0
      %767 = vmatprep.subr.bf16.mxu0 0
      %768 = vmatpush2.bf16.msra.mxu0 0
      %769 = vmatprep.subr.bf16.mxu0 0
      %770 = vmatpush2.bf16.msra.mxu0 0
      %771 = vmatprep.subr.bf16.mxu0 0
      %772 = vmatpush2.bf16.msra.mxu0 0
      %773 = vmatprep.subr.bf16.mxu0 0
      %774 = vmatpush2.bf16.msra.mxu0 0
      %775 = vmatprep.subr.bf16.mxu0 0
      %776 = vmatpush2.bf16.msra.mxu0 0
      %777 = vmatprep.subr.bf16.mxu0 0
      %778 = vmatpush2.bf16.msra.mxu0 0
      %779 = vmatprep.mubr.bf16.mxu0 0
      %780 = vmatmul.mubr.bf16.gmra.mxu0 %v677
      %v781 = vpop.f32.mrf.mxu0
      %v782 = vadd.f32 0.0, %v781
      %v783 = vpop.f32.mrf.mxu0
      %v784 = vpop.f32.mrf.mxu0
      %v785 = vadd.f32 0.0, %v784
      %v786 = vpop.f32.mrf.mxu0
      %787 = vmatprep.mubr.bf16.mxu0 0
      %788 = vmatmul.mubr.bf16.gmra.mxu0 %v678
      %v789 = vpop.f32.mrf.mxu0
      %v790 = vadd.f32 0.0, %v789
      %v791 = vpop.f32.mrf.mxu0
      %v792 = vpop.f32.mrf.mxu0
      %v793 = vadd.f32 0.0, %v792
      %v794 = vpop.f32.mrf.mxu0
      %795 = vmatprep.mubr.bf16.mxu0 0
      %796 = vmatmul.mubr.bf16.gmra.mxu0 %v679
      %v797 = vpop.f32.mrf.mxu0
      %v798 = vadd.f32 0.0, %v797
      %v799 = vpop.f32.mrf.mxu0
      %v800 = vpop.f32.mrf.mxu0
      %v801 = vadd.f32 0.0, %v800
      %v802 = vpop.f32.mrf.mxu0
      %803 = vmatprep.mubr.bf16.mxu0 0
      %804 = vmatmul.mubr.bf16.gmra.mxu0 %v680
      %v805 = vpop.f32.mrf.mxu0
      %v806 = vadd.f32 0.0, %v805
      %v807 = vpop.f32.mrf.mxu0
      %v808 = vpop.f32.mrf.mxu0
      %v809 = vadd.f32 0.0, %v808
      %v810 = vpop.f32.mrf.mxu0
      %811 = vmatprep.mubr.bf16.mxu0 0
      %812 = vmatmul.mubr.bf16.gmra.mxu0 %v681
      %v813 = vpop.f32.mrf.mxu0
      %v814 = vadd.f32 0.0, %v813
      %v815 = vpop.f32.mrf.mxu0
      %v816 = vpop.f32.mrf.mxu0
      %v817 = vadd.f32 0.0, %v816
      %v818 = vpop.f32.mrf.mxu0
      %819 = vdwg.mxu0
      %v836 = vunpack.c.l.b16 %v651
      %v837 = vunpack.c.l.b16 %v652
      %v838 = vunpack.c.l.b16 %v653
      %v839 = vunpack.c.l.b16 %v654
      %v840 = vunpack.c.l.b16 %v655
      %v841 = vunpack.c.l.b16 %v656
      %v842 = vunpack.c.l.b16 %v657
      %v843 = vunpack.c.l.b16 %v658
      %v844 = vunpack.c.l.b16 %v659
      %v845 = vunpack.c.l.b16 %v660
      %v846 = vunpack.c.l.b16 %v661
      %v847 = vunpack.c.l.b16 %v662
      %v848 = vunpack.c.l.b16 %v663
      %v849 = vunpack.c.l.b16 %v664
      %v850 = vunpack.c.l.b16 %v665
      %v851 = vunpack.c.l.b16 %v666
      %v852 = vpack.c.b16 %v837, %v836
      %v853 = vpack.c.b16 %v839, %v838
      %v854 = vpack.c.b16 %v841, %v840
      %v855 = vpack.c.b16 %v843, %v842
      %v856 = vpack.c.b16 %v845, %v844
      %v857 = vpack.c.b16 %v847, %v846
      %v858 = vpack.c.b16 %v849, %v848
      %v859 = vpack.c.b16 %v851, %v850
      %868 = vmatprep.subr.bf16.mxu0 0
      %869 = vmatpush1.bf16.msra.mxu0 %v859
      %870 = vmatprep.subr.bf16.mxu0 0
      %871 = vmatpush1.bf16.msra.mxu0 %v858
      %872 = vmatprep.subr.bf16.mxu0 0
      %873 = vmatpush1.bf16.msra.mxu0 %v857
      %874 = vmatprep.subr.bf16.mxu0 0
      %875 = vmatpush1.bf16.msra.mxu0 %v856
      %876 = vmatprep.subr.bf16.mxu0 0
      %877 = vmatpush1.bf16.msra.mxu0 %v855
      %878 = vmatprep.subr.bf16.mxu0 0
      %879 = vmatpush1.bf16.msra.mxu0 %v854
      %880 = vmatprep.subr.bf16.mxu0 0
      %881 = vmatpush1.bf16.msra.mxu0 %v853
      %882 = vmatprep.subr.bf16.mxu0 0
      %883 = vmatpush1.bf16.msra.mxu0 %v852
      %884 = vmatprep.subr.bf16.mxu0 0
      %885 = vmatpush2.bf16.msra.mxu0 0
      %886 = vmatprep.subr.bf16.mxu0 0
      %887 = vmatpush2.bf16.msra.mxu0 0
      %888 = vmatprep.subr.bf16.mxu0 0
      %889 = vmatpush2.bf16.msra.mxu0 0
      %890 = vmatprep.subr.bf16.mxu0 0
      %891 = vmatpush2.bf16.msra.mxu0 0
      %892 = vmatprep.subr.bf16.mxu0 0
      %893 = vmatpush2.bf16.msra.mxu0 0
      %894 = vmatprep.subr.bf16.mxu0 0
      %895 = vmatpush2.bf16.msra.mxu0 0
      %896 = vmatprep.subr.bf16.mxu0 0
      %897 = vmatpush2.bf16.msra.mxu0 0
      %898 = vmatprep.subr.bf16.mxu0 0
      %899 = vmatpush2.bf16.msra.mxu0 0
      %900 = vmatprep.mubr.bf16.mxu0 0
      %901 = vmatmul.mubr.bf16.gmra.mxu0 %v646
      %v902 = vpop.f32.mrf.mxu0
      %v903 = vadd.f32 %v782, %v902
      %v904 = vpop.f32.mrf.mxu0
      %v905 = vpop.f32.mrf.mxu0
      %v906 = vadd.f32 %v785, %v905
      %v907 = vpop.f32.mrf.mxu0
      %908 = vmatprep.mubr.bf16.mxu0 0
      %909 = vmatmul.mubr.bf16.gmra.mxu0 %v647
      %v910 = vpop.f32.mrf.mxu0
      %v911 = vadd.f32 %v790, %v910
      %v912 = vpop.f32.mrf.mxu0
      %v913 = vpop.f32.mrf.mxu0
      %v914 = vadd.f32 %v793, %v913
      %v915 = vpop.f32.mrf.mxu0
      %916 = vmatprep.mubr.bf16.mxu0 0
      %917 = vmatmul.mubr.bf16.gmra.mxu0 %v648
      %v918 = vpop.f32.mrf.mxu0
      %v919 = vadd.f32 %v798, %v918
      %v920 = vpop.f32.mrf.mxu0
      %v921 = vpop.f32.mrf.mxu0
      %v922 = vadd.f32 %v801, %v921
      %v923 = vpop.f32.mrf.mxu0
      %924 = vmatprep.mubr.bf16.mxu0 0
      %925 = vmatmul.mubr.bf16.gmra.mxu0 %v649
      %v926 = vpop.f32.mrf.mxu0
      %v927 = vadd.f32 %v806, %v926
      %v928 = vpop.f32.mrf.mxu0
      %v929 = vpop.f32.mrf.mxu0
      %v930 = vadd.f32 %v809, %v929
      %v931 = vpop.f32.mrf.mxu0
      %932 = vmatprep.mubr.bf16.mxu0 0
      %933 = vmatmul.mubr.bf16.gmra.mxu0 %v650
      %v934 = vpop.f32.mrf.mxu0
      %v935 = vadd.f32 %v814, %v934
      %v936 = vpop.f32.mrf.mxu0
      %v937 = vpop.f32.mrf.mxu0
      %v938 = vadd.f32 %v817, %v937
      %v939 = vpop.f32.mrf.mxu0
      %940 = vdwg.mxu0
      %v941 = vld [vmem:[#allocation2 + $0x2] sm:$0xff]
      %v942 = vld [vmem:[#allocation2 + $0xa] sm:$0xff]
      %v943 = vld [vmem:[#allocation2 + $0x12] sm:$0xff]
      %v944 = vld [vmem:[#allocation2 + $0x1a] sm:$0xff]
      %v945 = vld [vmem:[#allocation2 + $0x22] sm:$0xff]
      %v946 = vld [vmem:[#allocation2 + $0x2a] sm:$0xff]
      %v947 = vld [vmem:[#allocation2 + $0x32] sm:$0xff]
      %v948 = vld [vmem:[#allocation2 + $0x3a] sm:$0xff]
      %v949 = vld [vmem:[#allocation2 + $0x42] sm:$0xff]
      %v950 = vld [vmem:[#allocation2 + $0x4a] sm:$0xff]
      %v951 = vpack.c.bf16 %v942, %v941
      %v952 = vpack.c.bf16 %v944, %v943
      %v953 = vpack.c.bf16 %v946, %v945
      %v954 = vpack.c.bf16 %v948, %v947
      %v955 = vpack.c.bf16 %v950, %v949
      %s956 = scalar_lea.vmem %s3, 128
      %v957 = vld [vmem:[%s956] sm:$0xf]
      %v958 = vld [vmem:[%s956 + $0x4] sm:$0xf]
      %v959 = vld [vmem:[%s956 + $0x8] sm:$0xf]
      %v960 = vld [vmem:[%s956 + $0xc] sm:$0xf]
      %v961 = vld [vmem:[%s956 + $0x10] sm:$0xf]
      %v962 = vld [vmem:[%s956 + $0x14] sm:$0xf]
      %v963 = vld [vmem:[%s956 + $0x18] sm:$0xf]
      %v964 = vld [vmem:[%s956 + $0x1c] sm:$0xf]
      %v965 = vld [vmem:[%s956 + $0x20] sm:$0xf]
      %v966 = vld [vmem:[%s956 + $0x24] sm:$0xf]
      %v967 = vld [vmem:[%s956 + $0x28] sm:$0xf]
      %v968 = vld [vmem:[%s956 + $0x2c] sm:$0xf]
      %v969 = vld [vmem:[%s956 + $0x30] sm:$0xf]
      %v970 = vld [vmem:[%s956 + $0x34] sm:$0xf]
      %v971 = vld [vmem:[%s956 + $0x38] sm:$0xf]
      %v972 = vld [vmem:[%s956 + $0x3c] sm:$0xf]
      %v989 = vunpack.c.l.b16 %v957
      %v990 = vunpack.c.l.b16 %v958
      %v991 = vunpack.c.l.b16 %v959
      %v992 = vunpack.c.l.b16 %v960
      %v993 = vunpack.c.l.b16 %v961
      %v994 = vunpack.c.l.b16 %v962
      %v995 = vunpack.c.l.b16 %v963
      %v996 = vunpack.c.l.b16 %v964
      %v997 = vunpack.c.l.b16 %v965
      %v998 = vunpack.c.l.b16 %v966
      %v999 = vunpack.c.l.b16 %v967
      %v1000 = vunpack.c.l.b16 %v968
      %v1001 = vunpack.c.l.b16 %v969
      %v1002 = vunpack.c.l.b16 %v970
      %v1003 = vunpack.c.l.b16 %v971
      %v1004 = vunpack.c.l.b16 %v972
      %v1005 = vpack.c.b16 %v990, %v989
      %v1006 = vpack.c.b16 %v992, %v991
      %v1007 = vpack.c.b16 %v994, %v993
      %v1008 = vpack.c.b16 %v996, %v995
      %v1009 = vpack.c.b16 %v998, %v997
      %v1010 = vpack.c.b16 %v1000, %v999
      %v1011 = vpack.c.b16 %v1002, %v1001
      %v1012 = vpack.c.b16 %v1004, %v1003
      %1021 = vmatprep.subr.bf16.mxu0 0
      %1022 = vmatpush1.bf16.msra.mxu0 %v1012
      %1023 = vmatprep.subr.bf16.mxu0 0
      %1024 = vmatpush1.bf16.msra.mxu0 %v1011
      %1025 = vmatprep.subr.bf16.mxu0 0
      %1026 = vmatpush1.bf16.msra.mxu0 %v1010
      %1027 = vmatprep.subr.bf16.mxu0 0
      %1028 = vmatpush1.bf16.msra.mxu0 %v1009
      %1029 = vmatprep.subr.bf16.mxu0 0
      %1030 = vmatpush1.bf16.msra.mxu0 %v1008
      %1031 = vmatprep.subr.bf16.mxu0 0
      %1032 = vmatpush1.bf16.msra.mxu0 %v1007
      %1033 = vmatprep.subr.bf16.mxu0 0
      %1034 = vmatpush1.bf16.msra.mxu0 %v1006
      %1035 = vmatprep.subr.bf16.mxu0 0
      %1036 = vmatpush1.bf16.msra.mxu0 %v1005
      %1037 = vmatprep.subr.bf16.mxu0 0
      %1038 = vmatpush2.bf16.msra.mxu0 0
      %1039 = vmatprep.subr.bf16.mxu0 0
      %1040 = vmatpush2.bf16.msra.mxu0 0
      %1041 = vmatprep.subr.bf16.mxu0 0
      %1042 = vmatpush2.bf16.msra.mxu0 0
      %1043 = vmatprep.subr.bf16.mxu0 0
      %1044 = vmatpush2.bf16.msra.mxu0 0
      %1045 = vmatprep.subr.bf16.mxu0 0
      %1046 = vmatpush2.bf16.msra.mxu0 0
      %1047 = vmatprep.subr.bf16.mxu0 0
      %1048 = vmatpush2.bf16.msra.mxu0 0
      %1049 = vmatprep.subr.bf16.mxu0 0
      %1050 = vmatpush2.bf16.msra.mxu0 0
      %1051 = vmatprep.subr.bf16.mxu0 0
      %1052 = vmatpush2.bf16.msra.mxu0 0
      %1053 = vmatprep.mubr.bf16.mxu0 0
      %1054 = vmatmul.mubr.bf16.gmra.mxu0 %v951
      %v1055 = vpop.f32.mrf.mxu0
      %v1056 = vadd.f32 0.0, %v1055
      %v1057 = vpop.f32.mrf.mxu0
      %v1058 = vpop.f32.mrf.mxu0
      %v1059 = vadd.f32 0.0, %v1058
      %v1060 = vpop.f32.mrf.mxu0
      %1061 = vmatprep.mubr.bf16.mxu0 0
      %1062 = vmatmul.mubr.bf16.gmra.mxu0 %v952
      %v1063 = vpop.f32.mrf.mxu0
      %v1064 = vadd.f32 0.0, %v1063
      %v1065 = vpop.f32.mrf.mxu0
      %v1066 = vpop.f32.mrf.mxu0
      %v1067 = vadd.f32 0.0, %v1066
      %v1068 = vpop.f32.mrf.mxu0
      %1069 = vmatprep.mubr.bf16.mxu0 0
      %1070 = vmatmul.mubr.bf16.gmra.mxu0 %v953
      %v1071 = vpop.f32.mrf.mxu0
      %v1072 = vadd.f32 0.0, %v1071
      %v1073 = vpop.f32.mrf.mxu0
      %v1074 = vpop.f32.mrf.mxu0
      %v1075 = vadd.f32 0.0, %v1074
      %v1076 = vpop.f32.mrf.mxu0
      %1077 = vmatprep.mubr.bf16.mxu0 0
      %1078 = vmatmul.mubr.bf16.gmra.mxu0 %v954
      %v1079 = vpop.f32.mrf.mxu0
      %v1080 = vadd.f32 0.0, %v1079
      %v1081 = vpop.f32.mrf.mxu0
      %v1082 = vpop.f32.mrf.mxu0
      %v1083 = vadd.f32 0.0, %v1082
      %v1084 = vpop.f32.mrf.mxu0
      %1085 = vmatprep.mubr.bf16.mxu0 0
      %1086 = vmatmul.mubr.bf16.gmra.mxu0 %v955
      %v1087 = vpop.f32.mrf.mxu0
      %v1088 = vadd.f32 0.0, %v1087
      %v1089 = vpop.f32.mrf.mxu0
      %v1090 = vpop.f32.mrf.mxu0
      %v1091 = vadd.f32 0.0, %v1090
      %v1092 = vpop.f32.mrf.mxu0
      %1093 = vdwg.mxu0
      %v1094 = vadd.f32 %v903, %v1056
      %v1095 = vadd.f32 %v906, %v1059
      %v1096 = vadd.f32 %v911, %v1064
      %v1097 = vadd.f32 %v914, %v1067
      %v1098 = vadd.f32 %v919, %v1072
      %v1099 = vadd.f32 %v922, %v1075
      %v1100 = vadd.f32 %v927, %v1080
      %v1101 = vadd.f32 %v930, %v1083
      %v1102 = vadd.f32 %v935, %v1088
      %v1103 = vadd.f32 %v938, %v1091
      %v1104 = vld [vmem:[#allocation2 + $0xa] sm:$0xff]
      %v1105 = vld [vmem:[#allocation2 + $0x12] sm:$0xff]
      %v1106 = vld [vmem:[#allocation2 + $0x1a] sm:$0xff]
      %v1107 = vld [vmem:[#allocation2 + $0x22] sm:$0xff]
      %v1108 = vld [vmem:[#allocation2 + $0x2a] sm:$0xff]
      %v1109 = vld [vmem:[#allocation2 + $0x32] sm:$0xff]
      %v1110 = vld [vmem:[#allocation2 + $0x3a] sm:$0xff]
      %v1111 = vld [vmem:[#allocation2 + $0x42] sm:$0xff]
      %v1112 = vld [vmem:[#allocation2 + $0x4a] sm:$0xff]
      %v1113 = vld [vmem:[#allocation2 + $0x52] sm:$0xff]
      %v1114 = vpack.c.bf16 %v1105, %v1104
      %v1115 = vpack.c.bf16 %v1107, %v1106
      %v1116 = vpack.c.bf16 %v1109, %v1108
      %v1117 = vpack.c.bf16 %v1111, %v1110
      %v1118 = vpack.c.bf16 %v1113, %v1112
      %s1119 = scalar_lea.vmem %s3, 192
      %v1120 = vld [vmem:[%s1119] sm:$0xf]
      %v1121 = vld [vmem:[%s1119 + $0x4] sm:$0xf]
      %v1122 = vld [vmem:[%s1119 + $0x8] sm:$0xf]
      %v1123 = vld [vmem:[%s1119 + $0xc] sm:$0xf]
      %v1124 = vld [vmem:[%s1119 + $0x10] sm:$0xf]
      %v1125 = vld [vmem:[%s1119 + $0x14] sm:$0xf]
      %v1126 = vld [vmem:[%s1119 + $0x18] sm:$0xf]
      %v1127 = vld [vmem:[%s1119 + $0x1c] sm:$0xf]
      %v1128 = vld [vmem:[%s1119 + $0x20] sm:$0xf]
      %v1129 = vld [vmem:[%s1119 + $0x24] sm:$0xf]
      %v1130 = vld [vmem:[%s1119 + $0x28] sm:$0xf]
      %v1131 = vld [vmem:[%s1119 + $0x2c] sm:$0xf]
      %v1132 = vld [vmem:[%s1119 + $0x30] sm:$0xf]
      %v1133 = vld [vmem:[%s1119 + $0x34] sm:$0xf]
      %v1134 = vld [vmem:[%s1119 + $0x38] sm:$0xf]
      %v1135 = vld [vmem:[%s1119 + $0x3c] sm:$0xf]
      %v1152 = vunpack.c.l.b16 %v1120
      %v1153 = vunpack.c.l.b16 %v1121
      %v1154 = vunpack.c.l.b16 %v1122
      %v1155 = vunpack.c.l.b16 %v1123
      %v1156 = vunpack.c.l.b16 %v1124
      %v1157 = vunpack.c.l.b16 %v1125
      %v1158 = vunpack.c.l.b16 %v1126
      %v1159 = vunpack.c.l.b16 %v1127
      %v1160 = vunpack.c.l.b16 %v1128
      %v1161 = vunpack.c.l.b16 %v1129
      %v1162 = vunpack.c.l.b16 %v1130
      %v1163 = vunpack.c.l.b16 %v1131
      %v1164 = vunpack.c.l.b16 %v1132
      %v1165 = vunpack.c.l.b16 %v1133
      %v1166 = vunpack.c.l.b16 %v1134
      %v1167 = vunpack.c.l.b16 %v1135
      %v1168 = vpack.c.b16 %v1153, %v1152
      %v1169 = vpack.c.b16 %v1155, %v1154
      %v1170 = vpack.c.b16 %v1157, %v1156
      %v1171 = vpack.c.b16 %v1159, %v1158
      %v1172 = vpack.c.b16 %v1161, %v1160
      %v1173 = vpack.c.b16 %v1163, %v1162
      %v1174 = vpack.c.b16 %v1165, %v1164
      %v1175 = vpack.c.b16 %v1167, %v1166
      %1184 = vmatprep.subr.bf16.mxu0 0
      %1185 = vmatpush1.bf16.msra.mxu0 %v1175
      %1186 = vmatprep.subr.bf16.mxu0 0
      %1187 = vmatpush1.bf16.msra.mxu0 %v1174
      %1188 = vmatprep.subr.bf16.mxu0 0
      %1189 = vmatpush1.bf16.msra.mxu0 %v1173
      %1190 = vmatprep.subr.bf16.mxu0 0
      %1191 = vmatpush1.bf16.msra.mxu0 %v1172
      %1192 = vmatprep.subr.bf16.mxu0 0
      %1193 = vmatpush1.bf16.msra.mxu0 %v1171
      %1194 = vmatprep.subr.bf16.mxu0 0
      %1195 = vmatpush1.bf16.msra.mxu0 %v1170
      %1196 = vmatprep.subr.bf16.mxu0 0
      %1197 = vmatpush1.bf16.msra.mxu0 %v1169
      %1198 = vmatprep.subr.bf16.mxu0 0
      %1199 = vmatpush1.bf16.msra.mxu0 %v1168
      %1200 = vmatprep.subr.bf16.mxu0 0
      %1201 = vmatpush2.bf16.msra.mxu0 0
      %1202 = vmatprep.subr.bf16.mxu0 0
      %1203 = vmatpush2.bf16.msra.mxu0 0
      %1204 = vmatprep.subr.bf16.mxu0 0
      %1205 = vmatpush2.bf16.msra.mxu0 0
      %1206 = vmatprep.subr.bf16.mxu0 0
      %1207 = vmatpush2.bf16.msra.mxu0 0
      %1208 = vmatprep.subr.bf16.mxu0 0
      %1209 = vmatpush2.bf16.msra.mxu0 0
      %1210 = vmatprep.subr.bf16.mxu0 0
      %1211 = vmatpush2.bf16.msra.mxu0 0
      %1212 = vmatprep.subr.bf16.mxu0 0
      %1213 = vmatpush2.bf16.msra.mxu0 0
      %1214 = vmatprep.subr.bf16.mxu0 0
      %1215 = vmatpush2.bf16.msra.mxu0 0
      %1216 = vmatprep.mubr.bf16.mxu0 0
      %1217 = vmatmul.mubr.bf16.gmra.mxu0 %v1114
      %v1218 = vpop.f32.mrf.mxu0
      %v1219 = vadd.f32 0.0, %v1218
      %v1220 = vpop.f32.mrf.mxu0
      %v1221 = vpop.f32.mrf.mxu0
      %v1222 = vadd.f32 0.0, %v1221
      %v1223 = vpop.f32.mrf.mxu0
      %1224 = vmatprep.mubr.bf16.mxu0 0
      %1225 = vmatmul.mubr.bf16.gmra.mxu0 %v1115
      %v1226 = vpop.f32.mrf.mxu0
      %v1227 = vadd.f32 0.0, %v1226
      %v1228 = vpop.f32.mrf.mxu0
      %v1229 = vpop.f32.mrf.mxu0
      %v1230 = vadd.f32 0.0, %v1229
      %v1231 = vpop.f32.mrf.mxu0
      %1232 = vmatprep.mubr.bf16.mxu0 0
      %1233 = vmatmul.mubr.bf16.gmra.mxu0 %v1116
      %v1234 = vpop.f32.mrf.mxu0
      %v1235 = vadd.f32 0.0, %v1234
      %v1236 = vpop.f32.mrf.mxu0
      %v1237 = vpop.f32.mrf.mxu0
      %v1238 = vadd.f32 0.0, %v1237
      %v1239 = vpop.f32.mrf.mxu0
      %1240 = vmatprep.mubr.bf16.mxu0 0
      %1241 = vmatmul.mubr.bf16.gmra.mxu0 %v1117
      %v1242 = vpop.f32.mrf.mxu0
      %v1243 = vadd.f32 0.0, %v1242
      %v1244 = vpop.f32.mrf.mxu0
      %v1245 = vpop.f32.mrf.mxu0
      %v1246 = vadd.f32 0.0, %v1245
      %v1247 = vpop.f32.mrf.mxu0
      %1248 = vmatprep.mubr.bf16.mxu0 0
      %1249 = vmatmul.mubr.bf16.gmra.mxu0 %v1118
      %v1250 = vpop.f32.mrf.mxu0
      %v1251 = vadd.f32 0.0, %v1250
      %v1252 = vpop.f32.mrf.mxu0
      %v1253 = vpop.f32.mrf.mxu0
      %v1254 = vadd.f32 0.0, %v1253
      %v1255 = vpop.f32.mrf.mxu0
      %1256 = vdwg.mxu0
      %v1257 = vadd.f32 %v1094, %v1219
      %v1258 = vadd.f32 %v1095, %v1222
      %v1259 = vadd.f32 %v1096, %v1227
      %v1260 = vadd.f32 %v1097, %v1230
      %v1261 = vadd.f32 %v1098, %v1235
      %v1262 = vadd.f32 %v1099, %v1238
      %v1263 = vadd.f32 %v1100, %v1243
      %v1264 = vadd.f32 %v1101, %v1246
      %v1265 = vadd.f32 %v1102, %v1251
      %v1266 = vadd.f32 %v1103, %v1254
      %v1267 = vld [vmem:[#allocation2 + $0xb] sm:$0xff]
      %v1268 = vld [vmem:[#allocation2 + $0x13] sm:$0xff]
      %v1269 = vld [vmem:[#allocation2 + $0x1b] sm:$0xff]
      %v1270 = vld [vmem:[#allocation2 + $0x23] sm:$0xff]
      %v1271 = vld [vmem:[#allocation2 + $0x2b] sm:$0xff]
      %v1272 = vld [vmem:[#allocation2 + $0x33] sm:$0xff]
      %v1273 = vld [vmem:[#allocation2 + $0x3b] sm:$0xff]
      %v1274 = vld [vmem:[#allocation2 + $0x43] sm:$0xff]
      %v1275 = vld [vmem:[#allocation2 + $0x4b] sm:$0xff]
      %v1276 = vld [vmem:[#allocation2 + $0x53] sm:$0xff]
      %v1277 = vpack.c.bf16 %v1268, %v1267
      %v1278 = vpack.c.bf16 %v1270, %v1269
      %v1279 = vpack.c.bf16 %v1272, %v1271
      %v1280 = vpack.c.bf16 %v1274, %v1273
      %v1281 = vpack.c.bf16 %v1276, %v1275
      %s1282 = scalar_lea.vmem %s3, 256
      %v1283 = vld [vmem:[%s1282] sm:$0xf]
      %v1284 = vld [vmem:[%s1282 + $0x4] sm:$0xf]
      %v1285 = vld [vmem:[%s1282 + $0x8] sm:$0xf]
      %v1286 = vld [vmem:[%s1282 + $0xc] sm:$0xf]
      %v1287 = vld [vmem:[%s1282 + $0x10] sm:$0xf]
      %v1288 = vld [vmem:[%s1282 + $0x14] sm:$0xf]
      %v1289 = vld [vmem:[%s1282 + $0x18] sm:$0xf]
      %v1290 = vld [vmem:[%s1282 + $0x1c] sm:$0xf]
      %v1291 = vld [vmem:[%s1282 + $0x20] sm:$0xf]
      %v1292 = vld [vmem:[%s1282 + $0x24] sm:$0xf]
      %v1293 = vld [vmem:[%s1282 + $0x28] sm:$0xf]
      %v1294 = vld [vmem:[%s1282 + $0x2c] sm:$0xf]
      %v1295 = vld [vmem:[%s1282 + $0x30] sm:$0xf]
      %v1296 = vld [vmem:[%s1282 + $0x34] sm:$0xf]
      %v1297 = vld [vmem:[%s1282 + $0x38] sm:$0xf]
      %v1298 = vld [vmem:[%s1282 + $0x3c] sm:$0xf]
      %v1315 = vunpack.c.l.b16 %v1283
      %v1316 = vunpack.c.l.b16 %v1284
      %v1317 = vunpack.c.l.b16 %v1285
      %v1318 = vunpack.c.l.b16 %v1286
      %v1319 = vunpack.c.l.b16 %v1287
      %v1320 = vunpack.c.l.b16 %v1288
      %v1321 = vunpack.c.l.b16 %v1289
      %v1322 = vunpack.c.l.b16 %v1290
      %v1323 = vunpack.c.l.b16 %v1291
      %v1324 = vunpack.c.l.b16 %v1292
      %v1325 = vunpack.c.l.b16 %v1293
      %v1326 = vunpack.c.l.b16 %v1294
      %v1327 = vunpack.c.l.b16 %v1295
      %v1328 = vunpack.c.l.b16 %v1296
      %v1329 = vunpack.c.l.b16 %v1297
      %v1330 = vunpack.c.l.b16 %v1298
      %v1331 = vpack.c.b16 %v1316, %v1315
      %v1332 = vpack.c.b16 %v1318, %v1317
      %v1333 = vpack.c.b16 %v1320, %v1319
      %v1334 = vpack.c.b16 %v1322, %v1321
      %v1335 = vpack.c.b16 %v1324, %v1323
      %v1336 = vpack.c.b16 %v1326, %v1325
      %v1337 = vpack.c.b16 %v1328, %v1327
      %v1338 = vpack.c.b16 %v1330, %v1329
      %1347 = vmatprep.subr.bf16.mxu0 0
      %1348 = vmatpush1.bf16.msra.mxu0 %v1338
      %1349 = vmatprep.subr.bf16.mxu0 0
      %1350 = vmatpush1.bf16.msra.mxu0 %v1337
      %1351 = vmatprep.subr.bf16.mxu0 0
      %1352 = vmatpush1.bf16.msra.mxu0 %v1336
      %1353 = vmatprep.subr.bf16.mxu0 0
      %1354 = vmatpush1.bf16.msra.mxu0 %v1335
      %1355 = vmatprep.subr.bf16.mxu0 0
      %1356 = vmatpush1.bf16.msra.mxu0 %v1334
      %1357 = vmatprep.subr.bf16.mxu0 0
      %1358 = vmatpush1.bf16.msra.mxu0 %v1333
      %1359 = vmatprep.subr.bf16.mxu0 0
      %1360 = vmatpush1.bf16.msra.mxu0 %v1332
      %1361 = vmatprep.subr.bf16.mxu0 0
      %1362 = vmatpush1.bf16.msra.mxu0 %v1331
      %1363 = vmatprep.subr.bf16.mxu0 0
      %1364 = vmatpush2.bf16.msra.mxu0 0
      %1365 = vmatprep.subr.bf16.mxu0 0
      %1366 = vmatpush2.bf16.msra.mxu0 0
      %1367 = vmatprep.subr.bf16.mxu0 0
      %1368 = vmatpush2.bf16.msra.mxu0 0
      %1369 = vmatprep.subr.bf16.mxu0 0
      %1370 = vmatpush2.bf16.msra.mxu0 0
      %1371 = vmatprep.subr.bf16.mxu0 0
      %1372 = vmatpush2.bf16.msra.mxu0 0
      %1373 = vmatprep.subr.bf16.mxu0 0
      %1374 = vmatpush2.bf16.msra.mxu0 0
      %1375 = vmatprep.subr.bf16.mxu0 0
      %1376 = vmatpush2.bf16.msra.mxu0 0
      %1377 = vmatprep.subr.bf16.mxu0 0
      %1378 = vmatpush2.bf16.msra.mxu0 0
      %1379 = vmatprep.mubr.bf16.mxu0 0
      %1380 = vmatmul.mubr.bf16.gmra.mxu0 %v1277
      %v1381 = vpop.f32.mrf.mxu0
      %v1382 = vadd.f32 0.0, %v1381
      %v1383 = vpop.f32.mrf.mxu0
      %v1384 = vpop.f32.mrf.mxu0
      %v1385 = vadd.f32 0.0, %v1384
      %v1386 = vpop.f32.mrf.mxu0
      %1387 = vmatprep.mubr.bf16.mxu0 0
      %1388 = vmatmul.mubr.bf16.gmra.mxu0 %v1278
      %v1389 = vpop.f32.mrf.mxu0
      %v1390 = vadd.f32 0.0, %v1389
      %v1391 = vpop.f32.mrf.mxu0
      %v1392 = vpop.f32.mrf.mxu0
      %v1393 = vadd.f32 0.0, %v1392
      %v1394 = vpop.f32.mrf.mxu0
      %1395 = vmatprep.mubr.bf16.mxu0 0
      %1396 = vmatmul.mubr.bf16.gmra.mxu0 %v1279
      %v1397 = vpop.f32.mrf.mxu0
      %v1398 = vadd.f32 0.0, %v1397
      %v1399 = vpop.f32.mrf.mxu0
      %v1400 = vpop.f32.mrf.mxu0
      %v1401 = vadd.f32 0.0, %v1400
      %v1402 = vpop.f32.mrf.mxu0
      %1403 = vmatprep.mubr.bf16.mxu0 0
      %1404 = vmatmul.mubr.bf16.gmra.mxu0 %v1280
      %v1405 = vpop.f32.mrf.mxu0
      %v1406 = vadd.f32 0.0, %v1405
      %v1407 = vpop.f32.mrf.mxu0
      %v1408 = vpop.f32.mrf.mxu0
      %v1409 = vadd.f32 0.0, %v1408
      %v1410 = vpop.f32.mrf.mxu0
      %1411 = vmatprep.mubr.bf16.mxu0 0
      %1412 = vmatmul.mubr.bf16.gmra.mxu0 %v1281
      %v1413 = vpop.f32.mrf.mxu0
      %v1414 = vadd.f32 0.0, %v1413
      %v1415 = vpop.f32.mrf.mxu0
      %v1416 = vpop.f32.mrf.mxu0
      %v1417 = vadd.f32 0.0, %v1416
      %v1418 = vpop.f32.mrf.mxu0
      %1419 = vdwg.mxu0
      %v1420 = vadd.f32 %v1257, %v1382
      %v1421 = vadd.f32 %v1258, %v1385
      %v1422 = vadd.f32 %v1259, %v1390
      %v1423 = vadd.f32 %v1260, %v1393
      %v1424 = vadd.f32 %v1261, %v1398
      %v1425 = vadd.f32 %v1262, %v1401
      %v1426 = vadd.f32 %v1263, %v1406
      %v1427 = vadd.f32 %v1264, %v1409
      %v1428 = vadd.f32 %v1265, %v1414
      %v1429 = vadd.f32 %v1266, %v1417
      %v1430 = vld [vmem:[#allocation2 + $0xc] sm:$0xff]
      %v1431 = vld [vmem:[#allocation2 + $0x14] sm:$0xff]
      %v1432 = vld [vmem:[#allocation2 + $0x1c] sm:$0xff]
      %v1433 = vld [vmem:[#allocation2 + $0x24] sm:$0xff]
      %v1434 = vld [vmem:[#allocation2 + $0x2c] sm:$0xff]
      %v1435 = vld [vmem:[#allocation2 + $0x34] sm:$0xff]
      %v1436 = vld [vmem:[#allocation2 + $0x3c] sm:$0xff]
      %v1437 = vld [vmem:[#allocation2 + $0x44] sm:$0xff]
      %v1438 = vld [vmem:[#allocation2 + $0x4c] sm:$0xff]
      %v1439 = vld [vmem:[#allocation2 + $0x54] sm:$0xff]
      %v1440 = vpack.c.bf16 %v1431, %v1430
      %v1441 = vpack.c.bf16 %v1433, %v1432
      %v1442 = vpack.c.bf16 %v1435, %v1434
      %v1443 = vpack.c.bf16 %v1437, %v1436
      %v1444 = vpack.c.bf16 %v1439, %v1438
      %s1445 = scalar_lea.vmem %s3, 320
      %v1446 = vld [vmem:[%s1445] sm:$0xf]
      %v1447 = vld [vmem:[%s1445 + $0x4] sm:$0xf]
      %v1448 = vld [vmem:[%s1445 + $0x8] sm:$0xf]
      %v1449 = vld [vmem:[%s1445 + $0xc] sm:$0xf]
      %v1450 = vld [vmem:[%s1445 + $0x10] sm:$0xf]
      %v1451 = vld [vmem:[%s1445 + $0x14] sm:$0xf]
      %v1452 = vld [vmem:[%s1445 + $0x18] sm:$0xf]
      %v1453 = vld [vmem:[%s1445 + $0x1c] sm:$0xf]
      %v1454 = vld [vmem:[%s1445 + $0x20] sm:$0xf]
      %v1455 = vld [vmem:[%s1445 + $0x24] sm:$0xf]
      %v1456 = vld [vmem:[%s1445 + $0x28] sm:$0xf]
      %v1457 = vld [vmem:[%s1445 + $0x2c] sm:$0xf]
      %v1458 = vld [vmem:[%s1445 + $0x30] sm:$0xf]
      %v1459 = vld [vmem:[%s1445 + $0x34] sm:$0xf]
      %v1460 = vld [vmem:[%s1445 + $0x38] sm:$0xf]
      %v1461 = vld [vmem:[%s1445 + $0x3c] sm:$0xf]
      %v1478 = vunpack.c.l.b16 %v1446
      %v1479 = vunpack.c.l.b16 %v1447
      %v1480 = vunpack.c.l.b16 %v1448
      %v1481 = vunpack.c.l.b16 %v1449
      %v1482 = vunpack.c.l.b16 %v1450
      %v1483 = vunpack.c.l.b16 %v1451
      %v1484 = vunpack.c.l.b16 %v1452
      %v1485 = vunpack.c.l.b16 %v1453
      %v1486 = vunpack.c.l.b16 %v1454
      %v1487 = vunpack.c.l.b16 %v1455
      %v1488 = vunpack.c.l.b16 %v1456
      %v1489 = vunpack.c.l.b16 %v1457
      %v1490 = vunpack.c.l.b16 %v1458
      %v1491 = vunpack.c.l.b16 %v1459
      %v1492 = vunpack.c.l.b16 %v1460
      %v1493 = vunpack.c.l.b16 %v1461
      %v1494 = vpack.c.b16 %v1479, %v1478
      %v1495 = vpack.c.b16 %v1481, %v1480
      %v1496 = vpack.c.b16 %v1483, %v1482
      %v1497 = vpack.c.b16 %v1485, %v1484
      %v1498 = vpack.c.b16 %v1487, %v1486
      %v1499 = vpack.c.b16 %v1489, %v1488
      %v1500 = vpack.c.b16 %v1491, %v1490
      %v1501 = vpack.c.b16 %v1493, %v1492
      %1510 = vmatprep.subr.bf16.mxu0 0
      %1511 = vmatpush1.bf16.msra.mxu0 %v1501
      %1512 = vmatprep.subr.bf16.mxu0 0
      %1513 = vmatpush1.bf16.msra.mxu0 %v1500
      %1514 = vmatprep.subr.bf16.mxu0 0
      %1515 = vmatpush1.bf16.msra.mxu0 %v1499
      %1516 = vmatprep.subr.bf16.mxu0 0
      %1517 = vmatpush1.bf16.msra.mxu0 %v1498
      %1518 = vmatprep.subr.bf16.mxu0 0
      %1519 = vmatpush1.bf16.msra.mxu0 %v1497
      %1520 = vmatprep.subr.bf16.mxu0 0
      %1521 = vmatpush1.bf16.msra.mxu0 %v1496
      %1522 = vmatprep.subr.bf16.mxu0 0
      %1523 = vmatpush1.bf16.msra.mxu0 %v1495
      %1524 = vmatprep.subr.bf16.mxu0 0
      %1525 = vmatpush1.bf16.msra.mxu0 %v1494
      %1526 = vmatprep.subr.bf16.mxu0 0
      %1527 = vmatpush2.bf16.msra.mxu0 0
      %1528 = vmatprep.subr.bf16.mxu0 0
      %1529 = vmatpush2.bf16.msra.mxu0 0
      %1530 = vmatprep.subr.bf16.mxu0 0
      %1531 = vmatpush2.bf16.msra.mxu0 0
      %1532 = vmatprep.subr.bf16.mxu0 0
      %1533 = vmatpush2.bf16.msra.mxu0 0
      %1534 = vmatprep.subr.bf16.mxu0 0
      %1535 = vmatpush2.bf16.msra.mxu0 0
      %1536 = vmatprep.subr.bf16.mxu0 0
      %1537 = vmatpush2.bf16.msra.mxu0 0
      %1538 = vmatprep.subr.bf16.mxu0 0
      %1539 = vmatpush2.bf16.msra.mxu0 0
      %1540 = vmatprep.subr.bf16.mxu0 0
      %1541 = vmatpush2.bf16.msra.mxu0 0
      %1542 = vmatprep.mubr.bf16.mxu0 0
      %1543 = vmatmul.mubr.bf16.gmra.mxu0 %v1440
      %v1544 = vpop.f32.mrf.mxu0
      %v1545 = vadd.f32 0.0, %v1544
      %v1546 = vpop.f32.mrf.mxu0
      %v1547 = vpop.f32.mrf.mxu0
      %v1548 = vadd.f32 0.0, %v1547
      %v1549 = vpop.f32.mrf.mxu0
      %1550 = vmatprep.mubr.bf16.mxu0 0
      %1551 = vmatmul.mubr.bf16.gmra.mxu0 %v1441
      %v1552 = vpop.f32.mrf.mxu0
      %v1553 = vadd.f32 0.0, %v1552
      %v1554 = vpop.f32.mrf.mxu0
      %v1555 = vpop.f32.mrf.mxu0
      %v1556 = vadd.f32 0.0, %v1555
      %v1557 = vpop.f32.mrf.mxu0
      %1558 = vmatprep.mubr.bf16.mxu0 0
      %1559 = vmatmul.mubr.bf16.gmra.mxu0 %v1442
      %v1560 = vpop.f32.mrf.mxu0
      %v1561 = vadd.f32 0.0, %v1560
      %v1562 = vpop.f32.mrf.mxu0
      %v1563 = vpop.f32.mrf.mxu0
      %v1564 = vadd.f32 0.0, %v1563
      %v1565 = vpop.f32.mrf.mxu0
      %1566 = vmatprep.mubr.bf16.mxu0 0
      %1567 = vmatmul.mubr.bf16.gmra.mxu0 %v1443
      %v1568 = vpop.f32.mrf.mxu0
      %v1569 = vadd.f32 0.0, %v1568
      %v1570 = vpop.f32.mrf.mxu0
      %v1571 = vpop.f32.mrf.mxu0
      %v1572 = vadd.f32 0.0, %v1571
      %v1573 = vpop.f32.mrf.mxu0
      %1574 = vmatprep.mubr.bf16.mxu0 0
      %1575 = vmatmul.mubr.bf16.gmra.mxu0 %v1444
      %v1576 = vpop.f32.mrf.mxu0
      %v1577 = vadd.f32 0.0, %v1576
      %v1578 = vpop.f32.mrf.mxu0
      %v1579 = vpop.f32.mrf.mxu0
      %v1580 = vadd.f32 0.0, %v1579
      %v1581 = vpop.f32.mrf.mxu0
      %1582 = vdwg.mxu0
      %v1583 = vadd.f32 %v1420, %v1545
      %v1584 = vadd.f32 %v1421, %v1548
      %v1585 = vadd.f32 %v1422, %v1553
      %v1586 = vadd.f32 %v1423, %v1556
      %v1587 = vadd.f32 %v1424, %v1561
      %v1588 = vadd.f32 %v1425, %v1564
      %v1589 = vadd.f32 %v1426, %v1569
      %v1590 = vadd.f32 %v1427, %v1572
      %v1591 = vadd.f32 %v1428, %v1577
      %v1592 = vadd.f32 %v1429, %v1580
      %v1593 = vld [vmem:[#allocation2 + $0x14] sm:$0xff]
      %v1594 = vld [vmem:[#allocation2 + $0x1c] sm:$0xff]
      %v1595 = vld [vmem:[#allocation2 + $0x24] sm:$0xff]
      %v1596 = vld [vmem:[#allocation2 + $0x2c] sm:$0xff]
      %v1597 = vld [vmem:[#allocation2 + $0x34] sm:$0xff]
      %v1598 = vld [vmem:[#allocation2 + $0x3c] sm:$0xff]
      %v1599 = vld [vmem:[#allocation2 + $0x44] sm:$0xff]
      %v1600 = vld [vmem:[#allocation2 + $0x4c] sm:$0xff]
      %v1601 = vld [vmem:[#allocation2 + $0x54] sm:$0xff]
      %v1602 = vld [vmem:[#allocation2 + $0x5c] sm:$0xff]
      %v1603 = vpack.c.bf16 %v1594, %v1593
      %v1604 = vpack.c.bf16 %v1596, %v1595
      %v1605 = vpack.c.bf16 %v1598, %v1597
      %v1606 = vpack.c.bf16 %v1600, %v1599
      %v1607 = vpack.c.bf16 %v1602, %v1601
      %s1608 = scalar_lea.vmem %s3, 384
      %v1609 = vld [vmem:[%s1608] sm:$0xf]
      %v1610 = vld [vmem:[%s1608 + $0x4] sm:$0xf]
      %v1611 = vld [vmem:[%s1608 + $0x8] sm:$0xf]
      %v1612 = vld [vmem:[%s1608 + $0xc] sm:$0xf]
      %v1613 = vld [vmem:[%s1608 + $0x10] sm:$0xf]
      %v1614 = vld [vmem:[%s1608 + $0x14] sm:$0xf]
      %v1615 = vld [vmem:[%s1608 + $0x18] sm:$0xf]
      %v1616 = vld [vmem:[%s1608 + $0x1c] sm:$0xf]
      %v1617 = vld [vmem:[%s1608 + $0x20] sm:$0xf]
      %v1618 = vld [vmem:[%s1608 + $0x24] sm:$0xf]
      %v1619 = vld [vmem:[%s1608 + $0x28] sm:$0xf]
      %v1620 = vld [vmem:[%s1608 + $0x2c] sm:$0xf]
      %v1621 = vld [vmem:[%s1608 + $0x30] sm:$0xf]
      %v1622 = vld [vmem:[%s1608 + $0x34] sm:$0xf]
      %v1623 = vld [vmem:[%s1608 + $0x38] sm:$0xf]
      %v1624 = vld [vmem:[%s1608 + $0x3c] sm:$0xf]
      %v1641 = vunpack.c.l.b16 %v1609
      %v1642 = vunpack.c.l.b16 %v1610
      %v1643 = vunpack.c.l.b16 %v1611
      %v1644 = vunpack.c.l.b16 %v1612
      %v1645 = vunpack.c.l.b16 %v1613
      %v1646 = vunpack.c.l.b16 %v1614
      %v1647 = vunpack.c.l.b16 %v1615
      %v1648 = vunpack.c.l.b16 %v1616
      %v1649 = vunpack.c.l.b16 %v1617
      %v1650 = vunpack.c.l.b16 %v1618
      %v1651 = vunpack.c.l.b16 %v1619
      %v1652 = vunpack.c.l.b16 %v1620
      %v1653 = vunpack.c.l.b16 %v1621
      %v1654 = vunpack.c.l.b16 %v1622
      %v1655 = vunpack.c.l.b16 %v1623
      %v1656 = vunpack.c.l.b16 %v1624
      %v1657 = vpack.c.b16 %v1642, %v1641
      %v1658 = vpack.c.b16 %v1644, %v1643
      %v1659 = vpack.c.b16 %v1646, %v1645
      %v1660 = vpack.c.b16 %v1648, %v1647
      %v1661 = vpack.c.b16 %v1650, %v1649
      %v1662 = vpack.c.b16 %v1652, %v1651
      %v1663 = vpack.c.b16 %v1654, %v1653
      %v1664 = vpack.c.b16 %v1656, %v1655
      %1673 = vmatprep.subr.bf16.mxu0 0
      %1674 = vmatpush1.bf16.msra.mxu0 %v1664
      %1675 = vmatprep.subr.bf16.mxu0 0
      %1676 = vmatpush1.bf16.msra.mxu0 %v1663
      %1677 = vmatprep.subr.bf16.mxu0 0
      %1678 = vmatpush1.bf16.msra.mxu0 %v1662
      %1679 = vmatprep.subr.bf16.mxu0 0
      %1680 = vmatpush1.bf16.msra.mxu0 %v1661
      %1681 = vmatprep.subr.bf16.mxu0 0
      %1682 = vmatpush1.bf16.msra.mxu0 %v1660
      %1683 = vmatprep.subr.bf16.mxu0 0
      %1684 = vmatpush1.bf16.msra.mxu0 %v1659
      %1685 = vmatprep.subr.bf16.mxu0 0
      %1686 = vmatpush1.bf16.msra.mxu0 %v1658
      %1687 = vmatprep.subr.bf16.mxu0 0
      %1688 = vmatpush1.bf16.msra.mxu0 %v1657
      %1689 = vmatprep.subr.bf16.mxu0 0
      %1690 = vmatpush2.bf16.msra.mxu0 0
      %1691 = vmatprep.subr.bf16.mxu0 0
      %1692 = vmatpush2.bf16.msra.mxu0 0
      %1693 = vmatprep.subr.bf16.mxu0 0
      %1694 = vmatpush2.bf16.msra.mxu0 0
      %1695 = vmatprep.subr.bf16.mxu0 0
      %1696 = vmatpush2.bf16.msra.mxu0 0
      %1697 = vmatprep.subr.bf16.mxu0 0
      %1698 = vmatpush2.bf16.msra.mxu0 0
      %1699 = vmatprep.subr.bf16.mxu0 0
      %1700 = vmatpush2.bf16.msra.mxu0 0
      %1701 = vmatprep.subr.bf16.mxu0 0
      %1702 = vmatpush2.bf16.msra.mxu0 0
      %1703 = vmatprep.subr.bf16.mxu0 0
      %1704 = vmatpush2.bf16.msra.mxu0 0
      %1705 = vmatprep.mubr.bf16.mxu0 0
      %1706 = vmatmul.mubr.bf16.gmra.mxu0 %v1603
      %v1707 = vpop.f32.mrf.mxu0
      %v1708 = vadd.f32 0.0, %v1707
      %v1709 = vpop.f32.mrf.mxu0
      %v1710 = vpop.f32.mrf.mxu0
      %v1711 = vadd.f32 0.0, %v1710
      %v1712 = vpop.f32.mrf.mxu0
      %1713 = vmatprep.mubr.bf16.mxu0 0
      %1714 = vmatmul.mubr.bf16.gmra.mxu0 %v1604
      %v1715 = vpop.f32.mrf.mxu0
      %v1716 = vadd.f32 0.0, %v1715
      %v1717 = vpop.f32.mrf.mxu0
      %v1718 = vpop.f32.mrf.mxu0
      %v1719 = vadd.f32 0.0, %v1718
      %v1720 = vpop.f32.mrf.mxu0
      %1721 = vmatprep.mubr.bf16.mxu0 0
      %1722 = vmatmul.mubr.bf16.gmra.mxu0 %v1605
      %v1723 = vpop.f32.mrf.mxu0
      %v1724 = vadd.f32 0.0, %v1723
      %v1725 = vpop.f32.mrf.mxu0
      %v1726 = vpop.f32.mrf.mxu0
      %v1727 = vadd.f32 0.0, %v1726
      %v1728 = vpop.f32.mrf.mxu0
      %1729 = vmatprep.mubr.bf16.mxu0 0
      %1730 = vmatmul.mubr.bf16.gmra.mxu0 %v1606
      %v1731 = vpop.f32.mrf.mxu0
      %v1732 = vadd.f32 0.0, %v1731
      %v1733 = vpop.f32.mrf.mxu0
      %v1734 = vpop.f32.mrf.mxu0
      %v1735 = vadd.f32 0.0, %v1734
      %v1736 = vpop.f32.mrf.mxu0
      %1737 = vmatprep.mubr.bf16.mxu0 0
      %1738 = vmatmul.mubr.bf16.gmra.mxu0 %v1607
      %v1739 = vpop.f32.mrf.mxu0
      %v1740 = vadd.f32 0.0, %v1739
      %v1741 = vpop.f32.mrf.mxu0
      %v1742 = vpop.f32.mrf.mxu0
      %v1743 = vadd.f32 0.0, %v1742
      %v1744 = vpop.f32.mrf.mxu0
      %1745 = vdwg.mxu0
      %v1746 = vadd.f32 %v1583, %v1708
      %v1747 = vadd.f32 %v1584, %v1711
      %v1748 = vadd.f32 %v1585, %v1716
      %v1749 = vadd.f32 %v1586, %v1719
      %v1750 = vadd.f32 %v1587, %v1724
      %v1751 = vadd.f32 %v1588, %v1727
      %v1752 = vadd.f32 %v1589, %v1732
      %v1753 = vadd.f32 %v1590, %v1735
      %v1754 = vadd.f32 %v1591, %v1740
      %v1755 = vadd.f32 %v1592, %v1743
      %v1756 = vld [vmem:[#allocation2 + $0x15] sm:$0xff]
      %v1757 = vld [vmem:[#allocation2 + $0x1d] sm:$0xff]
      %v1758 = vld [vmem:[#allocation2 + $0x25] sm:$0xff]
      %v1759 = vld [vmem:[#allocation2 + $0x2d] sm:$0xff]
      %v1760 = vld [vmem:[#allocation2 + $0x35] sm:$0xff]
      %v1761 = vld [vmem:[#allocation2 + $0x3d] sm:$0xff]
      %v1762 = vld [vmem:[#allocation2 + $0x45] sm:$0xff]
      %v1763 = vld [vmem:[#allocation2 + $0x4d] sm:$0xff]
      %v1764 = vld [vmem:[#allocation2 + $0x55] sm:$0xff]
      %v1765 = vld [vmem:[#allocation2 + $0x5d] sm:$0xff]
      %v1766 = vpack.c.bf16 %v1757, %v1756
      %v1767 = vpack.c.bf16 %v1759, %v1758
      %v1768 = vpack.c.bf16 %v1761, %v1760
      %v1769 = vpack.c.bf16 %v1763, %v1762
      %v1770 = vpack.c.bf16 %v1765, %v1764
      %s1771 = scalar_lea.vmem %s3, 448
      %v1772 = vld [vmem:[%s1771] sm:$0xf]
      %v1773 = vld [vmem:[%s1771 + $0x4] sm:$0xf]
      %v1774 = vld [vmem:[%s1771 + $0x8] sm:$0xf]
      %v1775 = vld [vmem:[%s1771 + $0xc] sm:$0xf]
      %v1776 = vld [vmem:[%s1771 + $0x10] sm:$0xf]
      %v1777 = vld [vmem:[%s1771 + $0x14] sm:$0xf]
      %v1778 = vld [vmem:[%s1771 + $0x18] sm:$0xf]
      %v1779 = vld [vmem:[%s1771 + $0x1c] sm:$0xf]
      %v1780 = vld [vmem:[%s1771 + $0x20] sm:$0xf]
      %v1781 = vld [vmem:[%s1771 + $0x24] sm:$0xf]
      %v1782 = vld [vmem:[%s1771 + $0x28] sm:$0xf]
      %v1783 = vld [vmem:[%s1771 + $0x2c] sm:$0xf]
      %v1784 = vld [vmem:[%s1771 + $0x30] sm:$0xf]
      %v1785 = vld [vmem:[%s1771 + $0x34] sm:$0xf]
      %v1786 = vld [vmem:[%s1771 + $0x38] sm:$0xf]
      %v1787 = vld [vmem:[%s1771 + $0x3c] sm:$0xf]
      %v1804 = vunpack.c.l.b16 %v1772
      %v1805 = vunpack.c.l.b16 %v1773
      %v1806 = vunpack.c.l.b16 %v1774
      %v1807 = vunpack.c.l.b16 %v1775
      %v1808 = vunpack.c.l.b16 %v1776
      %v1809 = vunpack.c.l.b16 %v1777
      %v1810 = vunpack.c.l.b16 %v1778
      %v1811 = vunpack.c.l.b16 %v1779
      %v1812 = vunpack.c.l.b16 %v1780
      %v1813 = vunpack.c.l.b16 %v1781
      %v1814 = vunpack.c.l.b16 %v1782
      %v1815 = vunpack.c.l.b16 %v1783
      %v1816 = vunpack.c.l.b16 %v1784
      %v1817 = vunpack.c.l.b16 %v1785
      %v1818 = vunpack.c.l.b16 %v1786
      %v1819 = vunpack.c.l.b16 %v1787
      %v1820 = vpack.c.b16 %v1805, %v1804
      %v1821 = vpack.c.b16 %v1807, %v1806
      %v1822 = vpack.c.b16 %v1809, %v1808
      %v1823 = vpack.c.b16 %v1811, %v1810
      %v1824 = vpack.c.b16 %v1813, %v1812
      %v1825 = vpack.c.b16 %v1815, %v1814
      %v1826 = vpack.c.b16 %v1817, %v1816
      %v1827 = vpack.c.b16 %v1819, %v1818
      %1836 = vmatprep.subr.bf16.mxu0 0
      %1837 = vmatpush1.bf16.msra.mxu0 %v1827
      %1838 = vmatprep.subr.bf16.mxu0 0
      %1839 = vmatpush1.bf16.msra.mxu0 %v1826
      %1840 = vmatprep.subr.bf16.mxu0 0
      %1841 = vmatpush1.bf16.msra.mxu0 %v1825
      %1842 = vmatprep.subr.bf16.mxu0 0
      %1843 = vmatpush1.bf16.msra.mxu0 %v1824
      %1844 = vmatprep.subr.bf16.mxu0 0
      %1845 = vmatpush1.bf16.msra.mxu0 %v1823
      %1846 = vmatprep.subr.bf16.mxu0 0
      %1847 = vmatpush1.bf16.msra.mxu0 %v1822
      %1848 = vmatprep.subr.bf16.mxu0 0
      %1849 = vmatpush1.bf16.msra.mxu0 %v1821
      %1850 = vmatprep.subr.bf16.mxu0 0
      %1851 = vmatpush1.bf16.msra.mxu0 %v1820
      %1852 = vmatprep.subr.bf16.mxu0 0
      %1853 = vmatpush2.bf16.msra.mxu0 0
      %1854 = vmatprep.subr.bf16.mxu0 0
      %1855 = vmatpush2.bf16.msra.mxu0 0
      %1856 = vmatprep.subr.bf16.mxu0 0
      %1857 = vmatpush2.bf16.msra.mxu0 0
      %1858 = vmatprep.subr.bf16.mxu0 0
      %1859 = vmatpush2.bf16.msra.mxu0 0
      %1860 = vmatprep.subr.bf16.mxu0 0
      %1861 = vmatpush2.bf16.msra.mxu0 0
      %1862 = vmatprep.subr.bf16.mxu0 0
      %1863 = vmatpush2.bf16.msra.mxu0 0
      %1864 = vmatprep.subr.bf16.mxu0 0
      %1865 = vmatpush2.bf16.msra.mxu0 0
      %1866 = vmatprep.subr.bf16.mxu0 0
      %1867 = vmatpush2.bf16.msra.mxu0 0
      %1868 = vmatprep.mubr.bf16.mxu0 0
      %1869 = vmatmul.mubr.bf16.gmra.mxu0 %v1766
      %v1870 = vpop.f32.mrf.mxu0
      %v1871 = vadd.f32 0.0, %v1870
      %v1872 = vpop.f32.mrf.mxu0
      %v1873 = vpop.f32.mrf.mxu0
      %v1874 = vadd.f32 0.0, %v1873
      %v1875 = vpop.f32.mrf.mxu0
      %1876 = vmatprep.mubr.bf16.mxu0 0
      %1877 = vmatmul.mubr.bf16.gmra.mxu0 %v1767
      %v1878 = vpop.f32.mrf.mxu0
      %v1879 = vadd.f32 0.0, %v1878
      %v1880 = vpop.f32.mrf.mxu0
      %v1881 = vpop.f32.mrf.mxu0
      %v1882 = vadd.f32 0.0, %v1881
      %v1883 = vpop.f32.mrf.mxu0
      %1884 = vmatprep.mubr.bf16.mxu0 0
      %1885 = vmatmul.mubr.bf16.gmra.mxu0 %v1768
      %v1886 = vpop.f32.mrf.mxu0
      %v1887 = vadd.f32 0.0, %v1886
      %v1888 = vpop.f32.mrf.mxu0
      %v1889 = vpop.f32.mrf.mxu0
      %v1890 = vadd.f32 0.0, %v1889
      %v1891 = vpop.f32.mrf.mxu0
      %1892 = vmatprep.mubr.bf16.mxu0 0
      %1893 = vmatmul.mubr.bf16.gmra.mxu0 %v1769
      %v1894 = vpop.f32.mrf.mxu0
      %v1895 = vadd.f32 0.0, %v1894
      %v1896 = vpop.f32.mrf.mxu0
      %v1897 = vpop.f32.mrf.mxu0
      %v1898 = vadd.f32 0.0, %v1897
      %v1899 = vpop.f32.mrf.mxu0
      %1900 = vmatprep.mubr.bf16.mxu0 0
      %1901 = vmatmul.mubr.bf16.gmra.mxu0 %v1770
      %v1902 = vpop.f32.mrf.mxu0
      %v1903 = vadd.f32 0.0, %v1902
      %v1904 = vpop.f32.mrf.mxu0
      %v1905 = vpop.f32.mrf.mxu0
      %v1906 = vadd.f32 0.0, %v1905
      %v1907 = vpop.f32.mrf.mxu0
      %1908 = vdwg.mxu0
      %v1909 = vadd.f32 %v1746, %v1871
      %v1910 = vadd.f32 %v1747, %v1874
      %v1911 = vadd.f32 %v1748, %v1879
      %v1912 = vadd.f32 %v1749, %v1882
      %v1913 = vadd.f32 %v1750, %v1887
      %v1914 = vadd.f32 %v1751, %v1890
      %v1915 = vadd.f32 %v1752, %v1895
      %v1916 = vadd.f32 %v1753, %v1898
      %v1917 = vadd.f32 %v1754, %v1903
      %v1918 = vadd.f32 %v1755, %v1906
      %v1919 = vld [vmem:[#allocation2 + $0x16] sm:$0xff]
      %v1920 = vld [vmem:[#allocation2 + $0x1e] sm:$0xff]
      %v1921 = vld [vmem:[#allocation2 + $0x26] sm:$0xff]
      %v1922 = vld [vmem:[#allocation2 + $0x2e] sm:$0xff]
      %v1923 = vld [vmem:[#allocation2 + $0x36] sm:$0xff]
      %v1924 = vld [vmem:[#allocation2 + $0x3e] sm:$0xff]
      %v1925 = vld [vmem:[#allocation2 + $0x46] sm:$0xff]
      %v1926 = vld [vmem:[#allocation2 + $0x4e] sm:$0xff]
      %v1927 = vld [vmem:[#allocation2 + $0x56] sm:$0xff]
      %v1928 = vld [vmem:[#allocation2 + $0x5e] sm:$0xff]
      %v1929 = vpack.c.bf16 %v1920, %v1919
      %v1930 = vpack.c.bf16 %v1922, %v1921
      %v1931 = vpack.c.bf16 %v1924, %v1923
      %v1932 = vpack.c.bf16 %v1926, %v1925
      %v1933 = vpack.c.bf16 %v1928, %v1927
      %s1934 = scalar_lea.vmem %s3, 512
      %v1935 = vld [vmem:[%s1934] sm:$0xf]
      %v1936 = vld [vmem:[%s1934 + $0x4] sm:$0xf]
      %v1937 = vld [vmem:[%s1934 + $0x8] sm:$0xf]
      %v1938 = vld [vmem:[%s1934 + $0xc] sm:$0xf]
      %v1939 = vld [vmem:[%s1934 + $0x10] sm:$0xf]
      %v1940 = vld [vmem:[%s1934 + $0x14] sm:$0xf]
      %v1941 = vld [vmem:[%s1934 + $0x18] sm:$0xf]
      %v1942 = vld [vmem:[%s1934 + $0x1c] sm:$0xf]
      %v1943 = vld [vmem:[%s1934 + $0x20] sm:$0xf]
      %v1944 = vld [vmem:[%s1934 + $0x24] sm:$0xf]
      %v1945 = vld [vmem:[%s1934 + $0x28] sm:$0xf]
      %v1946 = vld [vmem:[%s1934 + $0x2c] sm:$0xf]
      %v1947 = vld [vmem:[%s1934 + $0x30] sm:$0xf]
      %v1948 = vld [vmem:[%s1934 + $0x34] sm:$0xf]
      %v1949 = vld [vmem:[%s1934 + $0x38] sm:$0xf]
      %v1950 = vld [vmem:[%s1934 + $0x3c] sm:$0xf]
      %v1967 = vunpack.c.l.b16 %v1935
      %v1968 = vunpack.c.l.b16 %v1936
      %v1969 = vunpack.c.l.b16 %v1937
      %v1970 = vunpack.c.l.b16 %v1938
      %v1971 = vunpack.c.l.b16 %v1939
      %v1972 = vunpack.c.l.b16 %v1940
      %v1973 = vunpack.c.l.b16 %v1941
      %v1974 = vunpack.c.l.b16 %v1942
      %v1975 = vunpack.c.l.b16 %v1943
      %v1976 = vunpack.c.l.b16 %v1944
      %v1977 = vunpack.c.l.b16 %v1945
      %v1978 = vunpack.c.l.b16 %v1946
      %v1979 = vunpack.c.l.b16 %v1947
      %v1980 = vunpack.c.l.b16 %v1948
      %v1981 = vunpack.c.l.b16 %v1949
      %v1982 = vunpack.c.l.b16 %v1950
      %v1983 = vpack.c.b16 %v1968, %v1967
      %v1984 = vpack.c.b16 %v1970, %v1969
      %v1985 = vpack.c.b16 %v1972, %v1971
      %v1986 = vpack.c.b16 %v1974, %v1973
      %v1987 = vpack.c.b16 %v1976, %v1975
      %v1988 = vpack.c.b16 %v1978, %v1977
      %v1989 = vpack.c.b16 %v1980, %v1979
      %v1990 = vpack.c.b16 %v1982, %v1981
      %1999 = vmatprep.subr.bf16.mxu0 0
      %2000 = vmatpush1.bf16.msra.mxu0 %v1990
      %2001 = vmatprep.subr.bf16.mxu0 0
      %2002 = vmatpush1.bf16.msra.mxu0 %v1989
      %2003 = vmatprep.subr.bf16.mxu0 0
      %2004 = vmatpush1.bf16.msra.mxu0 %v1988
      %2005 = vmatprep.subr.bf16.mxu0 0
      %2006 = vmatpush1.bf16.msra.mxu0 %v1987
      %2007 = vmatprep.subr.bf16.mxu0 0
      %2008 = vmatpush1.bf16.msra.mxu0 %v1986
      %2009 = vmatprep.subr.bf16.mxu0 0
      %2010 = vmatpush1.bf16.msra.mxu0 %v1985
      %2011 = vmatprep.subr.bf16.mxu0 0
      %2012 = vmatpush1.bf16.msra.mxu0 %v1984
      %2013 = vmatprep.subr.bf16.mxu0 0
      %2014 = vmatpush1.bf16.msra.mxu0 %v1983
      %2015 = vmatprep.subr.bf16.mxu0 0
      %2016 = vmatpush2.bf16.msra.mxu0 0
      %2017 = vmatprep.subr.bf16.mxu0 0
      %2018 = vmatpush2.bf16.msra.mxu0 0
      %2019 = vmatprep.subr.bf16.mxu0 0
      %2020 = vmatpush2.bf16.msra.mxu0 0
      %2021 = vmatprep.subr.bf16.mxu0 0
      %2022 = vmatpush2.bf16.msra.mxu0 0
      %2023 = vmatprep.subr.bf16.mxu0 0
      %2024 = vmatpush2.bf16.msra.mxu0 0
      %2025 = vmatprep.subr.bf16.mxu0 0
      %2026 = vmatpush2.bf16.msra.mxu0 0
      %2027 = vmatprep.subr.bf16.mxu0 0
      %2028 = vmatpush2.bf16.msra.mxu0 0
      %2029 = vmatprep.subr.bf16.mxu0 0
      %2030 = vmatpush2.bf16.msra.mxu0 0
      %2031 = vmatprep.mubr.bf16.mxu0 0
      %2032 = vmatmul.mubr.bf16.gmra.mxu0 %v1929
      %v2033 = vpop.f32.mrf.mxu0
      %v2034 = vadd.f32 0.0, %v2033
      %v2035 = vpop.f32.mrf.mxu0
      %v2036 = vpop.f32.mrf.mxu0
      %v2037 = vadd.f32 0.0, %v2036
      %v2038 = vpop.f32.mrf.mxu0
      %2039 = vmatprep.mubr.bf16.mxu0 0
      %2040 = vmatmul.mubr.bf16.gmra.mxu0 %v1930
      %v2041 = vpop.f32.mrf.mxu0
      %v2042 = vadd.f32 0.0, %v2041
      %v2043 = vpop.f32.mrf.mxu0
      %v2044 = vpop.f32.mrf.mxu0
      %v2045 = vadd.f32 0.0, %v2044
      %v2046 = vpop.f32.mrf.mxu0
      %2047 = vmatprep.mubr.bf16.mxu0 0
      %2048 = vmatmul.mubr.bf16.gmra.mxu0 %v1931
      %v2049 = vpop.f32.mrf.mxu0
      %v2050 = vadd.f32 0.0, %v2049
      %v2051 = vpop.f32.mrf.mxu0
      %v2052 = vpop.f32.mrf.mxu0
      %v2053 = vadd.f32 0.0, %v2052
      %v2054 = vpop.f32.mrf.mxu0
      %2055 = vmatprep.mubr.bf16.mxu0 0
      %2056 = vmatmul.mubr.bf16.gmra.mxu0 %v1932
      %v2057 = vpop.f32.mrf.mxu0
      %v2058 = vadd.f32 0.0, %v2057
      %v2059 = vpop.f32.mrf.mxu0
      %v2060 = vpop.f32.mrf.mxu0
      %v2061 = vadd.f32 0.0, %v2060
      %v2062 = vpop.f32.mrf.mxu0
      %2063 = vmatprep.mubr.bf16.mxu0 0
      %2064 = vmatmul.mubr.bf16.gmra.mxu0 %v1933
      %v2065 = vpop.f32.mrf.mxu0
      %v2066 = vadd.f32 0.0, %v2065
      %v2067 = vpop.f32.mrf.mxu0
      %v2068 = vpop.f32.mrf.mxu0
      %v2069 = vadd.f32 0.0, %v2068
      %v2070 = vpop.f32.mrf.mxu0
      %2071 = vdwg.mxu0
      %v2072 = vadd.f32 %v1909, %v2034
      %v2073 = vadd.f32 %v1910, %v2037
      %v2074 = vadd.f32 %v1911, %v2042
      %v2075 = vadd.f32 %v1912, %v2045
      %v2076 = vadd.f32 %v1913, %v2050
      %v2077 = vadd.f32 %v1914, %v2053
      %v2078 = vadd.f32 %v1915, %v2058
      %v2079 = vadd.f32 %v1916, %v2061
      %v2080 = vadd.f32 %v1917, %v2066
      %v2081 = vadd.f32 %v1918, %v2069
      %v2083 = vlaneseq
      %v2084 = vshrl.u32 %v2083, 7
      %v2085 = vsub.s32 0, %v2084
      %v2086 = vrot.slane %v635, %v2085
      %v2088 = vadd.f32 %v2072, %v2086
      %v2089 = vadd.f32 %v2073, %v2086
      %v2090 = vadd.f32 %v2074, %v2086
      %v2091 = vadd.f32 %v2075, %v2086
      %v2092 = vadd.f32 %v2076, %v2086
      %v2093 = vadd.f32 %v2077, %v2086
      %v2094 = vadd.f32 %v2078, %v2086
      %v2095 = vadd.f32 %v2079, %v2086
      %v2096 = vadd.f32 %v2080, %v2086
      %v2097 = vadd.f32 %v2081, %v2086
      %v2098 = vmax.f32 %v2088, 0.0
      %v2099 = vmax.f32 %v2089, 0.0
      %v2100 = vmax.f32 %v2090, 0.0
      %v2101 = vmax.f32 %v2091, 0.0
      %v2102 = vmax.f32 %v2092, 0.0
      %v2103 = vmax.f32 %v2093, 0.0
      %v2104 = vmax.f32 %v2094, 0.0
      %v2105 = vmax.f32 %v2095, 0.0
      %v2106 = vmax.f32 %v2096, 0.0
      %v2107 = vmax.f32 %v2097, 0.0
      %2108 = vst [vmem:[#allocation3] sm:$0xff] %v2098
      %2109 = vst [vmem:[#allocation3 + $0x8] sm:$0xff] %v2099
      %2110 = vst [vmem:[#allocation3 + $0x10] sm:$0xff] %v2100
      %2111 = vst [vmem:[#allocation3 + $0x18] sm:$0xff] %v2101
      %2112 = vst [vmem:[#allocation3 + $0x20] sm:$0xff] %v2102
      %2113 = vst [vmem:[#allocation3 + $0x28] sm:$0xff] %v2103
      %2114 = vst [vmem:[#allocation3 + $0x30] sm:$0xff] %v2104
      %2115 = vst [vmem:[#allocation3 + $0x38] sm:$0xff] %v2105
      %2116 = vst [vmem:[#allocation3 + $0x40] sm:$0xff] %v2106
      %2117 = vst [vmem:[#allocation3 + $0x48] sm:$0xff] %v2107
      %v2118 = vld [vmem:[%s6] sm:$0x1]
      %v2119 = vld [vmem:[#allocation3] sm:$0xff]
      %v2120 = vld [vmem:[#allocation3 + $0x8] sm:$0xff]
      %v2121 = vld [vmem:[#allocation3 + $0x10] sm:$0xff]
      %v2122 = vld [vmem:[#allocation3 + $0x18] sm:$0xff]
      %v2123 = vld [vmem:[#allocation3 + $0x20] sm:$0xff]
      %v2124 = vld [vmem:[#allocation3 + $0x28] sm:$0xff]
      %v2125 = vld [vmem:[#allocation3 + $0x30] sm:$0xff]
      %v2126 = vld [vmem:[#allocation3 + $0x38] sm:$0xf]
      %v2127 = vpack.c.bf16 %v2120, %v2119
      %v2128 = vpack.c.bf16 %v2122, %v2121
      %v2129 = vpack.c.bf16 %v2124, %v2123
      %v2130 = vpack.c.bf16 %v2126, %v2125
      %v2131 = vld [vmem:[%s5] sm:$0xf]
      %v2132 = vld [vmem:[%s5 + $0x4] sm:$0xf]
      %v2133 = vld [vmem:[%s5 + $0x8] sm:$0xf]
      %v2134 = vld [vmem:[%s5 + $0xc] sm:$0xf]
      %v2135 = vld [vmem:[%s5 + $0x10] sm:$0xf]
      %v2136 = vld [vmem:[%s5 + $0x14] sm:$0xf]
      %v2137 = vld [vmem:[%s5 + $0x18] sm:$0xf]
      %v2138 = vld [vmem:[%s5 + $0x1c] sm:$0xf]
      %v2139 = vld [vmem:[%s5 + $0x20] sm:$0xf]
      %v2140 = vld [vmem:[%s5 + $0x24] sm:$0xf]
      %v2141 = vld [vmem:[%s5 + $0x28] sm:$0xf]
      %v2142 = vld [vmem:[%s5 + $0x2c] sm:$0xf]
      %v2143 = vld [vmem:[%s5 + $0x30] sm:$0xf]
      %v2144 = vld [vmem:[%s5 + $0x34] sm:$0xf]
      %v2145 = vld [vmem:[%s5 + $0x38] sm:$0xf]
      %v2146 = vld [vmem:[%s5 + $0x3c] sm:$0xf]
      %v2147 = vld [vmem:[#allocation3 + $0x1] sm:$0xff]
      %v2148 = vld [vmem:[#allocation3 + $0x9] sm:$0xff]
      %v2149 = vld [vmem:[#allocation3 + $0x11] sm:$0xff]
      %v2150 = vld [vmem:[#allocation3 + $0x19] sm:$0xff]
      %v2151 = vld [vmem:[#allocation3 + $0x21] sm:$0xff]
      %v2152 = vld [vmem:[#allocation3 + $0x29] sm:$0xff]
      %v2153 = vld [vmem:[#allocation3 + $0x31] sm:$0xff]
      %v2154 = vld [vmem:[#allocation3 + $0x39] sm:$0xf]
      %v2155 = vpack.c.bf16 %v2148, %v2147
      %v2156 = vpack.c.bf16 %v2150, %v2149
      %v2157 = vpack.c.bf16 %v2152, %v2151
      %v2158 = vpack.c.bf16 %v2154, %v2153
      %s2159 = scalar_lea.vmem %s5, 64
      %v2160 = vld [vmem:[%s2159] sm:$0xf]
      %v2161 = vld [vmem:[%s2159 + $0x4] sm:$0xf]
      %v2162 = vld [vmem:[%s2159 + $0x8] sm:$0xf]
      %v2163 = vld [vmem:[%s2159 + $0xc] sm:$0xf]
      %v2164 = vld [vmem:[%s2159 + $0x10] sm:$0xf]
      %v2165 = vld [vmem:[%s2159 + $0x14] sm:$0xf]
      %v2166 = vld [vmem:[%s2159 + $0x18] sm:$0xf]
      %v2167 = vld [vmem:[%s2159 + $0x1c] sm:$0xf]
      %v2168 = vld [vmem:[%s2159 + $0x20] sm:$0xf]
      %v2169 = vld [vmem:[%s2159 + $0x24] sm:$0xf]
      %v2170 = vld [vmem:[%s2159 + $0x28] sm:$0xf]
      %v2171 = vld [vmem:[%s2159 + $0x2c] sm:$0xf]
      %v2172 = vld [vmem:[%s2159 + $0x30] sm:$0xf]
      %v2173 = vld [vmem:[%s2159 + $0x34] sm:$0xf]
      %v2174 = vld [vmem:[%s2159 + $0x38] sm:$0xf]
      %v2175 = vld [vmem:[%s2159 + $0x3c] sm:$0xf]
      %v2192 = vunpack.c.l.b16 %v2160
      %v2193 = vunpack.c.l.b16 %v2161
      %v2194 = vunpack.c.l.b16 %v2162
      %v2195 = vunpack.c.l.b16 %v2163
      %v2196 = vunpack.c.l.b16 %v2164
      %v2197 = vunpack.c.l.b16 %v2165
      %v2198 = vunpack.c.l.b16 %v2166
      %v2199 = vunpack.c.l.b16 %v2167
      %v2200 = vunpack.c.l.b16 %v2168
      %v2201 = vunpack.c.l.b16 %v2169
      %v2202 = vunpack.c.l.b16 %v2170
      %v2203 = vunpack.c.l.b16 %v2171
      %v2204 = vunpack.c.l.b16 %v2172
      %v2205 = vunpack.c.l.b16 %v2173
      %v2206 = vunpack.c.l.b16 %v2174
      %v2207 = vunpack.c.l.b16 %v2175
      %v2208 = vpack.c.b16 %v2193, %v2192
      %v2209 = vpack.c.b16 %v2195, %v2194
      %v2210 = vpack.c.b16 %v2197, %v2196
      %v2211 = vpack.c.b16 %v2199, %v2198
      %v2212 = vpack.c.b16 %v2201, %v2200
      %v2213 = vpack.c.b16 %v2203, %v2202
      %v2214 = vpack.c.b16 %v2205, %v2204
      %v2215 = vpack.c.b16 %v2207, %v2206
      %2224 = vmatprep.subr.bf16.mxu0 0
      %2225 = vmatpush1.bf16.msra.mxu0 %v2215
      %2226 = vmatprep.subr.bf16.mxu0 0
      %2227 = vmatpush1.bf16.msra.mxu0 %v2214
      %2228 = vmatprep.subr.bf16.mxu0 0
      %2229 = vmatpush1.bf16.msra.mxu0 %v2213
      %2230 = vmatprep.subr.bf16.mxu0 0
      %2231 = vmatpush1.bf16.msra.mxu0 %v2212
      %2232 = vmatprep.subr.bf16.mxu0 0
      %2233 = vmatpush1.bf16.msra.mxu0 %v2211
      %2234 = vmatprep.subr.bf16.mxu0 0
      %2235 = vmatpush1.bf16.msra.mxu0 %v2210
      %2236 = vmatprep.subr.bf16.mxu0 0
      %2237 = vmatpush1.bf16.msra.mxu0 %v2209
      %2238 = vmatprep.subr.bf16.mxu0 0
      %2239 = vmatpush1.bf16.msra.mxu0 %v2208
      %2240 = vmatprep.subr.bf16.mxu0 0
      %2241 = vmatpush2.bf16.msra.mxu0 0
      %2242 = vmatprep.subr.bf16.mxu0 0
      %2243 = vmatpush2.bf16.msra.mxu0 0
      %2244 = vmatprep.subr.bf16.mxu0 0
      %2245 = vmatpush2.bf16.msra.mxu0 0
      %2246 = vmatprep.subr.bf16.mxu0 0
      %2247 = vmatpush2.bf16.msra.mxu0 0
      %2248 = vmatprep.subr.bf16.mxu0 0
      %2249 = vmatpush2.bf16.msra.mxu0 0
      %2250 = vmatprep.subr.bf16.mxu0 0
      %2251 = vmatpush2.bf16.msra.mxu0 0
      %2252 = vmatprep.subr.bf16.mxu0 0
      %2253 = vmatpush2.bf16.msra.mxu0 0
      %2254 = vmatprep.subr.bf16.mxu0 0
      %2255 = vmatpush2.bf16.msra.mxu0 0
      %2256 = vmatprep.mubr.bf16.mxu0 0
      %2257 = vmatmul.mubr.bf16.gmra.mxu0 %v2155
      %v2258 = vpop.f32.mrf.mxu0
      %v2259 = vadd.f32 0.0, %v2258
      %v2260 = vpop.f32.mrf.mxu0
      %v2261 = vpop.f32.mrf.mxu0
      %v2262 = vadd.f32 0.0, %v2261
      %v2263 = vpop.f32.mrf.mxu0
      %2264 = vmatprep.mubr.bf16.mxu0 0
      %2265 = vmatmul.mubr.bf16.gmra.mxu0 %v2156
      %v2266 = vpop.f32.mrf.mxu0
      %v2267 = vadd.f32 0.0, %v2266
      %v2268 = vpop.f32.mrf.mxu0
      %v2269 = vpop.f32.mrf.mxu0
      %v2270 = vadd.f32 0.0, %v2269
      %v2271 = vpop.f32.mrf.mxu0
      %2272 = vmatprep.mubr.bf16.mxu0 0
      %2273 = vmatmul.mubr.bf16.gmra.mxu0 %v2157
      %v2274 = vpop.f32.mrf.mxu0
      %v2275 = vadd.f32 0.0, %v2274
      %v2276 = vpop.f32.mrf.mxu0
      %v2277 = vpop.f32.mrf.mxu0
      %v2278 = vadd.f32 0.0, %v2277
      %v2279 = vpop.f32.mrf.mxu0
      %2280 = vmatprep.mubr.bf16.mxu0 0
      %2281 = vmatmul.mubr.bf16.gmra.mxu0 %v2158
      %v2282 = vpop.f32.mrf.mxu0
      %v2283 = vadd.f32 0.0, %v2282
      %v2284 = vpop.f32.mrf.mxu0
      %v2285 = vpop.f32.mrf.mxu0
      %v2286 = vadd.f32 0.0, %v2285
      %v2287 = vpop.f32.mrf.mxu0
      %2288 = vdwg.mxu0
      %v2305 = vunpack.c.l.b16 %v2131
      %v2306 = vunpack.c.l.b16 %v2132
      %v2307 = vunpack.c.l.b16 %v2133
      %v2308 = vunpack.c.l.b16 %v2134
      %v2309 = vunpack.c.l.b16 %v2135
      %v2310 = vunpack.c.l.b16 %v2136
      %v2311 = vunpack.c.l.b16 %v2137
      %v2312 = vunpack.c.l.b16 %v2138
      %v2313 = vunpack.c.l.b16 %v2139
      %v2314 = vunpack.c.l.b16 %v2140
      %v2315 = vunpack.c.l.b16 %v2141
      %v2316 = vunpack.c.l.b16 %v2142
      %v2317 = vunpack.c.l.b16 %v2143
      %v2318 = vunpack.c.l.b16 %v2144
      %v2319 = vunpack.c.l.b16 %v2145
      %v2320 = vunpack.c.l.b16 %v2146
      %v2321 = vpack.c.b16 %v2306, %v2305
      %v2322 = vpack.c.b16 %v2308, %v2307
      %v2323 = vpack.c.b16 %v2310, %v2309
      %v2324 = vpack.c.b16 %v2312, %v2311
      %v2325 = vpack.c.b16 %v2314, %v2313
      %v2326 = vpack.c.b16 %v2316, %v2315
      %v2327 = vpack.c.b16 %v2318, %v2317
      %v2328 = vpack.c.b16 %v2320, %v2319
      %2337 = vmatprep.subr.bf16.mxu0 0
      %2338 = vmatpush1.bf16.msra.mxu0 %v2328
      %2339 = vmatprep.subr.bf16.mxu0 0
      %2340 = vmatpush1.bf16.msra.mxu0 %v2327
      %2341 = vmatprep.subr.bf16.mxu0 0
      %2342 = vmatpush1.bf16.msra.mxu0 %v2326
      %2343 = vmatprep.subr.bf16.mxu0 0
      %2344 = vmatpush1.bf16.msra.mxu0 %v2325
      %2345 = vmatprep.subr.bf16.mxu0 0
      %2346 = vmatpush1.bf16.msra.mxu0 %v2324
      %2347 = vmatprep.subr.bf16.mxu0 0
      %2348 = vmatpush1.bf16.msra.mxu0 %v2323
      %2349 = vmatprep.subr.bf16.mxu0 0
      %2350 = vmatpush1.bf16.msra.mxu0 %v2322
      %2351 = vmatprep.subr.bf16.mxu0 0
      %2352 = vmatpush1.bf16.msra.mxu0 %v2321
      %2353 = vmatprep.subr.bf16.mxu0 0
      %2354 = vmatpush2.bf16.msra.mxu0 0
      %2355 = vmatprep.subr.bf16.mxu0 0
      %2356 = vmatpush2.bf16.msra.mxu0 0
      %2357 = vmatprep.subr.bf16.mxu0 0
      %2358 = vmatpush2.bf16.msra.mxu0 0
      %2359 = vmatprep.subr.bf16.mxu0 0
      %2360 = vmatpush2.bf16.msra.mxu0 0
      %2361 = vmatprep.subr.bf16.mxu0 0
      %2362 = vmatpush2.bf16.msra.mxu0 0
      %2363 = vmatprep.subr.bf16.mxu0 0
      %2364 = vmatpush2.bf16.msra.mxu0 0
      %2365 = vmatprep.subr.bf16.mxu0 0
      %2366 = vmatpush2.bf16.msra.mxu0 0
      %2367 = vmatprep.subr.bf16.mxu0 0
      %2368 = vmatpush2.bf16.msra.mxu0 0
      %2369 = vmatprep.mubr.bf16.mxu0 0
      %2370 = vmatmul.mubr.bf16.gmra.mxu0 %v2127
      %v2371 = vpop.f32.mrf.mxu0
      %v2372 = vadd.f32 %v2259, %v2371
      %v2373 = vpop.f32.mrf.mxu0
      %v2374 = vpop.f32.mrf.mxu0
      %v2375 = vadd.f32 %v2262, %v2374
      %v2376 = vpop.f32.mrf.mxu0
      %2377 = vmatprep.mubr.bf16.mxu0 0
      %2378 = vmatmul.mubr.bf16.gmra.mxu0 %v2128
      %v2379 = vpop.f32.mrf.mxu0
      %v2380 = vadd.f32 %v2267, %v2379
      %v2381 = vpop.f32.mrf.mxu0
      %v2382 = vpop.f32.mrf.mxu0
      %v2383 = vadd.f32 %v2270, %v2382
      %v2384 = vpop.f32.mrf.mxu0
      %2385 = vmatprep.mubr.bf16.mxu0 0
      %2386 = vmatmul.mubr.bf16.gmra.mxu0 %v2129
      %v2387 = vpop.f32.mrf.mxu0
      %v2388 = vadd.f32 %v2275, %v2387
      %v2389 = vpop.f32.mrf.mxu0
      %v2390 = vpop.f32.mrf.mxu0
      %v2391 = vadd.f32 %v2278, %v2390
      %v2392 = vpop.f32.mrf.mxu0
      %2393 = vmatprep.mubr.bf16.mxu0 0
      %2394 = vmatmul.mubr.bf16.gmra.mxu0 %v2130
      %v2395 = vpop.f32.mrf.mxu0
      %v2396 = vadd.f32 %v2283, %v2395
      %v2397 = vpop.f32.mrf.mxu0
      %v2398 = vpop.f32.mrf.mxu0
      %v2399 = vadd.f32 %v2286, %v2398
      %v2400 = vpop.f32.mrf.mxu0
      %2401 = vdwg.mxu0
      %v2402 = vld [vmem:[#allocation3 + $0x2] sm:$0xff]
      %v2403 = vld [vmem:[#allocation3 + $0xa] sm:$0xff]
      %v2404 = vld [vmem:[#allocation3 + $0x12] sm:$0xff]
      %v2405 = vld [vmem:[#allocation3 + $0x1a] sm:$0xff]
      %v2406 = vld [vmem:[#allocation3 + $0x22] sm:$0xff]
      %v2407 = vld [vmem:[#allocation3 + $0x2a] sm:$0xff]
      %v2408 = vld [vmem:[#allocation3 + $0x32] sm:$0xff]
      %v2409 = vld [vmem:[#allocation3 + $0x3a] sm:$0xf]
      %v2410 = vpack.c.bf16 %v2403, %v2402
      %v2411 = vpack.c.bf16 %v2405, %v2404
      %v2412 = vpack.c.bf16 %v2407, %v2406
      %v2413 = vpack.c.bf16 %v2409, %v2408
      %s2414 = scalar_lea.vmem %s5, 128
      %v2415 = vld [vmem:[%s2414] sm:$0xf]
      %v2416 = vld [vmem:[%s2414 + $0x4] sm:$0xf]
      %v2417 = vld [vmem:[%s2414 + $0x8] sm:$0xf]
      %v2418 = vld [vmem:[%s2414 + $0xc] sm:$0xf]
      %v2419 = vld [vmem:[%s2414 + $0x10] sm:$0xf]
      %v2420 = vld [vmem:[%s2414 + $0x14] sm:$0xf]
      %v2421 = vld [vmem:[%s2414 + $0x18] sm:$0xf]
      %v2422 = vld [vmem:[%s2414 + $0x1c] sm:$0xf]
      %v2423 = vld [vmem:[%s2414 + $0x20] sm:$0xf]
      %v2424 = vld [vmem:[%s2414 + $0x24] sm:$0xf]
      %v2425 = vld [vmem:[%s2414 + $0x28] sm:$0xf]
      %v2426 = vld [vmem:[%s2414 + $0x2c] sm:$0xf]
      %v2427 = vld [vmem:[%s2414 + $0x30] sm:$0xf]
      %v2428 = vld [vmem:[%s2414 + $0x34] sm:$0xf]
      %v2429 = vld [vmem:[%s2414 + $0x38] sm:$0xf]
      %v2430 = vld [vmem:[%s2414 + $0x3c] sm:$0xf]
      %v2447 = vunpack.c.l.b16 %v2415
      %v2448 = vunpack.c.l.b16 %v2416
      %v2449 = vunpack.c.l.b16 %v2417
      %v2450 = vunpack.c.l.b16 %v2418
      %v2451 = vunpack.c.l.b16 %v2419
      %v2452 = vunpack.c.l.b16 %v2420
      %v2453 = vunpack.c.l.b16 %v2421
      %v2454 = vunpack.c.l.b16 %v2422
      %v2455 = vunpack.c.l.b16 %v2423
      %v2456 = vunpack.c.l.b16 %v2424
      %v2457 = vunpack.c.l.b16 %v2425
      %v2458 = vunpack.c.l.b16 %v2426
      %v2459 = vunpack.c.l.b16 %v2427
      %v2460 = vunpack.c.l.b16 %v2428
      %v2461 = vunpack.c.l.b16 %v2429
      %v2462 = vunpack.c.l.b16 %v2430
      %v2463 = vpack.c.b16 %v2448, %v2447
      %v2464 = vpack.c.b16 %v2450, %v2449
      %v2465 = vpack.c.b16 %v2452, %v2451
      %v2466 = vpack.c.b16 %v2454, %v2453
      %v2467 = vpack.c.b16 %v2456, %v2455
      %v2468 = vpack.c.b16 %v2458, %v2457
      %v2469 = vpack.c.b16 %v2460, %v2459
      %v2470 = vpack.c.b16 %v2462, %v2461
      %2479 = vmatprep.subr.bf16.mxu0 0
      %2480 = vmatpush1.bf16.msra.mxu0 %v2470
      %2481 = vmatprep.subr.bf16.mxu0 0
      %2482 = vmatpush1.bf16.msra.mxu0 %v2469
      %2483 = vmatprep.subr.bf16.mxu0 0
      %2484 = vmatpush1.bf16.msra.mxu0 %v2468
      %2485 = vmatprep.subr.bf16.mxu0 0
      %2486 = vmatpush1.bf16.msra.mxu0 %v2467
      %2487 = vmatprep.subr.bf16.mxu0 0
      %2488 = vmatpush1.bf16.msra.mxu0 %v2466
      %2489 = vmatprep.subr.bf16.mxu0 0
      %2490 = vmatpush1.bf16.msra.mxu0 %v2465
      %2491 = vmatprep.subr.bf16.mxu0 0
      %2492 = vmatpush1.bf16.msra.mxu0 %v2464
      %2493 = vmatprep.subr.bf16.mxu0 0
      %2494 = vmatpush1.bf16.msra.mxu0 %v2463
      %2495 = vmatprep.subr.bf16.mxu0 0
      %2496 = vmatpush2.bf16.msra.mxu0 0
      %2497 = vmatprep.subr.bf16.mxu0 0
      %2498 = vmatpush2.bf16.msra.mxu0 0
      %2499 = vmatprep.subr.bf16.mxu0 0
      %2500 = vmatpush2.bf16.msra.mxu0 0
      %2501 = vmatprep.subr.bf16.mxu0 0
      %2502 = vmatpush2.bf16.msra.mxu0 0
      %2503 = vmatprep.subr.bf16.mxu0 0
      %2504 = vmatpush2.bf16.msra.mxu0 0
      %2505 = vmatprep.subr.bf16.mxu0 0
      %2506 = vmatpush2.bf16.msra.mxu0 0
      %2507 = vmatprep.subr.bf16.mxu0 0
      %2508 = vmatpush2.bf16.msra.mxu0 0
      %2509 = vmatprep.subr.bf16.mxu0 0
      %2510 = vmatpush2.bf16.msra.mxu0 0
      %2511 = vmatprep.mubr.bf16.mxu0 0
      %2512 = vmatmul.mubr.bf16.gmra.mxu0 %v2410
      %v2513 = vpop.f32.mrf.mxu0
      %v2514 = vadd.f32 0.0, %v2513
      %v2515 = vpop.f32.mrf.mxu0
      %v2516 = vpop.f32.mrf.mxu0
      %v2517 = vadd.f32 0.0, %v2516
      %v2518 = vpop.f32.mrf.mxu0
      %2519 = vmatprep.mubr.bf16.mxu0 0
      %2520 = vmatmul.mubr.bf16.gmra.mxu0 %v2411
      %v2521 = vpop.f32.mrf.mxu0
      %v2522 = vadd.f32 0.0, %v2521
      %v2523 = vpop.f32.mrf.mxu0
      %v2524 = vpop.f32.mrf.mxu0
      %v2525 = vadd.f32 0.0, %v2524
      %v2526 = vpop.f32.mrf.mxu0
      %2527 = vmatprep.mubr.bf16.mxu0 0
      %2528 = vmatmul.mubr.bf16.gmra.mxu0 %v2412
      %v2529 = vpop.f32.mrf.mxu0
      %v2530 = vadd.f32 0.0, %v2529
      %v2531 = vpop.f32.mrf.mxu0
      %v2532 = vpop.f32.mrf.mxu0
      %v2533 = vadd.f32 0.0, %v2532
      %v2534 = vpop.f32.mrf.mxu0
      %2535 = vmatprep.mubr.bf16.mxu0 0
      %2536 = vmatmul.mubr.bf16.gmra.mxu0 %v2413
      %v2537 = vpop.f32.mrf.mxu0
      %v2538 = vadd.f32 0.0, %v2537
      %v2539 = vpop.f32.mrf.mxu0
      %v2540 = vpop.f32.mrf.mxu0
      %v2541 = vadd.f32 0.0, %v2540
      %v2542 = vpop.f32.mrf.mxu0
      %2543 = vdwg.mxu0
      %v2544 = vadd.f32 %v2372, %v2514
      %v2545 = vadd.f32 %v2375, %v2517
      %v2546 = vadd.f32 %v2380, %v2522
      %v2547 = vadd.f32 %v2383, %v2525
      %v2548 = vadd.f32 %v2388, %v2530
      %v2549 = vadd.f32 %v2391, %v2533
      %v2550 = vadd.f32 %v2396, %v2538
      %v2551 = vadd.f32 %v2399, %v2541
      %v2552 = vld [vmem:[#allocation3 + $0xa] sm:$0xff]
      %v2553 = vld [vmem:[#allocation3 + $0x12] sm:$0xff]
      %v2554 = vld [vmem:[#allocation3 + $0x1a] sm:$0xff]
      %v2555 = vld [vmem:[#allocation3 + $0x22] sm:$0xff]
      %v2556 = vld [vmem:[#allocation3 + $0x2a] sm:$0xff]
      %v2557 = vld [vmem:[#allocation3 + $0x32] sm:$0xff]
      %v2558 = vld [vmem:[#allocation3 + $0x3a] sm:$0xff]
      %v2559 = vld [vmem:[#allocation3 + $0x42] sm:$0xf]
      %v2560 = vpack.c.bf16 %v2553, %v2552
      %v2561 = vpack.c.bf16 %v2555, %v2554
      %v2562 = vpack.c.bf16 %v2557, %v2556
      %v2563 = vpack.c.bf16 %v2559, %v2558
      %s2564 = scalar_lea.vmem %s5, 192
      %v2565 = vld [vmem:[%s2564] sm:$0xf]
      %v2566 = vld [vmem:[%s2564 + $0x4] sm:$0xf]
      %v2567 = vld [vmem:[%s2564 + $0x8] sm:$0xf]
      %v2568 = vld [vmem:[%s2564 + $0xc] sm:$0xf]
      %v2569 = vld [vmem:[%s2564 + $0x10] sm:$0xf]
      %v2570 = vld [vmem:[%s2564 + $0x14] sm:$0xf]
      %v2571 = vld [vmem:[%s2564 + $0x18] sm:$0xf]
      %v2572 = vld [vmem:[%s2564 + $0x1c] sm:$0xf]
      %v2573 = vld [vmem:[%s2564 + $0x20] sm:$0xf]
      %v2574 = vld [vmem:[%s2564 + $0x24] sm:$0xf]
      %v2575 = vld [vmem:[%s2564 + $0x28] sm:$0xf]
      %v2576 = vld [vmem:[%s2564 + $0x2c] sm:$0xf]
      %v2577 = vld [vmem:[%s2564 + $0x30] sm:$0xf]
      %v2578 = vld [vmem:[%s2564 + $0x34] sm:$0xf]
      %v2579 = vld [vmem:[%s2564 + $0x38] sm:$0xf]
      %v2580 = vld [vmem:[%s2564 + $0x3c] sm:$0xf]
      %v2597 = vunpack.c.l.b16 %v2565
      %v2598 = vunpack.c.l.b16 %v2566
      %v2599 = vunpack.c.l.b16 %v2567
      %v2600 = vunpack.c.l.b16 %v2568
      %v2601 = vunpack.c.l.b16 %v2569
      %v2602 = vunpack.c.l.b16 %v2570
      %v2603 = vunpack.c.l.b16 %v2571
      %v2604 = vunpack.c.l.b16 %v2572
      %v2605 = vunpack.c.l.b16 %v2573
      %v2606 = vunpack.c.l.b16 %v2574
      %v2607 = vunpack.c.l.b16 %v2575
      %v2608 = vunpack.c.l.b16 %v2576
      %v2609 = vunpack.c.l.b16 %v2577
      %v2610 = vunpack.c.l.b16 %v2578
      %v2611 = vunpack.c.l.b16 %v2579
      %v2612 = vunpack.c.l.b16 %v2580
      %v2613 = vpack.c.b16 %v2598, %v2597
      %v2614 = vpack.c.b16 %v2600, %v2599
      %v2615 = vpack.c.b16 %v2602, %v2601
      %v2616 = vpack.c.b16 %v2604, %v2603
      %v2617 = vpack.c.b16 %v2606, %v2605
      %v2618 = vpack.c.b16 %v2608, %v2607
      %v2619 = vpack.c.b16 %v2610, %v2609
      %v2620 = vpack.c.b16 %v2612, %v2611
      %2629 = vmatprep.subr.bf16.mxu0 0
      %2630 = vmatpush1.bf16.msra.mxu0 %v2620
      %2631 = vmatprep.subr.bf16.mxu0 0
      %2632 = vmatpush1.bf16.msra.mxu0 %v2619
      %2633 = vmatprep.subr.bf16.mxu0 0
      %2634 = vmatpush1.bf16.msra.mxu0 %v2618
      %2635 = vmatprep.subr.bf16.mxu0 0
      %2636 = vmatpush1.bf16.msra.mxu0 %v2617
      %2637 = vmatprep.subr.bf16.mxu0 0
      %2638 = vmatpush1.bf16.msra.mxu0 %v2616
      %2639 = vmatprep.subr.bf16.mxu0 0
      %2640 = vmatpush1.bf16.msra.mxu0 %v2615
      %2641 = vmatprep.subr.bf16.mxu0 0
      %2642 = vmatpush1.bf16.msra.mxu0 %v2614
      %2643 = vmatprep.subr.bf16.mxu0 0
      %2644 = vmatpush1.bf16.msra.mxu0 %v2613
      %2645 = vmatprep.subr.bf16.mxu0 0
      %2646 = vmatpush2.bf16.msra.mxu0 0
      %2647 = vmatprep.subr.bf16.mxu0 0
      %2648 = vmatpush2.bf16.msra.mxu0 0
      %2649 = vmatprep.subr.bf16.mxu0 0
      %2650 = vmatpush2.bf16.msra.mxu0 0
      %2651 = vmatprep.subr.bf16.mxu0 0
      %2652 = vmatpush2.bf16.msra.mxu0 0
      %2653 = vmatprep.subr.bf16.mxu0 0
      %2654 = vmatpush2.bf16.msra.mxu0 0
      %2655 = vmatprep.subr.bf16.mxu0 0
      %2656 = vmatpush2.bf16.msra.mxu0 0
      %2657 = vmatprep.subr.bf16.mxu0 0
      %2658 = vmatpush2.bf16.msra.mxu0 0
      %2659 = vmatprep.subr.bf16.mxu0 0
      %2660 = vmatpush2.bf16.msra.mxu0 0
      %2661 = vmatprep.mubr.bf16.mxu0 0
      %2662 = vmatmul.mubr.bf16.gmra.mxu0 %v2560
      %v2663 = vpop.f32.mrf.mxu0
      %v2664 = vadd.f32 0.0, %v2663
      %v2665 = vpop.f32.mrf.mxu0
      %v2666 = vpop.f32.mrf.mxu0
      %v2667 = vadd.f32 0.0, %v2666
      %v2668 = vpop.f32.mrf.mxu0
      %2669 = vmatprep.mubr.bf16.mxu0 0
      %2670 = vmatmul.mubr.bf16.gmra.mxu0 %v2561
      %v2671 = vpop.f32.mrf.mxu0
      %v2672 = vadd.f32 0.0, %v2671
      %v2673 = vpop.f32.mrf.mxu0
      %v2674 = vpop.f32.mrf.mxu0
      %v2675 = vadd.f32 0.0, %v2674
      %v2676 = vpop.f32.mrf.mxu0
      %2677 = vmatprep.mubr.bf16.mxu0 0
      %2678 = vmatmul.mubr.bf16.gmra.mxu0 %v2562
      %v2679 = vpop.f32.mrf.mxu0
      %v2680 = vadd.f32 0.0, %v2679
      %v2681 = vpop.f32.mrf.mxu0
      %v2682 = vpop.f32.mrf.mxu0
      %v2683 = vadd.f32 0.0, %v2682
      %v2684 = vpop.f32.mrf.mxu0
      %2685 = vmatprep.mubr.bf16.mxu0 0
      %2686 = vmatmul.mubr.bf16.gmra.mxu0 %v2563
      %v2687 = vpop.f32.mrf.mxu0
      %v2688 = vadd.f32 0.0, %v2687
      %v2689 = vpop.f32.mrf.mxu0
      %v2690 = vpop.f32.mrf.mxu0
      %v2691 = vadd.f32 0.0, %v2690
      %v2692 = vpop.f32.mrf.mxu0
      %2693 = vdwg.mxu0
      %v2694 = vadd.f32 %v2544, %v2664
      %v2695 = vadd.f32 %v2545, %v2667
      %v2696 = vadd.f32 %v2546, %v2672
      %v2697 = vadd.f32 %v2547, %v2675
      %v2698 = vadd.f32 %v2548, %v2680
      %v2699 = vadd.f32 %v2549, %v2683
      %v2700 = vadd.f32 %v2550, %v2688
      %v2701 = vadd.f32 %v2551, %v2691
      %v2702 = vld [vmem:[#allocation3 + $0xb] sm:$0xff]
      %v2703 = vld [vmem:[#allocation3 + $0x13] sm:$0xff]
      %v2704 = vld [vmem:[#allocation3 + $0x1b] sm:$0xff]
      %v2705 = vld [vmem:[#allocation3 + $0x23] sm:$0xff]
      %v2706 = vld [vmem:[#allocation3 + $0x2b] sm:$0xff]
      %v2707 = vld [vmem:[#allocation3 + $0x33] sm:$0xff]
      %v2708 = vld [vmem:[#allocation3 + $0x3b] sm:$0xff]
      %v2709 = vld [vmem:[#allocation3 + $0x43] sm:$0xf]
      %v2710 = vpack.c.bf16 %v2703, %v2702
      %v2711 = vpack.c.bf16 %v2705, %v2704
      %v2712 = vpack.c.bf16 %v2707, %v2706
      %v2713 = vpack.c.bf16 %v2709, %v2708
      %s2714 = scalar_lea.vmem %s5, 256
      %v2715 = vld [vmem:[%s2714] sm:$0xf]
      %v2716 = vld [vmem:[%s2714 + $0x4] sm:$0xf]
      %v2717 = vld [vmem:[%s2714 + $0x8] sm:$0xf]
      %v2718 = vld [vmem:[%s2714 + $0xc] sm:$0xf]
      %v2719 = vld [vmem:[%s2714 + $0x10] sm:$0xf]
      %v2720 = vld [vmem:[%s2714 + $0x14] sm:$0xf]
      %v2721 = vld [vmem:[%s2714 + $0x18] sm:$0xf]
      %v2722 = vld [vmem:[%s2714 + $0x1c] sm:$0xf]
      %v2723 = vld [vmem:[%s2714 + $0x20] sm:$0xf]
      %v2724 = vld [vmem:[%s2714 + $0x24] sm:$0xf]
      %v2725 = vld [vmem:[%s2714 + $0x28] sm:$0xf]
      %v2726 = vld [vmem:[%s2714 + $0x2c] sm:$0xf]
      %v2727 = vld [vmem:[%s2714 + $0x30] sm:$0xf]
      %v2728 = vld [vmem:[%s2714 + $0x34] sm:$0xf]
      %v2729 = vld [vmem:[%s2714 + $0x38] sm:$0xf]
      %v2730 = vld [vmem:[%s2714 + $0x3c] sm:$0xf]
      %v2747 = vunpack.c.l.b16 %v2715
      %v2748 = vunpack.c.l.b16 %v2716
      %v2749 = vunpack.c.l.b16 %v2717
      %v2750 = vunpack.c.l.b16 %v2718
      %v2751 = vunpack.c.l.b16 %v2719
      %v2752 = vunpack.c.l.b16 %v2720
      %v2753 = vunpack.c.l.b16 %v2721
      %v2754 = vunpack.c.l.b16 %v2722
      %v2755 = vunpack.c.l.b16 %v2723
      %v2756 = vunpack.c.l.b16 %v2724
      %v2757 = vunpack.c.l.b16 %v2725
      %v2758 = vunpack.c.l.b16 %v2726
      %v2759 = vunpack.c.l.b16 %v2727
      %v2760 = vunpack.c.l.b16 %v2728
      %v2761 = vunpack.c.l.b16 %v2729
      %v2762 = vunpack.c.l.b16 %v2730
      %v2763 = vpack.c.b16 %v2748, %v2747
      %v2764 = vpack.c.b16 %v2750, %v2749
      %v2765 = vpack.c.b16 %v2752, %v2751
      %v2766 = vpack.c.b16 %v2754, %v2753
      %v2767 = vpack.c.b16 %v2756, %v2755
      %v2768 = vpack.c.b16 %v2758, %v2757
      %v2769 = vpack.c.b16 %v2760, %v2759
      %v2770 = vpack.c.b16 %v2762, %v2761
      %2779 = vmatprep.subr.bf16.mxu0 0
      %2780 = vmatpush1.bf16.msra.mxu0 %v2770
      %2781 = vmatprep.subr.bf16.mxu0 0
      %2782 = vmatpush1.bf16.msra.mxu0 %v2769
      %2783 = vmatprep.subr.bf16.mxu0 0
      %2784 = vmatpush1.bf16.msra.mxu0 %v2768
      %2785 = vmatprep.subr.bf16.mxu0 0
      %2786 = vmatpush1.bf16.msra.mxu0 %v2767
      %2787 = vmatprep.subr.bf16.mxu0 0
      %2788 = vmatpush1.bf16.msra.mxu0 %v2766
      %2789 = vmatprep.subr.bf16.mxu0 0
      %2790 = vmatpush1.bf16.msra.mxu0 %v2765
      %2791 = vmatprep.subr.bf16.mxu0 0
      %2792 = vmatpush1.bf16.msra.mxu0 %v2764
      %2793 = vmatprep.subr.bf16.mxu0 0
      %2794 = vmatpush1.bf16.msra.mxu0 %v2763
      %2795 = vmatprep.subr.bf16.mxu0 0
      %2796 = vmatpush2.bf16.msra.mxu0 0
      %2797 = vmatprep.subr.bf16.mxu0 0
      %2798 = vmatpush2.bf16.msra.mxu0 0
      %2799 = vmatprep.subr.bf16.mxu0 0
      %2800 = vmatpush2.bf16.msra.mxu0 0
      %2801 = vmatprep.subr.bf16.mxu0 0
      %2802 = vmatpush2.bf16.msra.mxu0 0
      %2803 = vmatprep.subr.bf16.mxu0 0
      %2804 = vmatpush2.bf16.msra.mxu0 0
      %2805 = vmatprep.subr.bf16.mxu0 0
      %2806 = vmatpush2.bf16.msra.mxu0 0
      %2807 = vmatprep.subr.bf16.mxu0 0
      %2808 = vmatpush2.bf16.msra.mxu0 0
      %2809 = vmatprep.subr.bf16.mxu0 0
      %2810 = vmatpush2.bf16.msra.mxu0 0
      %2811 = vmatprep.mubr.bf16.mxu0 0
      %2812 = vmatmul.mubr.bf16.gmra.mxu0 %v2710
      %v2813 = vpop.f32.mrf.mxu0
      %v2814 = vadd.f32 0.0, %v2813
      %v2815 = vpop.f32.mrf.mxu0
      %v2816 = vpop.f32.mrf.mxu0
      %v2817 = vadd.f32 0.0, %v2816
      %v2818 = vpop.f32.mrf.mxu0
      %2819 = vmatprep.mubr.bf16.mxu0 0
      %2820 = vmatmul.mubr.bf16.gmra.mxu0 %v2711
      %v2821 = vpop.f32.mrf.mxu0
      %v2822 = vadd.f32 0.0, %v2821
      %v2823 = vpop.f32.mrf.mxu0
      %v2824 = vpop.f32.mrf.mxu0
      %v2825 = vadd.f32 0.0, %v2824
      %v2826 = vpop.f32.mrf.mxu0
      %2827 = vmatprep.mubr.bf16.mxu0 0
      %2828 = vmatmul.mubr.bf16.gmra.mxu0 %v2712
      %v2829 = vpop.f32.mrf.mxu0
      %v2830 = vadd.f32 0.0, %v2829
      %v2831 = vpop.f32.mrf.mxu0
      %v2832 = vpop.f32.mrf.mxu0
      %v2833 = vadd.f32 0.0, %v2832
      %v2834 = vpop.f32.mrf.mxu0
      %2835 = vmatprep.mubr.bf16.mxu0 0
      %2836 = vmatmul.mubr.bf16.gmra.mxu0 %v2713
      %v2837 = vpop.f32.mrf.mxu0
      %v2838 = vadd.f32 0.0, %v2837
      %v2839 = vpop.f32.mrf.mxu0
      %v2840 = vpop.f32.mrf.mxu0
      %v2841 = vadd.f32 0.0, %v2840
      %v2842 = vpop.f32.mrf.mxu0
      %2843 = vdwg.mxu0
      %v2844 = vadd.f32 %v2694, %v2814
      %v2845 = vadd.f32 %v2695, %v2817
      %v2846 = vadd.f32 %v2696, %v2822
      %v2847 = vadd.f32 %v2697, %v2825
      %v2848 = vadd.f32 %v2698, %v2830
      %v2849 = vadd.f32 %v2699, %v2833
      %v2850 = vadd.f32 %v2700, %v2838
      %v2851 = vadd.f32 %v2701, %v2841
      %v2852 = vld [vmem:[#allocation3 + $0xc] sm:$0xff]
      %v2853 = vld [vmem:[#allocation3 + $0x14] sm:$0xff]
      %v2854 = vld [vmem:[#allocation3 + $0x1c] sm:$0xff]
      %v2855 = vld [vmem:[#allocation3 + $0x24] sm:$0xff]
      %v2856 = vld [vmem:[#allocation3 + $0x2c] sm:$0xff]
      %v2857 = vld [vmem:[#allocation3 + $0x34] sm:$0xff]
      %v2858 = vld [vmem:[#allocation3 + $0x3c] sm:$0xff]
      %v2859 = vld [vmem:[#allocation3 + $0x44] sm:$0xf]
      %v2860 = vpack.c.bf16 %v2853, %v2852
      %v2861 = vpack.c.bf16 %v2855, %v2854
      %v2862 = vpack.c.bf16 %v2857, %v2856
      %v2863 = vpack.c.bf16 %v2859, %v2858
      %s2864 = scalar_lea.vmem %s5, 320
      %v2865 = vld [vmem:[%s2864] sm:$0xf]
      %v2866 = vld [vmem:[%s2864 + $0x4] sm:$0xf]
      %v2867 = vld [vmem:[%s2864 + $0x8] sm:$0xf]
      %v2868 = vld [vmem:[%s2864 + $0xc] sm:$0xf]
      %v2869 = vld [vmem:[%s2864 + $0x10] sm:$0xf]
      %v2870 = vld [vmem:[%s2864 + $0x14] sm:$0xf]
      %v2871 = vld [vmem:[%s2864 + $0x18] sm:$0xf]
      %v2872 = vld [vmem:[%s2864 + $0x1c] sm:$0xf]
      %v2873 = vld [vmem:[%s2864 + $0x20] sm:$0xf]
      %v2874 = vld [vmem:[%s2864 + $0x24] sm:$0xf]
      %v2875 = vld [vmem:[%s2864 + $0x28] sm:$0xf]
      %v2876 = vld [vmem:[%s2864 + $0x2c] sm:$0xf]
      %v2877 = vld [vmem:[%s2864 + $0x30] sm:$0xf]
      %v2878 = vld [vmem:[%s2864 + $0x34] sm:$0xf]
      %v2879 = vld [vmem:[%s2864 + $0x38] sm:$0xf]
      %v2880 = vld [vmem:[%s2864 + $0x3c] sm:$0xf]
      %v2897 = vunpack.c.l.b16 %v2865
      %v2898 = vunpack.c.l.b16 %v2866
      %v2899 = vunpack.c.l.b16 %v2867
      %v2900 = vunpack.c.l.b16 %v2868
      %v2901 = vunpack.c.l.b16 %v2869
      %v2902 = vunpack.c.l.b16 %v2870
      %v2903 = vunpack.c.l.b16 %v2871
      %v2904 = vunpack.c.l.b16 %v2872
      %v2905 = vunpack.c.l.b16 %v2873
      %v2906 = vunpack.c.l.b16 %v2874
      %v2907 = vunpack.c.l.b16 %v2875
      %v2908 = vunpack.c.l.b16 %v2876
      %v2909 = vunpack.c.l.b16 %v2877
      %v2910 = vunpack.c.l.b16 %v2878
      %v2911 = vunpack.c.l.b16 %v2879
      %v2912 = vunpack.c.l.b16 %v2880
      %v2913 = vpack.c.b16 %v2898, %v2897
      %v2914 = vpack.c.b16 %v2900, %v2899
      %v2915 = vpack.c.b16 %v2902, %v2901
      %v2916 = vpack.c.b16 %v2904, %v2903
      %v2917 = vpack.c.b16 %v2906, %v2905
      %v2918 = vpack.c.b16 %v2908, %v2907
      %v2919 = vpack.c.b16 %v2910, %v2909
      %v2920 = vpack.c.b16 %v2912, %v2911
      %2929 = vmatprep.subr.bf16.mxu0 0
      %2930 = vmatpush1.bf16.msra.mxu0 %v2920
      %2931 = vmatprep.subr.bf16.mxu0 0
      %2932 = vmatpush1.bf16.msra.mxu0 %v2919
      %2933 = vmatprep.subr.bf16.mxu0 0
      %2934 = vmatpush1.bf16.msra.mxu0 %v2918
      %2935 = vmatprep.subr.bf16.mxu0 0
      %2936 = vmatpush1.bf16.msra.mxu0 %v2917
      %2937 = vmatprep.subr.bf16.mxu0 0
      %2938 = vmatpush1.bf16.msra.mxu0 %v2916
      %2939 = vmatprep.subr.bf16.mxu0 0
      %2940 = vmatpush1.bf16.msra.mxu0 %v2915
      %2941 = vmatprep.subr.bf16.mxu0 0
      %2942 = vmatpush1.bf16.msra.mxu0 %v2914
      %2943 = vmatprep.subr.bf16.mxu0 0
      %2944 = vmatpush1.bf16.msra.mxu0 %v2913
      %2945 = vmatprep.subr.bf16.mxu0 0
      %2946 = vmatpush2.bf16.msra.mxu0 0
      %2947 = vmatprep.subr.bf16.mxu0 0
      %2948 = vmatpush2.bf16.msra.mxu0 0
      %2949 = vmatprep.subr.bf16.mxu0 0
      %2950 = vmatpush2.bf16.msra.mxu0 0
      %2951 = vmatprep.subr.bf16.mxu0 0
      %2952 = vmatpush2.bf16.msra.mxu0 0
      %2953 = vmatprep.subr.bf16.mxu0 0
      %2954 = vmatpush2.bf16.msra.mxu0 0
      %2955 = vmatprep.subr.bf16.mxu0 0
      %2956 = vmatpush2.bf16.msra.mxu0 0
      %2957 = vmatprep.subr.bf16.mxu0 0
      %2958 = vmatpush2.bf16.msra.mxu0 0
      %2959 = vmatprep.subr.bf16.mxu0 0
      %2960 = vmatpush2.bf16.msra.mxu0 0
      %2961 = vmatprep.mubr.bf16.mxu0 0
      %2962 = vmatmul.mubr.bf16.gmra.mxu0 %v2860
      %v2963 = vpop.f32.mrf.mxu0
      %v2964 = vadd.f32 0.0, %v2963
      %v2965 = vpop.f32.mrf.mxu0
      %v2966 = vpop.f32.mrf.mxu0
      %v2967 = vadd.f32 0.0, %v2966
      %v2968 = vpop.f32.mrf.mxu0
      %2969 = vmatprep.mubr.bf16.mxu0 0
      %2970 = vmatmul.mubr.bf16.gmra.mxu0 %v2861
      %v2971 = vpop.f32.mrf.mxu0
      %v2972 = vadd.f32 0.0, %v2971
      %v2973 = vpop.f32.mrf.mxu0
      %v2974 = vpop.f32.mrf.mxu0
      %v2975 = vadd.f32 0.0, %v2974
      %v2976 = vpop.f32.mrf.mxu0
      %2977 = vmatprep.mubr.bf16.mxu0 0
      %2978 = vmatmul.mubr.bf16.gmra.mxu0 %v2862
      %v2979 = vpop.f32.mrf.mxu0
      %v2980 = vadd.f32 0.0, %v2979
      %v2981 = vpop.f32.mrf.mxu0
      %v2982 = vpop.f32.mrf.mxu0
      %v2983 = vadd.f32 0.0, %v2982
      %v2984 = vpop.f32.mrf.mxu0
      %2985 = vmatprep.mubr.bf16.mxu0 0
      %2986 = vmatmul.mubr.bf16.gmra.mxu0 %v2863
      %v2987 = vpop.f32.mrf.mxu0
      %v2988 = vadd.f32 0.0, %v2987
      %v2989 = vpop.f32.mrf.mxu0
      %v2990 = vpop.f32.mrf.mxu0
      %v2991 = vadd.f32 0.0, %v2990
      %v2992 = vpop.f32.mrf.mxu0
      %2993 = vdwg.mxu0
      %v2994 = vadd.f32 %v2844, %v2964
      %v2995 = vadd.f32 %v2845, %v2967
      %v2996 = vadd.f32 %v2846, %v2972
      %v2997 = vadd.f32 %v2847, %v2975
      %v2998 = vadd.f32 %v2848, %v2980
      %v2999 = vadd.f32 %v2849, %v2983
      %v3000 = vadd.f32 %v2850, %v2988
      %v3001 = vadd.f32 %v2851, %v2991
      %v3002 = vld [vmem:[#allocation3 + $0x14] sm:$0xff]
      %v3003 = vld [vmem:[#allocation3 + $0x1c] sm:$0xff]
      %v3004 = vld [vmem:[#allocation3 + $0x24] sm:$0xff]
      %v3005 = vld [vmem:[#allocation3 + $0x2c] sm:$0xff]
      %v3006 = vld [vmem:[#allocation3 + $0x34] sm:$0xff]
      %v3007 = vld [vmem:[#allocation3 + $0x3c] sm:$0xff]
      %v3008 = vld [vmem:[#allocation3 + $0x44] sm:$0xff]
      %v3009 = vld [vmem:[#allocation3 + $0x4c] sm:$0xf]
      %v3010 = vpack.c.bf16 %v3003, %v3002
      %v3011 = vpack.c.bf16 %v3005, %v3004
      %v3012 = vpack.c.bf16 %v3007, %v3006
      %v3013 = vpack.c.bf16 %v3009, %v3008
      %s3014 = scalar_lea.vmem %s5, 384
      %v3015 = vld [vmem:[%s3014] sm:$0xf]
      %v3016 = vld [vmem:[%s3014 + $0x4] sm:$0xf]
      %v3017 = vld [vmem:[%s3014 + $0x8] sm:$0xf]
      %v3018 = vld [vmem:[%s3014 + $0xc] sm:$0xf]
      %v3019 = vld [vmem:[%s3014 + $0x10] sm:$0xf]
      %v3020 = vld [vmem:[%s3014 + $0x14] sm:$0xf]
      %v3021 = vld [vmem:[%s3014 + $0x18] sm:$0xf]
      %v3022 = vld [vmem:[%s3014 + $0x1c] sm:$0xf]
      %v3023 = vld [vmem:[%s3014 + $0x20] sm:$0xf]
      %v3024 = vld [vmem:[%s3014 + $0x24] sm:$0xf]
      %v3025 = vld [vmem:[%s3014 + $0x28] sm:$0xf]
      %v3026 = vld [vmem:[%s3014 + $0x2c] sm:$0xf]
      %v3027 = vld [vmem:[%s3014 + $0x30] sm:$0xf]
      %v3028 = vld [vmem:[%s3014 + $0x34] sm:$0xf]
      %v3029 = vld [vmem:[%s3014 + $0x38] sm:$0xf]
      %v3030 = vld [vmem:[%s3014 + $0x3c] sm:$0xf]
      %v3047 = vunpack.c.l.b16 %v3015
      %v3048 = vunpack.c.l.b16 %v3016
      %v3049 = vunpack.c.l.b16 %v3017
      %v3050 = vunpack.c.l.b16 %v3018
      %v3051 = vunpack.c.l.b16 %v3019
      %v3052 = vunpack.c.l.b16 %v3020
      %v3053 = vunpack.c.l.b16 %v3021
      %v3054 = vunpack.c.l.b16 %v3022
      %v3055 = vunpack.c.l.b16 %v3023
      %v3056 = vunpack.c.l.b16 %v3024
      %v3057 = vunpack.c.l.b16 %v3025
      %v3058 = vunpack.c.l.b16 %v3026
      %v3059 = vunpack.c.l.b16 %v3027
      %v3060 = vunpack.c.l.b16 %v3028
      %v3061 = vunpack.c.l.b16 %v3029
      %v3062 = vunpack.c.l.b16 %v3030
      %v3063 = vpack.c.b16 %v3048, %v3047
      %v3064 = vpack.c.b16 %v3050, %v3049
      %v3065 = vpack.c.b16 %v3052, %v3051
      %v3066 = vpack.c.b16 %v3054, %v3053
      %v3067 = vpack.c.b16 %v3056, %v3055
      %v3068 = vpack.c.b16 %v3058, %v3057
      %v3069 = vpack.c.b16 %v3060, %v3059
      %v3070 = vpack.c.b16 %v3062, %v3061
      %3079 = vmatprep.subr.bf16.mxu0 0
      %3080 = vmatpush1.bf16.msra.mxu0 %v3070
      %3081 = vmatprep.subr.bf16.mxu0 0
      %3082 = vmatpush1.bf16.msra.mxu0 %v3069
      %3083 = vmatprep.subr.bf16.mxu0 0
      %3084 = vmatpush1.bf16.msra.mxu0 %v3068
      %3085 = vmatprep.subr.bf16.mxu0 0
      %3086 = vmatpush1.bf16.msra.mxu0 %v3067
      %3087 = vmatprep.subr.bf16.mxu0 0
      %3088 = vmatpush1.bf16.msra.mxu0 %v3066
      %3089 = vmatprep.subr.bf16.mxu0 0
      %3090 = vmatpush1.bf16.msra.mxu0 %v3065
      %3091 = vmatprep.subr.bf16.mxu0 0
      %3092 = vmatpush1.bf16.msra.mxu0 %v3064
      %3093 = vmatprep.subr.bf16.mxu0 0
      %3094 = vmatpush1.bf16.msra.mxu0 %v3063
      %3095 = vmatprep.subr.bf16.mxu0 0
      %3096 = vmatpush2.bf16.msra.mxu0 0
      %3097 = vmatprep.subr.bf16.mxu0 0
      %3098 = vmatpush2.bf16.msra.mxu0 0
      %3099 = vmatprep.subr.bf16.mxu0 0
      %3100 = vmatpush2.bf16.msra.mxu0 0
      %3101 = vmatprep.subr.bf16.mxu0 0
      %3102 = vmatpush2.bf16.msra.mxu0 0
      %3103 = vmatprep.subr.bf16.mxu0 0
      %3104 = vmatpush2.bf16.msra.mxu0 0
      %3105 = vmatprep.subr.bf16.mxu0 0
      %3106 = vmatpush2.bf16.msra.mxu0 0
      %3107 = vmatprep.subr.bf16.mxu0 0
      %3108 = vmatpush2.bf16.msra.mxu0 0
      %3109 = vmatprep.subr.bf16.mxu0 0
      %3110 = vmatpush2.bf16.msra.mxu0 0
      %3111 = vmatprep.mubr.bf16.mxu0 0
      %3112 = vmatmul.mubr.bf16.gmra.mxu0 %v3010
      %v3113 = vpop.f32.mrf.mxu0
      %v3114 = vadd.f32 0.0, %v3113
      %v3115 = vpop.f32.mrf.mxu0
      %v3116 = vpop.f32.mrf.mxu0
      %v3117 = vadd.f32 0.0, %v3116
      %v3118 = vpop.f32.mrf.mxu0
      %3119 = vmatprep.mubr.bf16.mxu0 0
      %3120 = vmatmul.mubr.bf16.gmra.mxu0 %v3011
      %v3121 = vpop.f32.mrf.mxu0
      %v3122 = vadd.f32 0.0, %v3121
      %v3123 = vpop.f32.mrf.mxu0
      %v3124 = vpop.f32.mrf.mxu0
      %v3125 = vadd.f32 0.0, %v3124
      %v3126 = vpop.f32.mrf.mxu0
      %3127 = vmatprep.mubr.bf16.mxu0 0
      %3128 = vmatmul.mubr.bf16.gmra.mxu0 %v3012
      %v3129 = vpop.f32.mrf.mxu0
      %v3130 = vadd.f32 0.0, %v3129
      %v3131 = vpop.f32.mrf.mxu0
      %v3132 = vpop.f32.mrf.mxu0
      %v3133 = vadd.f32 0.0, %v3132
      %v3134 = vpop.f32.mrf.mxu0
      %3135 = vmatprep.mubr.bf16.mxu0 0
      %3136 = vmatmul.mubr.bf16.gmra.mxu0 %v3013
      %v3137 = vpop.f32.mrf.mxu0
      %v3138 = vadd.f32 0.0, %v3137
      %v3139 = vpop.f32.mrf.mxu0
      %v3140 = vpop.f32.mrf.mxu0
      %v3141 = vadd.f32 0.0, %v3140
      %v3142 = vpop.f32.mrf.mxu0
      %3143 = vdwg.mxu0
      %v3144 = vadd.f32 %v2994, %v3114
      %v3145 = vadd.f32 %v2995, %v3117
      %v3146 = vadd.f32 %v2996, %v3122
      %v3147 = vadd.f32 %v2997, %v3125
      %v3148 = vadd.f32 %v2998, %v3130
      %v3149 = vadd.f32 %v2999, %v3133
      %v3150 = vadd.f32 %v3000, %v3138
      %v3151 = vadd.f32 %v3001, %v3141
      %v3152 = vld [vmem:[#allocation3 + $0x15] sm:$0xff]
      %v3153 = vld [vmem:[#allocation3 + $0x1d] sm:$0xff]
      %v3154 = vld [vmem:[#allocation3 + $0x25] sm:$0xff]
      %v3155 = vld [vmem:[#allocation3 + $0x2d] sm:$0xff]
      %v3156 = vld [vmem:[#allocation3 + $0x35] sm:$0xff]
      %v3157 = vld [vmem:[#allocation3 + $0x3d] sm:$0xff]
      %v3158 = vld [vmem:[#allocation3 + $0x45] sm:$0xff]
      %v3159 = vld [vmem:[#allocation3 + $0x4d] sm:$0xf]
      %v3160 = vpack.c.bf16 %v3153, %v3152
      %v3161 = vpack.c.bf16 %v3155, %v3154
      %v3162 = vpack.c.bf16 %v3157, %v3156
      %v3163 = vpack.c.bf16 %v3159, %v3158
      %s3164 = scalar_lea.vmem %s5, 448
      %v3165 = vld [vmem:[%s3164] sm:$0xf]
      %v3166 = vld [vmem:[%s3164 + $0x4] sm:$0xf]
      %v3167 = vld [vmem:[%s3164 + $0x8] sm:$0xf]
      %v3168 = vld [vmem:[%s3164 + $0xc] sm:$0xf]
      %v3169 = vld [vmem:[%s3164 + $0x10] sm:$0xf]
      %v3170 = vld [vmem:[%s3164 + $0x14] sm:$0xf]
      %v3171 = vld [vmem:[%s3164 + $0x18] sm:$0xf]
      %v3172 = vld [vmem:[%s3164 + $0x1c] sm:$0xf]
      %v3173 = vld [vmem:[%s3164 + $0x20] sm:$0xf]
      %v3174 = vld [vmem:[%s3164 + $0x24] sm:$0xf]
      %v3175 = vld [vmem:[%s3164 + $0x28] sm:$0xf]
      %v3176 = vld [vmem:[%s3164 + $0x2c] sm:$0xf]
      %v3177 = vld [vmem:[%s3164 + $0x30] sm:$0xf]
      %v3178 = vld [vmem:[%s3164 + $0x34] sm:$0xf]
      %v3179 = vld [vmem:[%s3164 + $0x38] sm:$0xf]
      %v3180 = vld [vmem:[%s3164 + $0x3c] sm:$0xf]
      %v3197 = vunpack.c.l.b16 %v3165
      %v3198 = vunpack.c.l.b16 %v3166
      %v3199 = vunpack.c.l.b16 %v3167
      %v3200 = vunpack.c.l.b16 %v3168
      %v3201 = vunpack.c.l.b16 %v3169
      %v3202 = vunpack.c.l.b16 %v3170
      %v3203 = vunpack.c.l.b16 %v3171
      %v3204 = vunpack.c.l.b16 %v3172
      %v3205 = vunpack.c.l.b16 %v3173
      %v3206 = vunpack.c.l.b16 %v3174
      %v3207 = vunpack.c.l.b16 %v3175
      %v3208 = vunpack.c.l.b16 %v3176
      %v3209 = vunpack.c.l.b16 %v3177
      %v3210 = vunpack.c.l.b16 %v3178
      %v3211 = vunpack.c.l.b16 %v3179
      %v3212 = vunpack.c.l.b16 %v3180
      %v3213 = vpack.c.b16 %v3198, %v3197
      %v3214 = vpack.c.b16 %v3200, %v3199
      %v3215 = vpack.c.b16 %v3202, %v3201
      %v3216 = vpack.c.b16 %v3204, %v3203
      %v3217 = vpack.c.b16 %v3206, %v3205
      %v3218 = vpack.c.b16 %v3208, %v3207
      %v3219 = vpack.c.b16 %v3210, %v3209
      %v3220 = vpack.c.b16 %v3212, %v3211
      %3229 = vmatprep.subr.bf16.mxu0 0
      %3230 = vmatpush1.bf16.msra.mxu0 %v3220
      %3231 = vmatprep.subr.bf16.mxu0 0
      %3232 = vmatpush1.bf16.msra.mxu0 %v3219
      %3233 = vmatprep.subr.bf16.mxu0 0
      %3234 = vmatpush1.bf16.msra.mxu0 %v3218
      %3235 = vmatprep.subr.bf16.mxu0 0
      %3236 = vmatpush1.bf16.msra.mxu0 %v3217
      %3237 = vmatprep.subr.bf16.mxu0 0
      %3238 = vmatpush1.bf16.msra.mxu0 %v3216
      %3239 = vmatprep.subr.bf16.mxu0 0
      %3240 = vmatpush1.bf16.msra.mxu0 %v3215
      %3241 = vmatprep.subr.bf16.mxu0 0
      %3242 = vmatpush1.bf16.msra.mxu0 %v3214
      %3243 = vmatprep.subr.bf16.mxu0 0
      %3244 = vmatpush1.bf16.msra.mxu0 %v3213
      %3245 = vmatprep.subr.bf16.mxu0 0
      %3246 = vmatpush2.bf16.msra.mxu0 0
      %3247 = vmatprep.subr.bf16.mxu0 0
      %3248 = vmatpush2.bf16.msra.mxu0 0
      %3249 = vmatprep.subr.bf16.mxu0 0
      %3250 = vmatpush2.bf16.msra.mxu0 0
      %3251 = vmatprep.subr.bf16.mxu0 0
      %3252 = vmatpush2.bf16.msra.mxu0 0
      %3253 = vmatprep.subr.bf16.mxu0 0
      %3254 = vmatpush2.bf16.msra.mxu0 0
      %3255 = vmatprep.subr.bf16.mxu0 0
      %3256 = vmatpush2.bf16.msra.mxu0 0
      %3257 = vmatprep.subr.bf16.mxu0 0
      %3258 = vmatpush2.bf16.msra.mxu0 0
      %3259 = vmatprep.subr.bf16.mxu0 0
      %3260 = vmatpush2.bf16.msra.mxu0 0
      %3261 = vmatprep.mubr.bf16.mxu0 0
      %3262 = vmatmul.mubr.bf16.gmra.mxu0 %v3160
      %v3263 = vpop.f32.mrf.mxu0
      %v3264 = vadd.f32 0.0, %v3263
      %v3265 = vpop.f32.mrf.mxu0
      %v3266 = vpop.f32.mrf.mxu0
      %v3267 = vadd.f32 0.0, %v3266
      %v3268 = vpop.f32.mrf.mxu0
      %3269 = vmatprep.mubr.bf16.mxu0 0
      %3270 = vmatmul.mubr.bf16.gmra.mxu0 %v3161
      %v3271 = vpop.f32.mrf.mxu0
      %v3272 = vadd.f32 0.0, %v3271
      %v3273 = vpop.f32.mrf.mxu0
      %v3274 = vpop.f32.mrf.mxu0
      %v3275 = vadd.f32 0.0, %v3274
      %v3276 = vpop.f32.mrf.mxu0
      %3277 = vmatprep.mubr.bf16.mxu0 0
      %3278 = vmatmul.mubr.bf16.gmra.mxu0 %v3162
      %v3279 = vpop.f32.mrf.mxu0
      %v3280 = vadd.f32 0.0, %v3279
      %v3281 = vpop.f32.mrf.mxu0
      %v3282 = vpop.f32.mrf.mxu0
      %v3283 = vadd.f32 0.0, %v3282
      %v3284 = vpop.f32.mrf.mxu0
      %3285 = vmatprep.mubr.bf16.mxu0 0
      %3286 = vmatmul.mubr.bf16.gmra.mxu0 %v3163
      %v3287 = vpop.f32.mrf.mxu0
      %v3288 = vadd.f32 0.0, %v3287
      %v3289 = vpop.f32.mrf.mxu0
      %v3290 = vpop.f32.mrf.mxu0
      %v3291 = vadd.f32 0.0, %v3290
      %v3292 = vpop.f32.mrf.mxu0
      %3293 = vdwg.mxu0
      %v3294 = vadd.f32 %v3144, %v3264
      %v3295 = vadd.f32 %v3145, %v3267
      %v3296 = vadd.f32 %v3146, %v3272
      %v3297 = vadd.f32 %v3147, %v3275
      %v3298 = vadd.f32 %v3148, %v3280
      %v3299 = vadd.f32 %v3149, %v3283
      %v3300 = vadd.f32 %v3150, %v3288
      %v3301 = vadd.f32 %v3151, %v3291
      %v3302 = vld [vmem:[#allocation3 + $0x16] sm:$0xff]
      %v3303 = vld [vmem:[#allocation3 + $0x1e] sm:$0xff]
      %v3304 = vld [vmem:[#allocation3 + $0x26] sm:$0xff]
      %v3305 = vld [vmem:[#allocation3 + $0x2e] sm:$0xff]
      %v3306 = vld [vmem:[#allocation3 + $0x36] sm:$0xff]
      %v3307 = vld [vmem:[#allocation3 + $0x3e] sm:$0xff]
      %v3308 = vld [vmem:[#allocation3 + $0x46] sm:$0xff]
      %v3309 = vld [vmem:[#allocation3 + $0x4e] sm:$0xf]
      %v3310 = vpack.c.bf16 %v3303, %v3302
      %v3311 = vpack.c.bf16 %v3305, %v3304
      %v3312 = vpack.c.bf16 %v3307, %v3306
      %v3313 = vpack.c.bf16 %v3309, %v3308
      %s3314 = scalar_lea.vmem %s5, 512
      %v3315 = vld [vmem:[%s3314] sm:$0xf]
      %v3316 = vld [vmem:[%s3314 + $0x4] sm:$0xf]
      %v3317 = vld [vmem:[%s3314 + $0x8] sm:$0xf]
      %v3318 = vld [vmem:[%s3314 + $0xc] sm:$0xf]
      %v3319 = vld [vmem:[%s3314 + $0x10] sm:$0xf]
      %v3320 = vld [vmem:[%s3314 + $0x14] sm:$0xf]
      %v3321 = vld [vmem:[%s3314 + $0x18] sm:$0xf]
      %v3322 = vld [vmem:[%s3314 + $0x1c] sm:$0xf]
      %v3323 = vld [vmem:[%s3314 + $0x20] sm:$0xf]
      %v3324 = vld [vmem:[%s3314 + $0x24] sm:$0xf]
      %v3325 = vld [vmem:[%s3314 + $0x28] sm:$0xf]
      %v3326 = vld [vmem:[%s3314 + $0x2c] sm:$0xf]
      %v3327 = vld [vmem:[%s3314 + $0x30] sm:$0xf]
      %v3328 = vld [vmem:[%s3314 + $0x34] sm:$0xf]
      %v3329 = vld [vmem:[%s3314 + $0x38] sm:$0xf]
      %v3330 = vld [vmem:[%s3314 + $0x3c] sm:$0xf]
      %v3347 = vunpack.c.l.b16 %v3315
      %v3348 = vunpack.c.l.b16 %v3316
      %v3349 = vunpack.c.l.b16 %v3317
      %v3350 = vunpack.c.l.b16 %v3318
      %v3351 = vunpack.c.l.b16 %v3319
      %v3352 = vunpack.c.l.b16 %v3320
      %v3353 = vunpack.c.l.b16 %v3321
      %v3354 = vunpack.c.l.b16 %v3322
      %v3355 = vunpack.c.l.b16 %v3323
      %v3356 = vunpack.c.l.b16 %v3324
      %v3357 = vunpack.c.l.b16 %v3325
      %v3358 = vunpack.c.l.b16 %v3326
      %v3359 = vunpack.c.l.b16 %v3327
      %v3360 = vunpack.c.l.b16 %v3328
      %v3361 = vunpack.c.l.b16 %v3329
      %v3362 = vunpack.c.l.b16 %v3330
      %v3363 = vpack.c.b16 %v3348, %v3347
      %v3364 = vpack.c.b16 %v3350, %v3349
      %v3365 = vpack.c.b16 %v3352, %v3351
      %v3366 = vpack.c.b16 %v3354, %v3353
      %v3367 = vpack.c.b16 %v3356, %v3355
      %v3368 = vpack.c.b16 %v3358, %v3357
      %v3369 = vpack.c.b16 %v3360, %v3359
      %v3370 = vpack.c.b16 %v3362, %v3361
      %3379 = vmatprep.subr.bf16.mxu0 0
      %3380 = vmatpush1.bf16.msra.mxu0 %v3370
      %3381 = vmatprep.subr.bf16.mxu0 0
      %3382 = vmatpush1.bf16.msra.mxu0 %v3369
      %3383 = vmatprep.subr.bf16.mxu0 0
      %3384 = vmatpush1.bf16.msra.mxu0 %v3368
      %3385 = vmatprep.subr.bf16.mxu0 0
      %3386 = vmatpush1.bf16.msra.mxu0 %v3367
      %3387 = vmatprep.subr.bf16.mxu0 0
      %3388 = vmatpush1.bf16.msra.mxu0 %v3366
      %3389 = vmatprep.subr.bf16.mxu0 0
      %3390 = vmatpush1.bf16.msra.mxu0 %v3365
      %3391 = vmatprep.subr.bf16.mxu0 0
      %3392 = vmatpush1.bf16.msra.mxu0 %v3364
      %3393 = vmatprep.subr.bf16.mxu0 0
      %3394 = vmatpush1.bf16.msra.mxu0 %v3363
      %3395 = vmatprep.subr.bf16.mxu0 0
      %3396 = vmatpush2.bf16.msra.mxu0 0
      %3397 = vmatprep.subr.bf16.mxu0 0
      %3398 = vmatpush2.bf16.msra.mxu0 0
      %3399 = vmatprep.subr.bf16.mxu0 0
      %3400 = vmatpush2.bf16.msra.mxu0 0
      %3401 = vmatprep.subr.bf16.mxu0 0
      %3402 = vmatpush2.bf16.msra.mxu0 0
      %3403 = vmatprep.subr.bf16.mxu0 0
      %3404 = vmatpush2.bf16.msra.mxu0 0
      %3405 = vmatprep.subr.bf16.mxu0 0
      %3406 = vmatpush2.bf16.msra.mxu0 0
      %3407 = vmatprep.subr.bf16.mxu0 0
      %3408 = vmatpush2.bf16.msra.mxu0 0
      %3409 = vmatprep.subr.bf16.mxu0 0
      %3410 = vmatpush2.bf16.msra.mxu0 0
      %3411 = vmatprep.mubr.bf16.mxu0 0
      %3412 = vmatmul.mubr.bf16.gmra.mxu0 %v3310
      %v3413 = vpop.f32.mrf.mxu0
      %v3414 = vadd.f32 0.0, %v3413
      %v3415 = vpop.f32.mrf.mxu0
      %v3416 = vpop.f32.mrf.mxu0
      %v3417 = vadd.f32 0.0, %v3416
      %v3418 = vpop.f32.mrf.mxu0
      %3419 = vmatprep.mubr.bf16.mxu0 0
      %3420 = vmatmul.mubr.bf16.gmra.mxu0 %v3311
      %v3421 = vpop.f32.mrf.mxu0
      %v3422 = vadd.f32 0.0, %v3421
      %v3423 = vpop.f32.mrf.mxu0
      %v3424 = vpop.f32.mrf.mxu0
      %v3425 = vadd.f32 0.0, %v3424
      %v3426 = vpop.f32.mrf.mxu0
      %3427 = vmatprep.mubr.bf16.mxu0 0
      %3428 = vmatmul.mubr.bf16.gmra.mxu0 %v3312
      %v3429 = vpop.f32.mrf.mxu0
      %v3430 = vadd.f32 0.0, %v3429
      %v3431 = vpop.f32.mrf.mxu0
      %v3432 = vpop.f32.mrf.mxu0
      %v3433 = vadd.f32 0.0, %v3432
      %v3434 = vpop.f32.mrf.mxu0
      %3435 = vmatprep.mubr.bf16.mxu0 0
      %3436 = vmatmul.mubr.bf16.gmra.mxu0 %v3313
      %v3437 = vpop.f32.mrf.mxu0
      %v3438 = vadd.f32 0.0, %v3437
      %v3439 = vpop.f32.mrf.mxu0
      %v3440 = vpop.f32.mrf.mxu0
      %v3441 = vadd.f32 0.0, %v3440
      %v3442 = vpop.f32.mrf.mxu0
      %3443 = vdwg.mxu0
      %v3444 = vadd.f32 %v3294, %v3414
      %v3445 = vadd.f32 %v3295, %v3417
      %v3446 = vadd.f32 %v3296, %v3422
      %v3447 = vadd.f32 %v3297, %v3425
      %v3448 = vadd.f32 %v3298, %v3430
      %v3449 = vadd.f32 %v3299, %v3433
      %v3450 = vadd.f32 %v3300, %v3438
      %v3451 = vadd.f32 %v3301, %v3441
      %v3453 = vlaneseq
      %v3454 = vshrl.u32 %v3453, 7
      %v3455 = vsub.s32 0, %v3454
      %v3456 = vrot.slane %v2118, %v3455
      %v3458 = vadd.f32 %v3444, %v3456
      %v3459 = vadd.f32 %v3445, %v3456
      %v3460 = vadd.f32 %v3446, %v3456
      %v3461 = vadd.f32 %v3447, %v3456
      %v3462 = vadd.f32 %v3448, %v3456
      %v3463 = vadd.f32 %v3449, %v3456
      %v3464 = vadd.f32 %v3450, %v3456
      %v3465 = vadd.f32 %v3451, %v3456
      %v3466 = vmax.f32 %v3458, 0.0
      %v3467 = vmax.f32 %v3459, 0.0
      %v3468 = vmax.f32 %v3460, 0.0
      %v3469 = vmax.f32 %v3461, 0.0
      %v3470 = vmax.f32 %v3462, 0.0
      %v3471 = vmax.f32 %v3463, 0.0
      %v3472 = vmax.f32 %v3464, 0.0
      %v3473 = vmax.f32 %v3465, 0.0
      %3474 = vst [vmem:[#allocation2] sm:$0xff] %v3466
      %3475 = vst [vmem:[#allocation2 + $0x8] sm:$0xff] %v3467
      %3476 = vst [vmem:[#allocation2 + $0x10] sm:$0xff] %v3468
      %3477 = vst [vmem:[#allocation2 + $0x18] sm:$0xff] %v3469
      %3478 = vst [vmem:[#allocation2 + $0x20] sm:$0xff] %v3470
      %3479 = vst [vmem:[#allocation2 + $0x28] sm:$0xff] %v3471
      %3480 = vst [vmem:[#allocation2 + $0x30] sm:$0xff] %v3472
      %3481 = vst [vmem:[#allocation2 + $0x38] sm:$0xf] %v3473
      %v3482 = vld [vmem:[%s8] sm:$0x1]
      %v3483 = vld [vmem:[#allocation2] sm:$0xff]
      %v3484 = vld [vmem:[#allocation2 + $0x8] sm:$0xff]
      %v3485 = vld [vmem:[#allocation2 + $0x10] sm:$0xff]
      %v3486 = vld [vmem:[#allocation2 + $0x18] sm:$0xff]
      %v3487 = vld [vmem:[#allocation2 + $0x20] sm:$0xff]
      %v3488 = vpack.c.bf16 %v3484, %v3483
      %v3489 = vpack.c.bf16 %v3486, %v3485
      %v3490 = vpack.c.bf16 %v3487, %v3487
      %v3491 = vld [vmem:[%s7] sm:$0xf]
      %v3492 = vld [vmem:[%s7 + $0x4] sm:$0xf]
      %v3493 = vld [vmem:[%s7 + $0x8] sm:$0xf]
      %v3494 = vld [vmem:[%s7 + $0xc] sm:$0xf]
      %v3495 = vld [vmem:[%s7 + $0x10] sm:$0xf]
      %v3496 = vld [vmem:[%s7 + $0x14] sm:$0xf]
      %v3497 = vld [vmem:[%s7 + $0x18] sm:$0xf]
      %v3498 = vld [vmem:[%s7 + $0x1c] sm:$0xf]
      %v3499 = vld [vmem:[%s7 + $0x20] sm:$0xf]
      %v3500 = vld [vmem:[%s7 + $0x24] sm:$0xf]
      %v3501 = vld [vmem:[%s7 + $0x28] sm:$0xf]
      %v3502 = vld [vmem:[%s7 + $0x2c] sm:$0xf]
      %v3503 = vld [vmem:[%s7 + $0x30] sm:$0xf]
      %v3504 = vld [vmem:[%s7 + $0x34] sm:$0xf]
      %v3505 = vld [vmem:[%s7 + $0x38] sm:$0xf]
      %v3506 = vld [vmem:[%s7 + $0x3c] sm:$0xf]
      %v3507 = vld [vmem:[#allocation2 + $0x1] sm:$0xff]
      %v3508 = vld [vmem:[#allocation2 + $0x9] sm:$0xff]
      %v3509 = vld [vmem:[#allocation2 + $0x11] sm:$0xff]
      %v3510 = vld [vmem:[#allocation2 + $0x19] sm:$0xff]
      %v3511 = vld [vmem:[#allocation2 + $0x21] sm:$0xff]
      %v3512 = vpack.c.bf16 %v3508, %v3507
      %v3513 = vpack.c.bf16 %v3510, %v3509
      %v3514 = vpack.c.bf16 %v3511, %v3511
      %s3515 = scalar_lea.vmem %s7, 64
      %v3516 = vld [vmem:[%s3515] sm:$0xf]
      %v3517 = vld [vmem:[%s3515 + $0x4] sm:$0xf]
      %v3518 = vld [vmem:[%s3515 + $0x8] sm:$0xf]
      %v3519 = vld [vmem:[%s3515 + $0xc] sm:$0xf]
      %v3520 = vld [vmem:[%s3515 + $0x10] sm:$0xf]
      %v3521 = vld [vmem:[%s3515 + $0x14] sm:$0xf]
      %v3522 = vld [vmem:[%s3515 + $0x18] sm:$0xf]
      %v3523 = vld [vmem:[%s3515 + $0x1c] sm:$0xf]
      %v3524 = vld [vmem:[%s3515 + $0x20] sm:$0xf]
      %v3525 = vld [vmem:[%s3515 + $0x24] sm:$0xf]
      %v3526 = vld [vmem:[%s3515 + $0x28] sm:$0xf]
      %v3527 = vld [vmem:[%s3515 + $0x2c] sm:$0xf]
      %v3528 = vld [vmem:[%s3515 + $0x30] sm:$0xf]
      %v3529 = vld [vmem:[%s3515 + $0x34] sm:$0xf]
      %v3530 = vld [vmem:[%s3515 + $0x38] sm:$0xf]
      %v3531 = vld [vmem:[%s3515 + $0x3c] sm:$0xf]
      %v3548 = vunpack.c.l.b16 %v3516
      %v3549 = vunpack.c.l.b16 %v3517
      %v3550 = vunpack.c.l.b16 %v3518
      %v3551 = vunpack.c.l.b16 %v3519
      %v3552 = vunpack.c.l.b16 %v3520
      %v3553 = vunpack.c.l.b16 %v3521
      %v3554 = vunpack.c.l.b16 %v3522
      %v3555 = vunpack.c.l.b16 %v3523
      %v3556 = vunpack.c.l.b16 %v3524
      %v3557 = vunpack.c.l.b16 %v3525
      %v3558 = vunpack.c.l.b16 %v3526
      %v3559 = vunpack.c.l.b16 %v3527
      %v3560 = vunpack.c.l.b16 %v3528
      %v3561 = vunpack.c.l.b16 %v3529
      %v3562 = vunpack.c.l.b16 %v3530
      %v3563 = vunpack.c.l.b16 %v3531
      %v3564 = vpack.c.b16 %v3549, %v3548
      %v3565 = vpack.c.b16 %v3551, %v3550
      %v3566 = vpack.c.b16 %v3553, %v3552
      %v3567 = vpack.c.b16 %v3555, %v3554
      %v3568 = vpack.c.b16 %v3557, %v3556
      %v3569 = vpack.c.b16 %v3559, %v3558
      %v3570 = vpack.c.b16 %v3561, %v3560
      %v3571 = vpack.c.b16 %v3563, %v3562
      %3580 = vmatprep.subr.bf16.mxu0 0
      %3581 = vmatpush1.bf16.msra.mxu0 %v3571
      %3582 = vmatprep.subr.bf16.mxu0 0
      %3583 = vmatpush1.bf16.msra.mxu0 %v3570
      %3584 = vmatprep.subr.bf16.mxu0 0
      %3585 = vmatpush1.bf16.msra.mxu0 %v3569
      %3586 = vmatprep.subr.bf16.mxu0 0
      %3587 = vmatpush1.bf16.msra.mxu0 %v3568
      %3588 = vmatprep.subr.bf16.mxu0 0
      %3589 = vmatpush1.bf16.msra.mxu0 %v3567
      %3590 = vmatprep.subr.bf16.mxu0 0
      %3591 = vmatpush1.bf16.msra.mxu0 %v3566
      %3592 = vmatprep.subr.bf16.mxu0 0
      %3593 = vmatpush1.bf16.msra.mxu0 %v3565
      %3594 = vmatprep.subr.bf16.mxu0 0
      %3595 = vmatpush1.bf16.msra.mxu0 %v3564
      %3596 = vmatprep.subr.bf16.mxu0 0
      %3597 = vmatpush2.bf16.msra.mxu0 0
      %3598 = vmatprep.subr.bf16.mxu0 0
      %3599 = vmatpush2.bf16.msra.mxu0 0
      %3600 = vmatprep.subr.bf16.mxu0 0
      %3601 = vmatpush2.bf16.msra.mxu0 0
      %3602 = vmatprep.subr.bf16.mxu0 0
      %3603 = vmatpush2.bf16.msra.mxu0 0
      %3604 = vmatprep.subr.bf16.mxu0 0
      %3605 = vmatpush2.bf16.msra.mxu0 0
      %3606 = vmatprep.subr.bf16.mxu0 0
      %3607 = vmatpush2.bf16.msra.mxu0 0
      %3608 = vmatprep.subr.bf16.mxu0 0
      %3609 = vmatpush2.bf16.msra.mxu0 0
      %3610 = vmatprep.subr.bf16.mxu0 0
      %3611 = vmatpush2.bf16.msra.mxu0 0
      %3612 = vmatprep.mubr.bf16.mxu0 0
      %3613 = vmatmul.mubr.bf16.gmra.mxu0 %v3512
      %v3614 = vpop.f32.mrf.mxu0
      %v3615 = vadd.f32 0.0, %v3614
      %v3616 = vpop.f32.mrf.mxu0
      %v3617 = vpop.f32.mrf.mxu0
      %v3618 = vadd.f32 0.0, %v3617
      %v3619 = vpop.f32.mrf.mxu0
      %3620 = vmatprep.mubr.bf16.mxu0 0
      %3621 = vmatmul.mubr.bf16.gmra.mxu0 %v3513
      %v3622 = vpop.f32.mrf.mxu0
      %v3623 = vadd.f32 0.0, %v3622
      %v3624 = vpop.f32.mrf.mxu0
      %v3625 = vpop.f32.mrf.mxu0
      %v3626 = vadd.f32 0.0, %v3625
      %v3627 = vpop.f32.mrf.mxu0
      %3628 = vmatprep.mubr.bf16.mxu0 0
      %3629 = vmatmul.mubr.bf16.gmra.mxu0 %v3514
      %v3630 = vpop.f32.mrf.mxu0
      %v3631 = vadd.f32 0.0, %v3630
      %v3632 = vpop.f32.mrf.mxu0
      %v3633 = vpop.f32.mrf.mxu0
      %v3634 = vpop.f32.mrf.mxu0
      %3635 = vdwg.mxu0
      %v3652 = vunpack.c.l.b16 %v3491
      %v3653 = vunpack.c.l.b16 %v3492
      %v3654 = vunpack.c.l.b16 %v3493
      %v3655 = vunpack.c.l.b16 %v3494
      %v3656 = vunpack.c.l.b16 %v3495
      %v3657 = vunpack.c.l.b16 %v3496
      %v3658 = vunpack.c.l.b16 %v3497
      %v3659 = vunpack.c.l.b16 %v3498
      %v3660 = vunpack.c.l.b16 %v3499
      %v3661 = vunpack.c.l.b16 %v3500
      %v3662 = vunpack.c.l.b16 %v3501
      %v3663 = vunpack.c.l.b16 %v3502
      %v3664 = vunpack.c.l.b16 %v3503
      %v3665 = vunpack.c.l.b16 %v3504
      %v3666 = vunpack.c.l.b16 %v3505
      %v3667 = vunpack.c.l.b16 %v3506
      %v3668 = vpack.c.b16 %v3653, %v3652
      %v3669 = vpack.c.b16 %v3655, %v3654
      %v3670 = vpack.c.b16 %v3657, %v3656
      %v3671 = vpack.c.b16 %v3659, %v3658
      %v3672 = vpack.c.b16 %v3661, %v3660
      %v3673 = vpack.c.b16 %v3663, %v3662
      %v3674 = vpack.c.b16 %v3665, %v3664
      %v3675 = vpack.c.b16 %v3667, %v3666
      %3684 = vmatprep.subr.bf16.mxu0 0
      %3685 = vmatpush1.bf16.msra.mxu0 %v3675
      %3686 = vmatprep.subr.bf16.mxu0 0
      %3687 = vmatpush1.bf16.msra.mxu0 %v3674
      %3688 = vmatprep.subr.bf16.mxu0 0
      %3689 = vmatpush1.bf16.msra.mxu0 %v3673
      %3690 = vmatprep.subr.bf16.mxu0 0
      %3691 = vmatpush1.bf16.msra.mxu0 %v3672
      %3692 = vmatprep.subr.bf16.mxu0 0
      %3693 = vmatpush1.bf16.msra.mxu0 %v3671
      %3694 = vmatprep.subr.bf16.mxu0 0
      %3695 = vmatpush1.bf16.msra.mxu0 %v3670
      %3696 = vmatprep.subr.bf16.mxu0 0
      %3697 = vmatpush1.bf16.msra.mxu0 %v3669
      %3698 = vmatprep.subr.bf16.mxu0 0
      %3699 = vmatpush1.bf16.msra.mxu0 %v3668
      %3700 = vmatprep.subr.bf16.mxu0 0
      %3701 = vmatpush2.bf16.msra.mxu0 0
      %3702 = vmatprep.subr.bf16.mxu0 0
      %3703 = vmatpush2.bf16.msra.mxu0 0
      %3704 = vmatprep.subr.bf16.mxu0 0
      %3705 = vmatpush2.bf16.msra.mxu0 0
      %3706 = vmatprep.subr.bf16.mxu0 0
      %3707 = vmatpush2.bf16.msra.mxu0 0
      %3708 = vmatprep.subr.bf16.mxu0 0
      %3709 = vmatpush2.bf16.msra.mxu0 0
      %3710 = vmatprep.subr.bf16.mxu0 0
      %3711 = vmatpush2.bf16.msra.mxu0 0
      %3712 = vmatprep.subr.bf16.mxu0 0
      %3713 = vmatpush2.bf16.msra.mxu0 0
      %3714 = vmatprep.subr.bf16.mxu0 0
      %3715 = vmatpush2.bf16.msra.mxu0 0
      %3716 = vmatprep.mubr.bf16.mxu0 0
      %3717 = vmatmul.mubr.bf16.gmra.mxu0 %v3488
      %v3718 = vpop.f32.mrf.mxu0
      %v3719 = vadd.f32 %v3615, %v3718
      %v3720 = vpop.f32.mrf.mxu0
      %v3721 = vpop.f32.mrf.mxu0
      %v3722 = vadd.f32 %v3618, %v3721
      %v3723 = vpop.f32.mrf.mxu0
      %3724 = vmatprep.mubr.bf16.mxu0 0
      %3725 = vmatmul.mubr.bf16.gmra.mxu0 %v3489
      %v3726 = vpop.f32.mrf.mxu0
      %v3727 = vadd.f32 %v3623, %v3726
      %v3728 = vpop.f32.mrf.mxu0
      %v3729 = vpop.f32.mrf.mxu0
      %v3730 = vadd.f32 %v3626, %v3729
      %v3731 = vpop.f32.mrf.mxu0
      %3732 = vmatprep.mubr.bf16.mxu0 0
      %3733 = vmatmul.mubr.bf16.gmra.mxu0 %v3490
      %v3734 = vpop.f32.mrf.mxu0
      %v3735 = vadd.f32 %v3631, %v3734
      %v3736 = vpop.f32.mrf.mxu0
      %v3737 = vpop.f32.mrf.mxu0
      %v3738 = vpop.f32.mrf.mxu0
      %3739 = vdwg.mxu0
      %v3740 = vld [vmem:[#allocation2 + $0x2] sm:$0xff]
      %v3741 = vld [vmem:[#allocation2 + $0xa] sm:$0xff]
      %v3742 = vld [vmem:[#allocation2 + $0x12] sm:$0xff]
      %v3743 = vld [vmem:[#allocation2 + $0x1a] sm:$0xff]
      %v3744 = vld [vmem:[#allocation2 + $0x22] sm:$0xff]
      %v3745 = vpack.c.bf16 %v3741, %v3740
      %v3746 = vpack.c.bf16 %v3743, %v3742
      %v3747 = vpack.c.bf16 %v3744, %v3744
      %s3748 = scalar_lea.vmem %s7, 128
      %v3749 = vld [vmem:[%s3748] sm:$0xf]
      %v3750 = vld [vmem:[%s3748 + $0x4] sm:$0xf]
      %v3751 = vld [vmem:[%s3748 + $0x8] sm:$0xf]
      %v3752 = vld [vmem:[%s3748 + $0xc] sm:$0xf]
      %v3753 = vld [vmem:[%s3748 + $0x10] sm:$0xf]
      %v3754 = vld [vmem:[%s3748 + $0x14] sm:$0xf]
      %v3755 = vld [vmem:[%s3748 + $0x18] sm:$0xf]
      %v3756 = vld [vmem:[%s3748 + $0x1c] sm:$0xf]
      %v3757 = vld [vmem:[%s3748 + $0x20] sm:$0xf]
      %v3758 = vld [vmem:[%s3748 + $0x24] sm:$0xf]
      %v3759 = vld [vmem:[%s3748 + $0x28] sm:$0xf]
      %v3760 = vld [vmem:[%s3748 + $0x2c] sm:$0xf]
      %v3761 = vld [vmem:[%s3748 + $0x30] sm:$0xf]
      %v3762 = vld [vmem:[%s3748 + $0x34] sm:$0xf]
      %v3763 = vld [vmem:[%s3748 + $0x38] sm:$0xf]
      %v3764 = vld [vmem:[%s3748 + $0x3c] sm:$0xf]
      %v3781 = vunpack.c.l.b16 %v3749
      %v3782 = vunpack.c.l.b16 %v3750
      %v3783 = vunpack.c.l.b16 %v3751
      %v3784 = vunpack.c.l.b16 %v3752
      %v3785 = vunpack.c.l.b16 %v3753
      %v3786 = vunpack.c.l.b16 %v3754
      %v3787 = vunpack.c.l.b16 %v3755
      %v3788 = vunpack.c.l.b16 %v3756
      %v3789 = vunpack.c.l.b16 %v3757
      %v3790 = vunpack.c.l.b16 %v3758
      %v3791 = vunpack.c.l.b16 %v3759
      %v3792 = vunpack.c.l.b16 %v3760
      %v3793 = vunpack.c.l.b16 %v3761
      %v3794 = vunpack.c.l.b16 %v3762
      %v3795 = vunpack.c.l.b16 %v3763
      %v3796 = vunpack.c.l.b16 %v3764
      %v3797 = vpack.c.b16 %v3782, %v3781
      %v3798 = vpack.c.b16 %v3784, %v3783
      %v3799 = vpack.c.b16 %v3786, %v3785
      %v3800 = vpack.c.b16 %v3788, %v3787
      %v3801 = vpack.c.b16 %v3790, %v3789
      %v3802 = vpack.c.b16 %v3792, %v3791
      %v3803 = vpack.c.b16 %v3794, %v3793
      %v3804 = vpack.c.b16 %v3796, %v3795
      %3813 = vmatprep.subr.bf16.mxu0 0
      %3814 = vmatpush1.bf16.msra.mxu0 %v3804
      %3815 = vmatprep.subr.bf16.mxu0 0
      %3816 = vmatpush1.bf16.msra.mxu0 %v3803
      %3817 = vmatprep.subr.bf16.mxu0 0
      %3818 = vmatpush1.bf16.msra.mxu0 %v3802
      %3819 = vmatprep.subr.bf16.mxu0 0
      %3820 = vmatpush1.bf16.msra.mxu0 %v3801
      %3821 = vmatprep.subr.bf16.mxu0 0
      %3822 = vmatpush1.bf16.msra.mxu0 %v3800
      %3823 = vmatprep.subr.bf16.mxu0 0
      %3824 = vmatpush1.bf16.msra.mxu0 %v3799
      %3825 = vmatprep.subr.bf16.mxu0 0
      %3826 = vmatpush1.bf16.msra.mxu0 %v3798
      %3827 = vmatprep.subr.bf16.mxu0 0
      %3828 = vmatpush1.bf16.msra.mxu0 %v3797
      %3829 = vmatprep.subr.bf16.mxu0 0
      %3830 = vmatpush2.bf16.msra.mxu0 0
      %3831 = vmatprep.subr.bf16.mxu0 0
      %3832 = vmatpush2.bf16.msra.mxu0 0
      %3833 = vmatprep.subr.bf16.mxu0 0
      %3834 = vmatpush2.bf16.msra.mxu0 0
      %3835 = vmatprep.subr.bf16.mxu0 0
      %3836 = vmatpush2.bf16.msra.mxu0 0
      %3837 = vmatprep.subr.bf16.mxu0 0
      %3838 = vmatpush2.bf16.msra.mxu0 0
      %3839 = vmatprep.subr.bf16.mxu0 0
      %3840 = vmatpush2.bf16.msra.mxu0 0
      %3841 = vmatprep.subr.bf16.mxu0 0
      %3842 = vmatpush2.bf16.msra.mxu0 0
      %3843 = vmatprep.subr.bf16.mxu0 0
      %3844 = vmatpush2.bf16.msra.mxu0 0
      %3845 = vmatprep.mubr.bf16.mxu0 0
      %3846 = vmatmul.mubr.bf16.gmra.mxu0 %v3745
      %v3847 = vpop.f32.mrf.mxu0
      %v3848 = vadd.f32 0.0, %v3847
      %v3849 = vpop.f32.mrf.mxu0
      %v3850 = vpop.f32.mrf.mxu0
      %v3851 = vadd.f32 0.0, %v3850
      %v3852 = vpop.f32.mrf.mxu0
      %3853 = vmatprep.mubr.bf16.mxu0 0
      %3854 = vmatmul.mubr.bf16.gmra.mxu0 %v3746
      %v3855 = vpop.f32.mrf.mxu0
      %v3856 = vadd.f32 0.0, %v3855
      %v3857 = vpop.f32.mrf.mxu0
      %v3858 = vpop.f32.mrf.mxu0
      %v3859 = vadd.f32 0.0, %v3858
      %v3860 = vpop.f32.mrf.mxu0
      %3861 = vmatprep.mubr.bf16.mxu0 0
      %3862 = vmatmul.mubr.bf16.gmra.mxu0 %v3747
      %v3863 = vpop.f32.mrf.mxu0
      %v3864 = vadd.f32 0.0, %v3863
      %v3865 = vpop.f32.mrf.mxu0
      %v3866 = vpop.f32.mrf.mxu0
      %v3867 = vpop.f32.mrf.mxu0
      %3868 = vdwg.mxu0
      %v3869 = vadd.f32 %v3719, %v3848
      %v3870 = vadd.f32 %v3722, %v3851
      %v3871 = vadd.f32 %v3727, %v3856
      %v3872 = vadd.f32 %v3730, %v3859
      %v3873 = vadd.f32 %v3735, %v3864
      %v3874 = vld [vmem:[#allocation2 + $0xa] sm:$0xff]
      %v3875 = vld [vmem:[#allocation2 + $0x12] sm:$0xff]
      %v3876 = vld [vmem:[#allocation2 + $0x1a] sm:$0xff]
      %v3877 = vld [vmem:[#allocation2 + $0x22] sm:$0xff]
      %v3878 = vld [vmem:[#allocation2 + $0x2a] sm:$0xff]
      %v3879 = vpack.c.bf16 %v3875, %v3874
      %v3880 = vpack.c.bf16 %v3877, %v3876
      %v3881 = vpack.c.bf16 %v3878, %v3878
      %s3882 = scalar_lea.vmem %s7, 192
      %v3883 = vld [vmem:[%s3882] sm:$0xf]
      %v3884 = vld [vmem:[%s3882 + $0x4] sm:$0xf]
      %v3885 = vld [vmem:[%s3882 + $0x8] sm:$0xf]
      %v3886 = vld [vmem:[%s3882 + $0xc] sm:$0xf]
      %v3887 = vld [vmem:[%s3882 + $0x10] sm:$0xf]
      %v3888 = vld [vmem:[%s3882 + $0x14] sm:$0xf]
      %v3889 = vld [vmem:[%s3882 + $0x18] sm:$0xf]
      %v3890 = vld [vmem:[%s3882 + $0x1c] sm:$0xf]
      %v3891 = vld [vmem:[%s3882 + $0x20] sm:$0xf]
      %v3892 = vld [vmem:[%s3882 + $0x24] sm:$0xf]
      %v3893 = vld [vmem:[%s3882 + $0x28] sm:$0xf]
      %v3894 = vld [vmem:[%s3882 + $0x2c] sm:$0xf]
      %v3895 = vld [vmem:[%s3882 + $0x30] sm:$0xf]
      %v3896 = vld [vmem:[%s3882 + $0x34] sm:$0xf]
      %v3897 = vld [vmem:[%s3882 + $0x38] sm:$0xf]
      %v3898 = vld [vmem:[%s3882 + $0x3c] sm:$0xf]
      %v3915 = vunpack.c.l.b16 %v3883
      %v3916 = vunpack.c.l.b16 %v3884
      %v3917 = vunpack.c.l.b16 %v3885
      %v3918 = vunpack.c.l.b16 %v3886
      %v3919 = vunpack.c.l.b16 %v3887
      %v3920 = vunpack.c.l.b16 %v3888
      %v3921 = vunpack.c.l.b16 %v3889
      %v3922 = vunpack.c.l.b16 %v3890
      %v3923 = vunpack.c.l.b16 %v3891
      %v3924 = vunpack.c.l.b16 %v3892
      %v3925 = vunpack.c.l.b16 %v3893
      %v3926 = vunpack.c.l.b16 %v3894
      %v3927 = vunpack.c.l.b16 %v3895
      %v3928 = vunpack.c.l.b16 %v3896
      %v3929 = vunpack.c.l.b16 %v3897
      %v3930 = vunpack.c.l.b16 %v3898
      %v3931 = vpack.c.b16 %v3916, %v3915
      %v3932 = vpack.c.b16 %v3918, %v3917
      %v3933 = vpack.c.b16 %v3920, %v3919
      %v3934 = vpack.c.b16 %v3922, %v3921
      %v3935 = vpack.c.b16 %v3924, %v3923
      %v3936 = vpack.c.b16 %v3926, %v3925
      %v3937 = vpack.c.b16 %v3928, %v3927
      %v3938 = vpack.c.b16 %v3930, %v3929
      %3947 = vmatprep.subr.bf16.mxu0 0
      %3948 = vmatpush1.bf16.msra.mxu0 %v3938
      %3949 = vmatprep.subr.bf16.mxu0 0
      %3950 = vmatpush1.bf16.msra.mxu0 %v3937
      %3951 = vmatprep.subr.bf16.mxu0 0
      %3952 = vmatpush1.bf16.msra.mxu0 %v3936
      %3953 = vmatprep.subr.bf16.mxu0 0
      %3954 = vmatpush1.bf16.msra.mxu0 %v3935
      %3955 = vmatprep.subr.bf16.mxu0 0
      %3956 = vmatpush1.bf16.msra.mxu0 %v3934
      %3957 = vmatprep.subr.bf16.mxu0 0
      %3958 = vmatpush1.bf16.msra.mxu0 %v3933
      %3959 = vmatprep.subr.bf16.mxu0 0
      %3960 = vmatpush1.bf16.msra.mxu0 %v3932
      %3961 = vmatprep.subr.bf16.mxu0 0
      %3962 = vmatpush1.bf16.msra.mxu0 %v3931
      %3963 = vmatprep.subr.bf16.mxu0 0
      %3964 = vmatpush2.bf16.msra.mxu0 0
      %3965 = vmatprep.subr.bf16.mxu0 0
      %3966 = vmatpush2.bf16.msra.mxu0 0
      %3967 = vmatprep.subr.bf16.mxu0 0
      %3968 = vmatpush2.bf16.msra.mxu0 0
      %3969 = vmatprep.subr.bf16.mxu0 0
      %3970 = vmatpush2.bf16.msra.mxu0 0
      %3971 = vmatprep.subr.bf16.mxu0 0
      %3972 = vmatpush2.bf16.msra.mxu0 0
      %3973 = vmatprep.subr.bf16.mxu0 0
      %3974 = vmatpush2.bf16.msra.mxu0 0
      %3975 = vmatprep.subr.bf16.mxu0 0
      %3976 = vmatpush2.bf16.msra.mxu0 0
      %3977 = vmatprep.subr.bf16.mxu0 0
      %3978 = vmatpush2.bf16.msra.mxu0 0
      %3979 = vmatprep.mubr.bf16.mxu0 0
      %3980 = vmatmul.mubr.bf16.gmra.mxu0 %v3879
      %v3981 = vpop.f32.mrf.mxu0
      %v3982 = vadd.f32 0.0, %v3981
      %v3983 = vpop.f32.mrf.mxu0
      %v3984 = vpop.f32.mrf.mxu0
      %v3985 = vadd.f32 0.0, %v3984
      %v3986 = vpop.f32.mrf.mxu0
      %3987 = vmatprep.mubr.bf16.mxu0 0
      %3988 = vmatmul.mubr.bf16.gmra.mxu0 %v3880
      %v3989 = vpop.f32.mrf.mxu0
      %v3990 = vadd.f32 0.0, %v3989
      %v3991 = vpop.f32.mrf.mxu0
      %v3992 = vpop.f32.mrf.mxu0
      %v3993 = vadd.f32 0.0, %v3992
      %v3994 = vpop.f32.mrf.mxu0
      %3995 = vmatprep.mubr.bf16.mxu0 0
      %3996 = vmatmul.mubr.bf16.gmra.mxu0 %v3881
      %v3997 = vpop.f32.mrf.mxu0
      %v3998 = vadd.f32 0.0, %v3997
      %v3999 = vpop.f32.mrf.mxu0
      %v4000 = vpop.f32.mrf.mxu0
      %v4001 = vpop.f32.mrf.mxu0
      %4002 = vdwg.mxu0
      %v4003 = vadd.f32 %v3869, %v3982
      %v4004 = vadd.f32 %v3870, %v3985
      %v4005 = vadd.f32 %v3871, %v3990
      %v4006 = vadd.f32 %v3872, %v3993
      %v4007 = vadd.f32 %v3873, %v3998
      %v4008 = vld [vmem:[#allocation2 + $0xb] sm:$0xff]
      %v4009 = vld [vmem:[#allocation2 + $0x13] sm:$0xff]
      %v4010 = vld [vmem:[#allocation2 + $0x1b] sm:$0xff]
      %v4011 = vld [vmem:[#allocation2 + $0x23] sm:$0xff]
      %v4012 = vld [vmem:[#allocation2 + $0x2b] sm:$0xff]
      %v4013 = vpack.c.bf16 %v4009, %v4008
      %v4014 = vpack.c.bf16 %v4011, %v4010
      %v4015 = vpack.c.bf16 %v4012, %v4012
      %s4016 = scalar_lea.vmem %s7, 256
      %v4017 = vld [vmem:[%s4016] sm:$0xf]
      %v4018 = vld [vmem:[%s4016 + $0x4] sm:$0xf]
      %v4019 = vld [vmem:[%s4016 + $0x8] sm:$0xf]
      %v4020 = vld [vmem:[%s4016 + $0xc] sm:$0xf]
      %v4021 = vld [vmem:[%s4016 + $0x10] sm:$0xf]
      %v4022 = vld [vmem:[%s4016 + $0x14] sm:$0xf]
      %v4023 = vld [vmem:[%s4016 + $0x18] sm:$0xf]
      %v4024 = vld [vmem:[%s4016 + $0x1c] sm:$0xf]
      %v4025 = vld [vmem:[%s4016 + $0x20] sm:$0xf]
      %v4026 = vld [vmem:[%s4016 + $0x24] sm:$0xf]
      %v4027 = vld [vmem:[%s4016 + $0x28] sm:$0xf]
      %v4028 = vld [vmem:[%s4016 + $0x2c] sm:$0xf]
      %v4029 = vld [vmem:[%s4016 + $0x30] sm:$0xf]
      %v4030 = vld [vmem:[%s4016 + $0x34] sm:$0xf]
      %v4031 = vld [vmem:[%s4016 + $0x38] sm:$0xf]
      %v4032 = vld [vmem:[%s4016 + $0x3c] sm:$0xf]
      %v4049 = vunpack.c.l.b16 %v4017
      %v4050 = vunpack.c.l.b16 %v4018
      %v4051 = vunpack.c.l.b16 %v4019
      %v4052 = vunpack.c.l.b16 %v4020
      %v4053 = vunpack.c.l.b16 %v4021
      %v4054 = vunpack.c.l.b16 %v4022
      %v4055 = vunpack.c.l.b16 %v4023
      %v4056 = vunpack.c.l.b16 %v4024
      %v4057 = vunpack.c.l.b16 %v4025
      %v4058 = vunpack.c.l.b16 %v4026
      %v4059 = vunpack.c.l.b16 %v4027
      %v4060 = vunpack.c.l.b16 %v4028
      %v4061 = vunpack.c.l.b16 %v4029
      %v4062 = vunpack.c.l.b16 %v4030
      %v4063 = vunpack.c.l.b16 %v4031
      %v4064 = vunpack.c.l.b16 %v4032
      %v4065 = vpack.c.b16 %v4050, %v4049
      %v4066 = vpack.c.b16 %v4052, %v4051
      %v4067 = vpack.c.b16 %v4054, %v4053
      %v4068 = vpack.c.b16 %v4056, %v4055
      %v4069 = vpack.c.b16 %v4058, %v4057
      %v4070 = vpack.c.b16 %v4060, %v4059
      %v4071 = vpack.c.b16 %v4062, %v4061
      %v4072 = vpack.c.b16 %v4064, %v4063
      %4081 = vmatprep.subr.bf16.mxu0 0
      %4082 = vmatpush1.bf16.msra.mxu0 %v4072
      %4083 = vmatprep.subr.bf16.mxu0 0
      %4084 = vmatpush1.bf16.msra.mxu0 %v4071
      %4085 = vmatprep.subr.bf16.mxu0 0
      %4086 = vmatpush1.bf16.msra.mxu0 %v4070
      %4087 = vmatprep.subr.bf16.mxu0 0
      %4088 = vmatpush1.bf16.msra.mxu0 %v4069
      %4089 = vmatprep.subr.bf16.mxu0 0
      %4090 = vmatpush1.bf16.msra.mxu0 %v4068
      %4091 = vmatprep.subr.bf16.mxu0 0
      %4092 = vmatpush1.bf16.msra.mxu0 %v4067
      %4093 = vmatprep.subr.bf16.mxu0 0
      %4094 = vmatpush1.bf16.msra.mxu0 %v4066
      %4095 = vmatprep.subr.bf16.mxu0 0
      %4096 = vmatpush1.bf16.msra.mxu0 %v4065
      %4097 = vmatprep.subr.bf16.mxu0 0
      %4098 = vmatpush2.bf16.msra.mxu0 0
      %4099 = vmatprep.subr.bf16.mxu0 0
      %4100 = vmatpush2.bf16.msra.mxu0 0
      %4101 = vmatprep.subr.bf16.mxu0 0
      %4102 = vmatpush2.bf16.msra.mxu0 0
      %4103 = vmatprep.subr.bf16.mxu0 0
      %4104 = vmatpush2.bf16.msra.mxu0 0
      %4105 = vmatprep.subr.bf16.mxu0 0
      %4106 = vmatpush2.bf16.msra.mxu0 0
      %4107 = vmatprep.subr.bf16.mxu0 0
      %4108 = vmatpush2.bf16.msra.mxu0 0
      %4109 = vmatprep.subr.bf16.mxu0 0
      %4110 = vmatpush2.bf16.msra.mxu0 0
      %4111 = vmatprep.subr.bf16.mxu0 0
      %4112 = vmatpush2.bf16.msra.mxu0 0
      %4113 = vmatprep.mubr.bf16.mxu0 0
      %4114 = vmatmul.mubr.bf16.gmra.mxu0 %v4013
      %v4115 = vpop.f32.mrf.mxu0
      %v4116 = vadd.f32 0.0, %v4115
      %v4117 = vpop.f32.mrf.mxu0
      %v4118 = vpop.f32.mrf.mxu0
      %v4119 = vadd.f32 0.0, %v4118
      %v4120 = vpop.f32.mrf.mxu0
      %4121 = vmatprep.mubr.bf16.mxu0 0
      %4122 = vmatmul.mubr.bf16.gmra.mxu0 %v4014
      %v4123 = vpop.f32.mrf.mxu0
      %v4124 = vadd.f32 0.0, %v4123
      %v4125 = vpop.f32.mrf.mxu0
      %v4126 = vpop.f32.mrf.mxu0
      %v4127 = vadd.f32 0.0, %v4126
      %v4128 = vpop.f32.mrf.mxu0
      %4129 = vmatprep.mubr.bf16.mxu0 0
      %4130 = vmatmul.mubr.bf16.gmra.mxu0 %v4015
      %v4131 = vpop.f32.mrf.mxu0
      %v4132 = vadd.f32 0.0, %v4131
      %v4133 = vpop.f32.mrf.mxu0
      %v4134 = vpop.f32.mrf.mxu0
      %v4135 = vpop.f32.mrf.mxu0
      %4136 = vdwg.mxu0
      %v4137 = vadd.f32 %v4003, %v4116
      %v4138 = vadd.f32 %v4004, %v4119
      %v4139 = vadd.f32 %v4005, %v4124
      %v4140 = vadd.f32 %v4006, %v4127
      %v4141 = vadd.f32 %v4007, %v4132
      %v4142 = vld [vmem:[#allocation2 + $0xc] sm:$0xff]
      %v4143 = vld [vmem:[#allocation2 + $0x14] sm:$0xff]
      %v4144 = vld [vmem:[#allocation2 + $0x1c] sm:$0xff]
      %v4145 = vld [vmem:[#allocation2 + $0x24] sm:$0xff]
      %v4146 = vld [vmem:[#allocation2 + $0x2c] sm:$0xff]
      %v4147 = vpack.c.bf16 %v4143, %v4142
      %v4148 = vpack.c.bf16 %v4145, %v4144
      %v4149 = vpack.c.bf16 %v4146, %v4146
      %s4150 = scalar_lea.vmem %s7, 320
      %v4151 = vld [vmem:[%s4150] sm:$0xf]
      %v4152 = vld [vmem:[%s4150 + $0x4] sm:$0xf]
      %v4153 = vld [vmem:[%s4150 + $0x8] sm:$0xf]
      %v4154 = vld [vmem:[%s4150 + $0xc] sm:$0xf]
      %v4155 = vld [vmem:[%s4150 + $0x10] sm:$0xf]
      %v4156 = vld [vmem:[%s4150 + $0x14] sm:$0xf]
      %v4157 = vld [vmem:[%s4150 + $0x18] sm:$0xf]
      %v4158 = vld [vmem:[%s4150 + $0x1c] sm:$0xf]
      %v4159 = vld [vmem:[%s4150 + $0x20] sm:$0xf]
      %v4160 = vld [vmem:[%s4150 + $0x24] sm:$0xf]
      %v4161 = vld [vmem:[%s4150 + $0x28] sm:$0xf]
      %v4162 = vld [vmem:[%s4150 + $0x2c] sm:$0xf]
      %v4163 = vld [vmem:[%s4150 + $0x30] sm:$0xf]
      %v4164 = vld [vmem:[%s4150 + $0x34] sm:$0xf]
      %v4165 = vld [vmem:[%s4150 + $0x38] sm:$0xf]
      %v4166 = vld [vmem:[%s4150 + $0x3c] sm:$0xf]
      %v4183 = vunpack.c.l.b16 %v4151
      %v4184 = vunpack.c.l.b16 %v4152
      %v4185 = vunpack.c.l.b16 %v4153
      %v4186 = vunpack.c.l.b16 %v4154
      %v4187 = vunpack.c.l.b16 %v4155
      %v4188 = vunpack.c.l.b16 %v4156
      %v4189 = vunpack.c.l.b16 %v4157
      %v4190 = vunpack.c.l.b16 %v4158
      %v4191 = vunpack.c.l.b16 %v4159
      %v4192 = vunpack.c.l.b16 %v4160
      %v4193 = vunpack.c.l.b16 %v4161
      %v4194 = vunpack.c.l.b16 %v4162
      %v4195 = vunpack.c.l.b16 %v4163
      %v4196 = vunpack.c.l.b16 %v4164
      %v4197 = vunpack.c.l.b16 %v4165
      %v4198 = vunpack.c.l.b16 %v4166
      %v4199 = vpack.c.b16 %v4184, %v4183
      %v4200 = vpack.c.b16 %v4186, %v4185
      %v4201 = vpack.c.b16 %v4188, %v4187
      %v4202 = vpack.c.b16 %v4190, %v4189
      %v4203 = vpack.c.b16 %v4192, %v4191
      %v4204 = vpack.c.b16 %v4194, %v4193
      %v4205 = vpack.c.b16 %v4196, %v4195
      %v4206 = vpack.c.b16 %v4198, %v4197
      %4215 = vmatprep.subr.bf16.mxu0 0
      %4216 = vmatpush1.bf16.msra.mxu0 %v4206
      %4217 = vmatprep.subr.bf16.mxu0 0
      %4218 = vmatpush1.bf16.msra.mxu0 %v4205
      %4219 = vmatprep.subr.bf16.mxu0 0
      %4220 = vmatpush1.bf16.msra.mxu0 %v4204
      %4221 = vmatprep.subr.bf16.mxu0 0
      %4222 = vmatpush1.bf16.msra.mxu0 %v4203
      %4223 = vmatprep.subr.bf16.mxu0 0
      %4224 = vmatpush1.bf16.msra.mxu0 %v4202
      %4225 = vmatprep.subr.bf16.mxu0 0
      %4226 = vmatpush1.bf16.msra.mxu0 %v4201
      %4227 = vmatprep.subr.bf16.mxu0 0
      %4228 = vmatpush1.bf16.msra.mxu0 %v4200
      %4229 = vmatprep.subr.bf16.mxu0 0
      %4230 = vmatpush1.bf16.msra.mxu0 %v4199
      %4231 = vmatprep.subr.bf16.mxu0 0
      %4232 = vmatpush2.bf16.msra.mxu0 0
      %4233 = vmatprep.subr.bf16.mxu0 0
      %4234 = vmatpush2.bf16.msra.mxu0 0
      %4235 = vmatprep.subr.bf16.mxu0 0
      %4236 = vmatpush2.bf16.msra.mxu0 0
      %4237 = vmatprep.subr.bf16.mxu0 0
      %4238 = vmatpush2.bf16.msra.mxu0 0
      %4239 = vmatprep.subr.bf16.mxu0 0
      %4240 = vmatpush2.bf16.msra.mxu0 0
      %4241 = vmatprep.subr.bf16.mxu0 0
      %4242 = vmatpush2.bf16.msra.mxu0 0
      %4243 = vmatprep.subr.bf16.mxu0 0
      %4244 = vmatpush2.bf16.msra.mxu0 0
      %4245 = vmatprep.subr.bf16.mxu0 0
      %4246 = vmatpush2.bf16.msra.mxu0 0
      %4247 = vmatprep.mubr.bf16.mxu0 0
      %4248 = vmatmul.mubr.bf16.gmra.mxu0 %v4147
      %v4249 = vpop.f32.mrf.mxu0
      %v4250 = vadd.f32 0.0, %v4249
      %v4251 = vpop.f32.mrf.mxu0
      %v4252 = vpop.f32.mrf.mxu0
      %v4253 = vadd.f32 0.0, %v4252
      %v4254 = vpop.f32.mrf.mxu0
      %4255 = vmatprep.mubr.bf16.mxu0 0
      %4256 = vmatmul.mubr.bf16.gmra.mxu0 %v4148
      %v4257 = vpop.f32.mrf.mxu0
      %v4258 = vadd.f32 0.0, %v4257
      %v4259 = vpop.f32.mrf.mxu0
      %v4260 = vpop.f32.mrf.mxu0
      %v4261 = vadd.f32 0.0, %v4260
      %v4262 = vpop.f32.mrf.mxu0
      %4263 = vmatprep.mubr.bf16.mxu0 0
      %4264 = vmatmul.mubr.bf16.gmra.mxu0 %v4149
      %v4265 = vpop.f32.mrf.mxu0
      %v4266 = vadd.f32 0.0, %v4265
      %v4267 = vpop.f32.mrf.mxu0
      %v4268 = vpop.f32.mrf.mxu0
      %v4269 = vpop.f32.mrf.mxu0
      %4270 = vdwg.mxu0
      %v4271 = vadd.f32 %v4137, %v4250
      %v4272 = vadd.f32 %v4138, %v4253
      %v4273 = vadd.f32 %v4139, %v4258
      %v4274 = vadd.f32 %v4140, %v4261
      %v4275 = vadd.f32 %v4141, %v4266
      %v4276 = vld [vmem:[#allocation2 + $0x14] sm:$0xff]
      %v4277 = vld [vmem:[#allocation2 + $0x1c] sm:$0xff]
      %v4278 = vld [vmem:[#allocation2 + $0x24] sm:$0xff]
      %v4279 = vld [vmem:[#allocation2 + $0x2c] sm:$0xff]
      %v4280 = vld [vmem:[#allocation2 + $0x34] sm:$0xff]
      %v4281 = vpack.c.bf16 %v4277, %v4276
      %v4282 = vpack.c.bf16 %v4279, %v4278
      %v4283 = vpack.c.bf16 %v4280, %v4280
      %s4284 = scalar_lea.vmem %s7, 384
      %v4285 = vld [vmem:[%s4284] sm:$0xf]
      %v4286 = vld [vmem:[%s4284 + $0x4] sm:$0xf]
      %v4287 = vld [vmem:[%s4284 + $0x8] sm:$0xf]
      %v4288 = vld [vmem:[%s4284 + $0xc] sm:$0xf]
      %v4289 = vld [vmem:[%s4284 + $0x10] sm:$0xf]
      %v4290 = vld [vmem:[%s4284 + $0x14] sm:$0xf]
      %v4291 = vld [vmem:[%s4284 + $0x18] sm:$0xf]
      %v4292 = vld [vmem:[%s4284 + $0x1c] sm:$0xf]
      %v4293 = vld [vmem:[%s4284 + $0x20] sm:$0xf]
      %v4294 = vld [vmem:[%s4284 + $0x24] sm:$0xf]
      %v4295 = vld [vmem:[%s4284 + $0x28] sm:$0xf]
      %v4296 = vld [vmem:[%s4284 + $0x2c] sm:$0xf]
      %v4297 = vld [vmem:[%s4284 + $0x30] sm:$0xf]
      %v4298 = vld [vmem:[%s4284 + $0x34] sm:$0xf]
      %v4299 = vld [vmem:[%s4284 + $0x38] sm:$0xf]
      %v4300 = vld [vmem:[%s4284 + $0x3c] sm:$0xf]
      %v4317 = vunpack.c.l.b16 %v4285
      %v4318 = vunpack.c.l.b16 %v4286
      %v4319 = vunpack.c.l.b16 %v4287
      %v4320 = vunpack.c.l.b16 %v4288
      %v4321 = vunpack.c.l.b16 %v4289
      %v4322 = vunpack.c.l.b16 %v4290
      %v4323 = vunpack.c.l.b16 %v4291
      %v4324 = vunpack.c.l.b16 %v4292
      %v4325 = vunpack.c.l.b16 %v4293
      %v4326 = vunpack.c.l.b16 %v4294
      %v4327 = vunpack.c.l.b16 %v4295
      %v4328 = vunpack.c.l.b16 %v4296
      %v4329 = vunpack.c.l.b16 %v4297
      %v4330 = vunpack.c.l.b16 %v4298
      %v4331 = vunpack.c.l.b16 %v4299
      %v4332 = vunpack.c.l.b16 %v4300
      %v4333 = vpack.c.b16 %v4318, %v4317
      %v4334 = vpack.c.b16 %v4320, %v4319
      %v4335 = vpack.c.b16 %v4322, %v4321
      %v4336 = vpack.c.b16 %v4324, %v4323
      %v4337 = vpack.c.b16 %v4326, %v4325
      %v4338 = vpack.c.b16 %v4328, %v4327
      %v4339 = vpack.c.b16 %v4330, %v4329
      %v4340 = vpack.c.b16 %v4332, %v4331
      %4349 = vmatprep.subr.bf16.mxu0 0
      %4350 = vmatpush1.bf16.msra.mxu0 %v4340
      %4351 = vmatprep.subr.bf16.mxu0 0
      %4352 = vmatpush1.bf16.msra.mxu0 %v4339
      %4353 = vmatprep.subr.bf16.mxu0 0
      %4354 = vmatpush1.bf16.msra.mxu0 %v4338
      %4355 = vmatprep.subr.bf16.mxu0 0
      %4356 = vmatpush1.bf16.msra.mxu0 %v4337
      %4357 = vmatprep.subr.bf16.mxu0 0
      %4358 = vmatpush1.bf16.msra.mxu0 %v4336
      %4359 = vmatprep.subr.bf16.mxu0 0
      %4360 = vmatpush1.bf16.msra.mxu0 %v4335
      %4361 = vmatprep.subr.bf16.mxu0 0
      %4362 = vmatpush1.bf16.msra.mxu0 %v4334
      %4363 = vmatprep.subr.bf16.mxu0 0
      %4364 = vmatpush1.bf16.msra.mxu0 %v4333
      %4365 = vmatprep.subr.bf16.mxu0 0
      %4366 = vmatpush2.bf16.msra.mxu0 0
      %4367 = vmatprep.subr.bf16.mxu0 0
      %4368 = vmatpush2.bf16.msra.mxu0 0
      %4369 = vmatprep.subr.bf16.mxu0 0
      %4370 = vmatpush2.bf16.msra.mxu0 0
      %4371 = vmatprep.subr.bf16.mxu0 0
      %4372 = vmatpush2.bf16.msra.mxu0 0
      %4373 = vmatprep.subr.bf16.mxu0 0
      %4374 = vmatpush2.bf16.msra.mxu0 0
      %4375 = vmatprep.subr.bf16.mxu0 0
      %4376 = vmatpush2.bf16.msra.mxu0 0
      %4377 = vmatprep.subr.bf16.mxu0 0
      %4378 = vmatpush2.bf16.msra.mxu0 0
      %4379 = vmatprep.subr.bf16.mxu0 0
      %4380 = vmatpush2.bf16.msra.mxu0 0
      %4381 = vmatprep.mubr.bf16.mxu0 0
      %4382 = vmatmul.mubr.bf16.gmra.mxu0 %v4281
      %v4383 = vpop.f32.mrf.mxu0
      %v4384 = vadd.f32 0.0, %v4383
      %v4385 = vpop.f32.mrf.mxu0
      %v4386 = vpop.f32.mrf.mxu0
      %v4387 = vadd.f32 0.0, %v4386
      %v4388 = vpop.f32.mrf.mxu0
      %4389 = vmatprep.mubr.bf16.mxu0 0
      %4390 = vmatmul.mubr.bf16.gmra.mxu0 %v4282
      %v4391 = vpop.f32.mrf.mxu0
      %v4392 = vadd.f32 0.0, %v4391
      %v4393 = vpop.f32.mrf.mxu0
      %v4394 = vpop.f32.mrf.mxu0
      %v4395 = vadd.f32 0.0, %v4394
      %v4396 = vpop.f32.mrf.mxu0
      %4397 = vmatprep.mubr.bf16.mxu0 0
      %4398 = vmatmul.mubr.bf16.gmra.mxu0 %v4283
      %v4399 = vpop.f32.mrf.mxu0
      %v4400 = vadd.f32 0.0, %v4399
      %v4401 = vpop.f32.mrf.mxu0
      %v4402 = vpop.f32.mrf.mxu0
      %v4403 = vpop.f32.mrf.mxu0
      %4404 = vdwg.mxu0
      %v4405 = vadd.f32 %v4271, %v4384
      %v4406 = vadd.f32 %v4272, %v4387
      %v4407 = vadd.f32 %v4273, %v4392
      %v4408 = vadd.f32 %v4274, %v4395
      %v4409 = vadd.f32 %v4275, %v4400
      %v4410 = vld [vmem:[#allocation2 + $0x15] sm:$0xff]
      %v4411 = vld [vmem:[#allocation2 + $0x1d] sm:$0xff]
      %v4412 = vld [vmem:[#allocation2 + $0x25] sm:$0xff]
      %v4413 = vld [vmem:[#allocation2 + $0x2d] sm:$0xff]
      %v4414 = vld [vmem:[#allocation2 + $0x35] sm:$0xff]
      %v4415 = vpack.c.bf16 %v4411, %v4410
      %v4416 = vpack.c.bf16 %v4413, %v4412
      %v4417 = vpack.c.bf16 %v4414, %v4414
      %s4418 = scalar_lea.vmem %s7, 448
      %v4419 = vld [vmem:[%s4418] sm:$0xf]
      %v4420 = vld [vmem:[%s4418 + $0x4] sm:$0xf]
      %v4421 = vld [vmem:[%s4418 + $0x8] sm:$0xf]
      %v4422 = vld [vmem:[%s4418 + $0xc] sm:$0xf]
      %v4423 = vld [vmem:[%s4418 + $0x10] sm:$0xf]
      %v4424 = vld [vmem:[%s4418 + $0x14] sm:$0xf]
      %v4425 = vld [vmem:[%s4418 + $0x18] sm:$0xf]
      %v4426 = vld [vmem:[%s4418 + $0x1c] sm:$0xf]
      %v4427 = vld [vmem:[%s4418 + $0x20] sm:$0xf]
      %v4428 = vld [vmem:[%s4418 + $0x24] sm:$0xf]
      %v4429 = vld [vmem:[%s4418 + $0x28] sm:$0xf]
      %v4430 = vld [vmem:[%s4418 + $0x2c] sm:$0xf]
      %v4431 = vld [vmem:[%s4418 + $0x30] sm:$0xf]
      %v4432 = vld [vmem:[%s4418 + $0x34] sm:$0xf]
      %v4433 = vld [vmem:[%s4418 + $0x38] sm:$0xf]
      %v4434 = vld [vmem:[%s4418 + $0x3c] sm:$0xf]
      %v4451 = vunpack.c.l.b16 %v4419
      %v4452 = vunpack.c.l.b16 %v4420
      %v4453 = vunpack.c.l.b16 %v4421
      %v4454 = vunpack.c.l.b16 %v4422
      %v4455 = vunpack.c.l.b16 %v4423
      %v4456 = vunpack.c.l.b16 %v4424
      %v4457 = vunpack.c.l.b16 %v4425
      %v4458 = vunpack.c.l.b16 %v4426
      %v4459 = vunpack.c.l.b16 %v4427
      %v4460 = vunpack.c.l.b16 %v4428
      %v4461 = vunpack.c.l.b16 %v4429
      %v4462 = vunpack.c.l.b16 %v4430
      %v4463 = vunpack.c.l.b16 %v4431
      %v4464 = vunpack.c.l.b16 %v4432
      %v4465 = vunpack.c.l.b16 %v4433
      %v4466 = vunpack.c.l.b16 %v4434
      %v4467 = vpack.c.b16 %v4452, %v4451
      %v4468 = vpack.c.b16 %v4454, %v4453
      %v4469 = vpack.c.b16 %v4456, %v4455
      %v4470 = vpack.c.b16 %v4458, %v4457
      %v4471 = vpack.c.b16 %v4460, %v4459
      %v4472 = vpack.c.b16 %v4462, %v4461
      %v4473 = vpack.c.b16 %v4464, %v4463
      %v4474 = vpack.c.b16 %v4466, %v4465
      %4483 = vmatprep.subr.bf16.mxu0 0
      %4484 = vmatpush1.bf16.msra.mxu0 %v4474
      %4485 = vmatprep.subr.bf16.mxu0 0
      %4486 = vmatpush1.bf16.msra.mxu0 %v4473
      %4487 = vmatprep.subr.bf16.mxu0 0
      %4488 = vmatpush1.bf16.msra.mxu0 %v4472
      %4489 = vmatprep.subr.bf16.mxu0 0
      %4490 = vmatpush1.bf16.msra.mxu0 %v4471
      %4491 = vmatprep.subr.bf16.mxu0 0
      %4492 = vmatpush1.bf16.msra.mxu0 %v4470
      %4493 = vmatprep.subr.bf16.mxu0 0
      %4494 = vmatpush1.bf16.msra.mxu0 %v4469
      %4495 = vmatprep.subr.bf16.mxu0 0
      %4496 = vmatpush1.bf16.msra.mxu0 %v4468
      %4497 = vmatprep.subr.bf16.mxu0 0
      %4498 = vmatpush1.bf16.msra.mxu0 %v4467
      %4499 = vmatprep.subr.bf16.mxu0 0
      %4500 = vmatpush2.bf16.msra.mxu0 0
      %4501 = vmatprep.subr.bf16.mxu0 0
      %4502 = vmatpush2.bf16.msra.mxu0 0
      %4503 = vmatprep.subr.bf16.mxu0 0
      %4504 = vmatpush2.bf16.msra.mxu0 0
      %4505 = vmatprep.subr.bf16.mxu0 0
      %4506 = vmatpush2.bf16.msra.mxu0 0
      %4507 = vmatprep.subr.bf16.mxu0 0
      %4508 = vmatpush2.bf16.msra.mxu0 0
      %4509 = vmatprep.subr.bf16.mxu0 0
      %4510 = vmatpush2.bf16.msra.mxu0 0
      %4511 = vmatprep.subr.bf16.mxu0 0
      %4512 = vmatpush2.bf16.msra.mxu0 0
      %4513 = vmatprep.subr.bf16.mxu0 0
      %4514 = vmatpush2.bf16.msra.mxu0 0
      %4515 = vmatprep.mubr.bf16.mxu0 0
      %4516 = vmatmul.mubr.bf16.gmra.mxu0 %v4415
      %v4517 = vpop.f32.mrf.mxu0
      %v4518 = vadd.f32 0.0, %v4517
      %v4519 = vpop.f32.mrf.mxu0
      %v4520 = vpop.f32.mrf.mxu0
      %v4521 = vadd.f32 0.0, %v4520
      %v4522 = vpop.f32.mrf.mxu0
      %4523 = vmatprep.mubr.bf16.mxu0 0
      %4524 = vmatmul.mubr.bf16.gmra.mxu0 %v4416
      %v4525 = vpop.f32.mrf.mxu0
      %v4526 = vadd.f32 0.0, %v4525
      %v4527 = vpop.f32.mrf.mxu0
      %v4528 = vpop.f32.mrf.mxu0
      %v4529 = vadd.f32 0.0, %v4528
      %v4530 = vpop.f32.mrf.mxu0
      %4531 = vmatprep.mubr.bf16.mxu0 0
      %4532 = vmatmul.mubr.bf16.gmra.mxu0 %v4417
      %v4533 = vpop.f32.mrf.mxu0
      %v4534 = vadd.f32 0.0, %v4533
      %v4535 = vpop.f32.mrf.mxu0
      %v4536 = vpop.f32.mrf.mxu0
      %v4537 = vpop.f32.mrf.mxu0
      %4538 = vdwg.mxu0
      %v4539 = vadd.f32 %v4405, %v4518
      %v4540 = vadd.f32 %v4406, %v4521
      %v4541 = vadd.f32 %v4407, %v4526
      %v4542 = vadd.f32 %v4408, %v4529
      %v4543 = vadd.f32 %v4409, %v4534
      %v4544 = vld [vmem:[#allocation2 + $0x16] sm:$0xff]
      %v4545 = vld [vmem:[#allocation2 + $0x1e] sm:$0xff]
      %v4546 = vld [vmem:[#allocation2 + $0x26] sm:$0xff]
      %v4547 = vld [vmem:[#allocation2 + $0x2e] sm:$0xff]
      %v4548 = vld [vmem:[#allocation2 + $0x36] sm:$0xff]
      %v4549 = vpack.c.bf16 %v4545, %v4544
      %v4550 = vpack.c.bf16 %v4547, %v4546
      %v4551 = vpack.c.bf16 %v4548, %v4548
      %s4552 = scalar_lea.vmem %s7, 512
      %v4553 = vld [vmem:[%s4552] sm:$0xf]
      %v4554 = vld [vmem:[%s4552 + $0x4] sm:$0xf]
      %v4555 = vld [vmem:[%s4552 + $0x8] sm:$0xf]
      %v4556 = vld [vmem:[%s4552 + $0xc] sm:$0xf]
      %v4557 = vld [vmem:[%s4552 + $0x10] sm:$0xf]
      %v4558 = vld [vmem:[%s4552 + $0x14] sm:$0xf]
      %v4559 = vld [vmem:[%s4552 + $0x18] sm:$0xf]
      %v4560 = vld [vmem:[%s4552 + $0x1c] sm:$0xf]
      %v4561 = vld [vmem:[%s4552 + $0x20] sm:$0xf]
      %v4562 = vld [vmem:[%s4552 + $0x24] sm:$0xf]
      %v4563 = vld [vmem:[%s4552 + $0x28] sm:$0xf]
      %v4564 = vld [vmem:[%s4552 + $0x2c] sm:$0xf]
      %v4565 = vld [vmem:[%s4552 + $0x30] sm:$0xf]
      %v4566 = vld [vmem:[%s4552 + $0x34] sm:$0xf]
      %v4567 = vld [vmem:[%s4552 + $0x38] sm:$0xf]
      %v4568 = vld [vmem:[%s4552 + $0x3c] sm:$0xf]
      %v4585 = vunpack.c.l.b16 %v4553
      %v4586 = vunpack.c.l.b16 %v4554
      %v4587 = vunpack.c.l.b16 %v4555
      %v4588 = vunpack.c.l.b16 %v4556
      %v4589 = vunpack.c.l.b16 %v4557
      %v4590 = vunpack.c.l.b16 %v4558
      %v4591 = vunpack.c.l.b16 %v4559
      %v4592 = vunpack.c.l.b16 %v4560
      %v4593 = vunpack.c.l.b16 %v4561
      %v4594 = vunpack.c.l.b16 %v4562
      %v4595 = vunpack.c.l.b16 %v4563
      %v4596 = vunpack.c.l.b16 %v4564
      %v4597 = vunpack.c.l.b16 %v4565
      %v4598 = vunpack.c.l.b16 %v4566
      %v4599 = vunpack.c.l.b16 %v4567
      %v4600 = vunpack.c.l.b16 %v4568
      %v4601 = vpack.c.b16 %v4586, %v4585
      %v4602 = vpack.c.b16 %v4588, %v4587
      %v4603 = vpack.c.b16 %v4590, %v4589
      %v4604 = vpack.c.b16 %v4592, %v4591
      %v4605 = vpack.c.b16 %v4594, %v4593
      %v4606 = vpack.c.b16 %v4596, %v4595
      %v4607 = vpack.c.b16 %v4598, %v4597
      %v4608 = vpack.c.b16 %v4600, %v4599
      %4617 = vmatprep.subr.bf16.mxu0 0
      %4618 = vmatpush1.bf16.msra.mxu0 %v4608
      %4619 = vmatprep.subr.bf16.mxu0 0
      %4620 = vmatpush1.bf16.msra.mxu0 %v4607
      %4621 = vmatprep.subr.bf16.mxu0 0
      %4622 = vmatpush1.bf16.msra.mxu0 %v4606
      %4623 = vmatprep.subr.bf16.mxu0 0
      %4624 = vmatpush1.bf16.msra.mxu0 %v4605
      %4625 = vmatprep.subr.bf16.mxu0 0
      %4626 = vmatpush1.bf16.msra.mxu0 %v4604
      %4627 = vmatprep.subr.bf16.mxu0 0
      %4628 = vmatpush1.bf16.msra.mxu0 %v4603
      %4629 = vmatprep.subr.bf16.mxu0 0
      %4630 = vmatpush1.bf16.msra.mxu0 %v4602
      %4631 = vmatprep.subr.bf16.mxu0 0
      %4632 = vmatpush1.bf16.msra.mxu0 %v4601
      %4633 = vmatprep.subr.bf16.mxu0 0
      %4634 = vmatpush2.bf16.msra.mxu0 0
      %4635 = vmatprep.subr.bf16.mxu0 0
      %4636 = vmatpush2.bf16.msra.mxu0 0
      %4637 = vmatprep.subr.bf16.mxu0 0
      %4638 = vmatpush2.bf16.msra.mxu0 0
      %4639 = vmatprep.subr.bf16.mxu0 0
      %4640 = vmatpush2.bf16.msra.mxu0 0
      %4641 = vmatprep.subr.bf16.mxu0 0
      %4642 = vmatpush2.bf16.msra.mxu0 0
      %4643 = vmatprep.subr.bf16.mxu0 0
      %4644 = vmatpush2.bf16.msra.mxu0 0
      %4645 = vmatprep.subr.bf16.mxu0 0
      %4646 = vmatpush2.bf16.msra.mxu0 0
      %4647 = vmatprep.subr.bf16.mxu0 0
      %4648 = vmatpush2.bf16.msra.mxu0 0
      %4649 = vmatprep.mubr.bf16.mxu0 0
      %4650 = vmatmul.mubr.bf16.gmra.mxu0 %v4549
      %v4651 = vpop.f32.mrf.mxu0
      %v4652 = vadd.f32 0.0, %v4651
      %v4653 = vpop.f32.mrf.mxu0
      %v4654 = vpop.f32.mrf.mxu0
      %v4655 = vadd.f32 0.0, %v4654
      %v4656 = vpop.f32.mrf.mxu0
      %4657 = vmatprep.mubr.bf16.mxu0 0
      %4658 = vmatmul.mubr.bf16.gmra.mxu0 %v4550
      %v4659 = vpop.f32.mrf.mxu0
      %v4660 = vadd.f32 0.0, %v4659
      %v4661 = vpop.f32.mrf.mxu0
      %v4662 = vpop.f32.mrf.mxu0
      %v4663 = vadd.f32 0.0, %v4662
      %v4664 = vpop.f32.mrf.mxu0
      %4665 = vmatprep.mubr.bf16.mxu0 0
      %4666 = vmatmul.mubr.bf16.gmra.mxu0 %v4551
      %v4667 = vpop.f32.mrf.mxu0
      %v4668 = vadd.f32 0.0, %v4667
      %v4669 = vpop.f32.mrf.mxu0
      %v4670 = vpop.f32.mrf.mxu0
      %v4671 = vpop.f32.mrf.mxu0
      %4672 = vdwg.mxu0
      %v4673 = vadd.f32 %v4539, %v4652
      %v4674 = vadd.f32 %v4540, %v4655
      %v4675 = vadd.f32 %v4541, %v4660
      %v4676 = vadd.f32 %v4542, %v4663
      %v4677 = vadd.f32 %v4543, %v4668
      %v4679 = vlaneseq
      %v4680 = vshrl.u32 %v4679, 7
      %v4681 = vsub.s32 0, %v4680
      %v4682 = vrot.slane %v3482, %v4681
      %v4684 = vadd.f32 %v4673, %v4682
      %v4685 = vadd.f32 %v4674, %v4682
      %v4686 = vadd.f32 %v4675, %v4682
      %v4687 = vadd.f32 %v4676, %v4682
      %v4688 = vadd.f32 %v4677, %v4682
      %v4689 = vmax.f32 %v4684, 0.0
      %v4690 = vmax.f32 %v4685, 0.0
      %v4691 = vmax.f32 %v4686, 0.0
      %v4692 = vmax.f32 %v4687, 0.0
      %v4693 = vmax.f32 %v4688, 0.0
      %4694 = vst [vmem:[%s332] sm:$0xff] %v4689
      %4695 = vst [vmem:[%s332 + $0x8] sm:$0xff] %v4690
      %4696 = vst [vmem:[%s332 + $0x10] sm:$0xff] %v4691
      %4697 = vst [vmem:[%s332 + $0x18] sm:$0xff] %v4692
      %4698 = vst [vmem:[%s332 + $0x20] sm:$0xff] %v4693
      %p4699 = scmp.lt.s32.totalorder %s20, 1
      %s4700 = scalar_select %p4699, %s20, 1
      %s4701 = smul.addr %s4700, 5
      %s4702 = smul.addr %s4701, 8
      %s4703 = scalar_lea.vmem %s9, %s4702
      // Predicated region
      $region57: #{encoder_forward.1} parent=55 // pred_check
        %p4704 = pneg %p232
      $region58: #{encoder_forward.1} parent=55 // pred_check_branch
        %4706 = sbr.rel (%p4704) target = $region60
      $region59: #{encoder_forward.1} parent=55 // pred_region
        _
      $region60: #{encoder_forward.1} parent=55 // pred_fallthru
        _
    $region56: #{encoder_forward.1} parent=5 // pred_fallthru
      _
    %p4707 = scmp.le.s32.totalorder 2, %s15
    // Predicated region
    $region61: #{encoder_forward.1} parent=5 // pred_check
      %p4708 = pneg %p4707
    $region62: #{encoder_forward.1} parent=5 // pred_check_branch
      %4710 = sbr.rel (%p4708) target = $region64
    $region63: #{encoder_forward.1} parent=5 // pred_region
      %s4711 = ssub.s32 %s15, 2
      // Predicated region
      $region65: #{encoder_forward.1} parent=63 // pred_check
        %p4712 = pneg %p238
      $region66: #{encoder_forward.1} parent=63 // pred_check_branch
        %4714 = sbr.rel (%p4712) target = $region68
      $region67: #{encoder_forward.1} parent=63 // pred_region
        %p4715 = scmp.lt.s32.totalorder %s21, 1
        %s4716 = scalar_select %p4715, %s21, 1
        %s4717 = smul.addr %s4716, 5
        %s4718 = smul.addr %s4717, 8
        %s4719 = scalar_lea.vmem %s9, %s4718
      $region68: #{encoder_forward.1} parent=63 // pred_fallthru
        _
    $region64: #{encoder_forward.1} parent=5 // pred_fallthru
      _
  $region6: #{encoder_forward.1} parent=0 // loop_footer
    %s19 = sadd.s32 1, %s15
  $region7: #{encoder_forward.1} parent=0 // loop_footer_branch
    %14 = sbr.rel target = $region3
  $region8: #{encoder_forward.1} parent=0 // loop_exit
    _

</llo_original>
